<compile_context>
chip_gen: v5e
topology: v5e:2x2
jax: 0.10.0
libtpu: 0.0.40
codegen_flags: <defaults>
</compile_context>

<pallas_src>
import jax
import jax.numpy as jnp
from jax.experimental import pallas as pl
from jax.experimental.pallas import tpu as pltpu

X_DIM = 28 * 28   # 784
H_DIM = 128


def _disc_kernel(x_ref, w1_ref, b1_ref, w2_ref, b2_ref, o_ref):
    # x_ref : (TM, X_DIM) f32   w1_ref: (X_DIM, H_DIM) bf16  (resident)
    # b1_ref: (1, H_DIM)  f32   w2_ref: (1, H_DIM)      f32
    # b2_ref: (1, 1)      f32 in SMEM
    # o_ref : (TM, 1)     f32

    # In-kernel f32 -> bf16 cast (hidden under the x DMA), then MXU matmul
    # with f32 accumulation; bias + ReLU on the VPU.
    x_bf = x_ref[...].astype(jnp.bfloat16)
    h = jnp.dot(x_bf, w1_ref[...], preferred_element_type=jnp.float32)
    h = jnp.maximum(h + b1_ref[...], 0.0)                      # (TM, H) f32

    # Layer 2 (N = 1): VPU multiply + lane reduction (XLU) instead of a
    # degenerate (TM,128)@(128,1) MXU matmul.
    logit = jnp.sum(h * w2_ref[...], axis=-1, keepdims=True) + b2_ref[0, 0]

    o_ref[...] = jax.nn.sigmoid(logit).astype(o_ref.dtype)     # EUP sigmoid


def _round_up(x, m):
    return ((x + m - 1) // m) * m


def discriminator_forward(x, w1, b1, w2, b2, *, tile_m=None):
    """x: (B, X_DIM) f32; w1: (X_DIM, H_DIM); b1: (1, H_DIM); w2: (H_DIM, 1);
    b2: (1, 1).  Returns (B, 1) f32 probabilities."""
    B, D = x.shape
    assert D == X_DIM

    if tile_m is None:
        # >= 2 tiles when the batch allows (v7x has 2 TensorCores), multiple of
        # 128, capped at 2048 so the f32 x double buffer fits every
        # generation's default scoped VMEM.
        tile_m = min(2048, max(128, _round_up(pl.cdiv(B, 2), 128)))
    assert tile_m % 128 == 0, "tile_m must be a multiple of 128"

    n_tiles = pl.cdiv(B, tile_m)   # ragged last block handled by Pallas masking

    x_f32 = x.astype(jnp.float32)
    w1_bf = w1.astype(jnp.bfloat16)             # tiny one-time pass (~400 KB)
    b1_row = jnp.asarray(b1, jnp.float32).reshape(1, H_DIM)
    w2_row = jnp.asarray(w2, jnp.float32).reshape(1, H_DIM)
    b2_s = jnp.asarray(b2, jnp.float32).reshape(1, 1)

    out = pl.pallas_call(
        _disc_kernel,
        out_shape=jax.ShapeDtypeStruct((B, 1), jnp.float32),
        grid_spec=pltpu.PrefetchScalarGridSpec(
            num_scalar_prefetch=0,
            grid=(n_tiles,),
            in_specs=[
                pl.BlockSpec((tile_m, X_DIM), lambda i: (i, 0)),    # x tile (f32)
                pl.BlockSpec((X_DIM, H_DIM), lambda i: (0, 0)),     # W1, resident (bf16)
                pl.BlockSpec((1, H_DIM), lambda i: (0, 0)),         # b1 (f32)
                pl.BlockSpec((1, H_DIM), lambda i: (0, 0)),         # w2 as a row (f32)
                pl.BlockSpec(memory_space=pltpu.MemorySpace.SMEM),  # b2 scalar
            ],
            out_specs=pl.BlockSpec((tile_m, 1), lambda i: (i, 0)),
        ),
        compiler_params=pltpu.CompilerParams(
            # Pure batch parallelism: no cross-step carry, lets v7x shard the
            # grid across its two TensorCores.
            dimension_semantics=("parallel",),
        ),
    )(x_f32, w1_bf, b1_row, w2_row, b2_s)

    return out


def init_params(key):
    """Deterministic init mimicking nn.Linear's uniform(-1/sqrt(fan_in), ...)."""
    k1, k2, k3, k4 = jax.random.split(key, 4)
    bound1 = 1.0 / jnp.sqrt(jnp.float32(X_DIM))
    bound2 = 1.0 / jnp.sqrt(jnp.float32(H_DIM))
    w1 = jax.random.uniform(k1, (X_DIM, H_DIM), jnp.float32, -bound1, bound1)
    b1 = jax.random.uniform(k2, (1, H_DIM),     jnp.float32, -bound1, bound1)
    w2 = jax.random.uniform(k3, (H_DIM, 1),     jnp.float32, -bound2, bound2)
    b2 = jax.random.uniform(k4, (1, 1),         jnp.float32, -bound2, bound2)
    return w1, b1, w2, b2


if __name__ == "__main__":
    key = jax.random.PRNGKey(0)
    k_x, k_p = jax.random.split(key)

    # Small demo batch, deliberately NOT a multiple of the auto tile_m (384)
    # so the ragged last block and a 2-step grid are both exercised.
    B = 600
    x = jax.random.normal(k_x, (B, X_DIM), jnp.float32)
    w1, b1, w2, b2 = init_params(k_p)

    out = discriminator_forward(x, w1, b1, w2, b2)
    out = jax.block_until_ready(out)

    # Pure-JAX f32 reference (PyTorch forward semantics).
    h_ref = jnp.maximum(x @ w1 + b1, 0.0)
    ref = jax.nn.sigmoid(h_ref @ w2 + b2)

    assert out.shape == (B, 1)
    max_err = float(jnp.max(jnp.abs(out - ref)))
    # bf16 MXU inputs vs f32 reference: sigmoid output error is well below 5e-3.
    assert max_err < 5e-3, f"max abs error {max_err}"

    print("KERNEL_OK")
</pallas_src>

<mosaic_0001>
module attributes {stable_mosaic.version = 11 : i64} {
  func.func @_disc_kernel(%arg0: i32, %arg1: memref<384x784xf32, #tpu.memory_space<vmem>>, %arg2: memref<784x128xbf16, #tpu.memory_space<vmem>>, %arg3: memref<1x128xf32, #tpu.memory_space<vmem>>, %arg4: memref<1x128xf32, #tpu.memory_space<vmem>>, %arg5: memref<1x1xf32, #tpu.memory_space<smem>>, %arg6: memref<384x1xf32, #tpu.memory_space<vmem>>) attributes {dimension_semantics = [#tpu.dimension_semantics<parallel>], iteration_bounds = array<i64: 2>, scalar_prefetch = 0 : i64, scratch_operands = 0 : i64, tpu.core_type = #tpu.core_type<tc>, window_params = [{transform_indices = @transform_0, window_bounds = array<i64: 384, 784>}, {pipeline_mode = #tpu.pipeline_mode<synchronous>, transform_indices = @transform_1, window_bounds = array<i64: 784, 128>}, {pipeline_mode = #tpu.pipeline_mode<synchronous>, transform_indices = @transform_2, window_bounds = array<i64: 1, 128>}, {pipeline_mode = #tpu.pipeline_mode<synchronous>, transform_indices = @transform_3, window_bounds = array<i64: 1, 128>}, {transform_indices = @transform_4, window_bounds = array<i64: 1, 1>}, {transform_indices = @transform_5, window_bounds = array<i64: 384, 1>}]} {
    %c0 = arith.constant 0 : index
    %c0_0 = arith.constant 0 : index
    %0 = vector.load %arg1[%c0, %c0_0] : memref<384x784xf32, #tpu.memory_space<vmem>>, vector<384x784xf32>
    %1 = arith.truncf %0 : vector<384x784xf32> to vector<384x784xbf16>
    %c0_1 = arith.constant 0 : index
    %c0_2 = arith.constant 0 : index
    %2 = vector.load %arg2[%c0_1, %c0_2] : memref<784x128xbf16, #tpu.memory_space<vmem>>, vector<784x128xbf16>
    %cst = arith.constant dense<0.000000e+00> : vector<384x128xf32>
    %3 = tpu.matmul %1, %2, %cst {dimension_numbers = #tpu.dot_dimension_numbers<[1], [0], [0], [1], [0, 0, 1, 1], [], []>} : vector<384x784xbf16>, vector<784x128xbf16>, vector<384x128xf32> -> vector<384x128xf32>
    %c0_3 = arith.constant 0 : index
    %c0_4 = arith.constant 0 : index
    %4 = vector.load %arg3[%c0_3, %c0_4] : memref<1x128xf32, #tpu.memory_space<vmem>>, vector<1x128xf32>
    %5 = vector.broadcast %4 : vector<1x128xf32> to vector<384x128xf32>
    %6 = arith.addf %3, %5 : vector<384x128xf32>
    %cst_5 = arith.constant 0.000000e+00 : f32
    %7 = vector.broadcast %cst_5 : f32 to vector<384x128xf32>
    %8 = arith.maximumf %6, %7 : vector<384x128xf32>
    %c0_6 = arith.constant 0 : index
    %c0_7 = arith.constant 0 : index
    %9 = vector.load %arg4[%c0_6, %c0_7] : memref<1x128xf32, #tpu.memory_space<vmem>>, vector<1x128xf32>
    %10 = vector.broadcast %9 : vector<1x128xf32> to vector<384x128xf32>
    %11 = arith.mulf %8, %10 : vector<384x128xf32>
    %cst_8 = arith.constant dense<0.000000e+00> : vector<384xf32>
    %12 = vector.multi_reduction <add>, %11, %cst_8 [1] : vector<384x128xf32> to vector<384xf32>
    %13 = vector.shape_cast %12 : vector<384xf32> to vector<384x1xf32>
    %c0_9 = arith.constant 0 : index
    %c0_10 = arith.constant 0 : index
    %14 = memref.load %arg5[%c0_9, %c0_10] : memref<1x1xf32, #tpu.memory_space<smem>>
    %15 = vector.broadcast %14 : f32 to vector<384x1xf32>
    %16 = arith.addf %13, %15 : vector<384x1xf32>
    %17 = arith.negf %16 : vector<384x1xf32>
    %18 = math.exp %17 : vector<384x1xf32>
    %cst_11 = arith.constant 1.000000e+00 : f32
    %19 = vector.broadcast %cst_11 : f32 to vector<384x1xf32>
    %20 = arith.addf %19, %18 : vector<384x1xf32>
    %21 = arith.divf %19, %20 : vector<384x1xf32>
    %c0_12 = arith.constant 0 : index
    %c0_13 = arith.constant 0 : index
    %22 = vector.load %arg6[%c0_12, %c0_13] : memref<384x1xf32, #tpu.memory_space<vmem>>, vector<384x1xf32>
    tpu.vector_store %arg6[%c0_12, %c0_13], %21 {strides = array<i32>} : memref<384x1xf32, #tpu.memory_space<vmem>>, vector<384x1xf32>,
    return
  }
  func.func @transform_0(%arg0: i32) -> (i32, i32) {
    %c0_i32 = arith.constant 0 : i32
    %c0_i32_0 = arith.constant 0 : i32
    return %arg0, %c0_i32 : i32, i32
  }
  func.func @transform_1(%arg0: i32) -> (i32, i32) {
    %c0_i32 = arith.constant 0 : i32
    %c0_i32_0 = arith.constant 0 : i32
    %c0_i32_1 = arith.constant 0 : i32
    return %c0_i32, %c0_i32_0 : i32, i32
  }
  func.func @transform_2(%arg0: i32) -> (i32, i32) {
    %c0_i32 = arith.constant 0 : i32
    %c0_i32_0 = arith.constant 0 : i32
    %c0_i32_1 = arith.constant 0 : i32
    return %c0_i32, %c0_i32_0 : i32, i32
  }
  func.func @transform_3(%arg0: i32) -> (i32, i32) {
    %c0_i32 = arith.constant 0 : i32
    %c0_i32_0 = arith.constant 0 : i32
    %c0_i32_1 = arith.constant 0 : i32
    return %c0_i32, %c0_i32_0 : i32, i32
  }
  func.func @transform_4(%arg0: i32) -> (i32, i32) {
    %c0_i32 = arith.constant 0 : i32
    %c0_i32_0 = arith.constant 0 : i32
    %c0_i32_1 = arith.constant 0 : i32
    return %c0_i32, %c0_i32_0 : i32, i32
  }
  func.func @transform_5(%arg0: i32) -> (i32, i32) {
    %c0_i32 = arith.constant 0 : i32
    %c0_i32_0 = arith.constant 0 : i32
    return %arg0, %c0_i32 : i32, i32
  }
}

</mosaic_0001>

<llo_original>
// kernel: tpu_custom_call.1
$region0: #{tpu_custom_call.1}
  #allocation0 [shape = 'u32[]', space=smem, size = 0x4, offset = 0x4, fixed_abs, tag = 'smem constant byte address 0x4 - core index']
  #allocation1 [shape = 'u32[72,128]{1,0:T(1,128)}', space=vmem, size = 0x9000, scoped, tag = 'internal scratch']
  #allocation2 [shape = 'f32[1,1]{1,0:T(1,128)S(6)}', space=smem, size = 0x200, scoped, tag = 'scoped memory for tpu_custom_call.1']
  %s0 = inlined_call_operand.vmem [shape: f32[600,784], index: 0, kind: input, shape index: {}]
  %s1 = inlined_call_operand.vmem [shape: bf16[784,128], index: 1, kind: input, shape index: {}]
  %s2 = inlined_call_operand.vmem [shape: f32[1,128], index: 2, kind: input, shape index: {}]
  %s3 = inlined_call_operand.vmem [shape: f32[1,128], index: 3, kind: input, shape index: {}]
  %s4 = inlined_call_operand.<no memory space> [shape: f32[1,1], index: 4, kind: input, shape index: {}]
  %s5 = inlined_call_operand.vmem [shape: f32[600,1], index: 5, kind: output, shape index: {}]
  %s6 = sld [smem:[#allocation0]]
  $region101: #{tpu_custom_call.1} parent=0
    _
  %s8 = ssub.s32 1, %s6
  %s9 = scalar_select 0, %s8, %s6
  %10 = sst [smem:[#allocation2]] %s4
  $region1: #{tpu_custom_call.1} parent=0
    #allocation3 [shape = 'u8[393216]{0}', space=vmem, size = 0x60000, scoped, tag = 'output window, operand 0']
    loop: start=0, step=1, limit=4
    $region2: #{tpu_custom_call.1} parent=1 // loop_pre_header
      _
    $region3: #{tpu_custom_call.1} parent=1 // loop_header
      %s12 = sphi 0, %s16
      %p13 = scmp.ge.s32.totalorder %s12, 4
      %s22 = sphi 0, %s24
      %s25 = sphi 0, %s22
      %s26 = sphi 0, %s25
      %s42 = sphi 0, %s26
      %s46 = sphi 0, %s46
      %s48 = sphi 0, %s46
      %s49 = sphi 0, %s48
      %s63 = sphi 0, %s49
      %s67 = sphi 0, %s67
      %s69 = sphi 0, %s67
      %s70 = sphi 0, %s69
      %s84 = sphi 0, %s70
      %s88 = sphi 0, %s88
      %s90 = sphi 0, %s88
      %s91 = sphi 0, %s90
      %s105 = sphi 0, %s91
      %s109 = sphi 0, %s109
      %s111 = sphi 0, %s109
      %s112 = sphi 0, %s111
      %s126 = sphi 0, %s112
      %s132 = sphi 0, %s134
      %s135 = sphi 0, %s132
      %s136 = sphi 0, %s135
      %s152 = sphi 0, %s136
    $region4: #{tpu_custom_call.1} parent=1 // loop_header_branch
      %15 = sbr.rel (%p13) target = $region8
    $region5: #{tpu_custom_call.1} parent=1 // loop_body
      %s17 = ssub.s32 %s12, 1
      %s18 = ssub.s32 %s12, 2
      %s19 = sadd.s32 %s12, 1
      %s20 = ssub.s32 %s12, %s19
      %p21 = scmp.eq.s32.totalorder %s20, 0
      %s23 = sadd.s32 %s22, 1
      %s24 = scalar_select %p21, %s22, %s23
      %p27 = pneg %p21
      %p28 = scmp.eq.s32.totalorder %s12, 1
      %p29 = por %p27, %p28
      %p30 = scmp.ne.s32.totalorder %s22, %s25
      %p31 = scmp.eq.s32.totalorder %s12, 0
      %p32 = por %p30, %p31
      %p33 = scmp.ne.s32.totalorder %s22, %s25
      %p34 = scmp.eq.s32.totalorder %s17, 1
      %p35 = por %p33, %p34
      %p36 = scmp.ne.s32.totalorder %s25, %s26
      %p37 = scmp.eq.s32.totalorder %s17, 0
      %p38 = por %p36, %p37
      %p39 = scmp.ne.s32.totalorder %s25, %s26
      %p40 = scmp.eq.s32.totalorder %s18, 1
      %p41 = por %p39, %p40
      %p43 = scmp.ne.s32.totalorder %s26, %s42
      %p44 = scmp.eq.s32.totalorder %s18, 0
      %p45 = por %p43, %p44
      %s47 = sadd.s32 %s46, 1
      %p50 = scmp.eq.s32.totalorder %s12, 1
      %p51 = scmp.ne.s32.totalorder %s46, %s48
      %p52 = scmp.eq.s32.totalorder %s12, 0
      %p53 = por %p51, %p52
      %p54 = scmp.ne.s32.totalorder %s46, %s48
      %p55 = scmp.eq.s32.totalorder %s17, 1
      %p56 = por %p54, %p55
      %p57 = scmp.ne.s32.totalorder %s48, %s49
      %p58 = scmp.eq.s32.totalorder %s17, 0
      %p59 = por %p57, %p58
      %p60 = scmp.ne.s32.totalorder %s48, %s49
      %p61 = scmp.eq.s32.totalorder %s18, 1
      %p62 = por %p60, %p61
      %p64 = scmp.ne.s32.totalorder %s49, %s63
      %p65 = scmp.eq.s32.totalorder %s18, 0
      %p66 = por %p64, %p65
      %s68 = sadd.s32 %s67, 1
      %p71 = scmp.eq.s32.totalorder %s12, 1
      %p72 = scmp.ne.s32.totalorder %s67, %s69
      %p73 = scmp.eq.s32.totalorder %s12, 0
      %p74 = por %p72, %p73
      %p75 = scmp.ne.s32.totalorder %s67, %s69
      %p76 = scmp.eq.s32.totalorder %s17, 1
      %p77 = por %p75, %p76
      %p78 = scmp.ne.s32.totalorder %s69, %s70
      %p79 = scmp.eq.s32.totalorder %s17, 0
      %p80 = por %p78, %p79
      %p81 = scmp.ne.s32.totalorder %s69, %s70
      %p82 = scmp.eq.s32.totalorder %s18, 1
      %p83 = por %p81, %p82
      %p85 = scmp.ne.s32.totalorder %s70, %s84
      %p86 = scmp.eq.s32.totalorder %s18, 0
      %p87 = por %p85, %p86
      %s89 = sadd.s32 %s88, 1
      %p92 = scmp.eq.s32.totalorder %s12, 1
      %p93 = scmp.ne.s32.totalorder %s88, %s90
      %p94 = scmp.eq.s32.totalorder %s12, 0
      %p95 = por %p93, %p94
      %p96 = scmp.ne.s32.totalorder %s88, %s90
      %p97 = scmp.eq.s32.totalorder %s17, 1
      %p98 = por %p96, %p97
      %p99 = scmp.ne.s32.totalorder %s90, %s91
      %p100 = scmp.eq.s32.totalorder %s17, 0
      %p101 = por %p99, %p100
      %p102 = scmp.ne.s32.totalorder %s90, %s91
      %p103 = scmp.eq.s32.totalorder %s18, 1
      %p104 = por %p102, %p103
      %p106 = scmp.ne.s32.totalorder %s91, %s105
      %p107 = scmp.eq.s32.totalorder %s18, 0
      %p108 = por %p106, %p107
      %s110 = sadd.s32 %s109, 1
      %p113 = scmp.eq.s32.totalorder %s12, 1
      %p114 = scmp.ne.s32.totalorder %s109, %s111
      %p115 = scmp.eq.s32.totalorder %s12, 0
      %p116 = por %p114, %p115
      %p117 = scmp.ne.s32.totalorder %s109, %s111
      %p118 = scmp.eq.s32.totalorder %s17, 1
      %p119 = por %p117, %p118
      %p120 = scmp.ne.s32.totalorder %s111, %s112
      %p121 = scmp.eq.s32.totalorder %s17, 0
      %p122 = por %p120, %p121
      %p123 = scmp.ne.s32.totalorder %s111, %s112
      %p124 = scmp.eq.s32.totalorder %s18, 1
      %p125 = por %p123, %p124
      %p127 = scmp.ne.s32.totalorder %s112, %s126
      %p128 = scmp.eq.s32.totalorder %s18, 0
      %p129 = por %p127, %p128
      %s130 = ssub.s32 %s12, %s19
      %p131 = scmp.eq.s32.totalorder %s130, 0
      %s133 = sadd.s32 %s132, 1
      %s134 = scalar_select %p131, %s132, %s133
      %p137 = pneg %p131
      %p138 = scmp.eq.s32.totalorder %s12, 1
      %p139 = por %p137, %p138
      %p140 = scmp.ne.s32.totalorder %s132, %s135
      %p141 = scmp.eq.s32.totalorder %s12, 0
      %p142 = por %p140, %p141
      %p143 = scmp.ne.s32.totalorder %s132, %s135
      %p144 = scmp.eq.s32.totalorder %s17, 1
      %p145 = por %p143, %p144
      %p146 = scmp.ne.s32.totalorder %s135, %s136
      %p147 = scmp.eq.s32.totalorder %s17, 0
      %p148 = por %p146, %p147
      %p149 = scmp.ne.s32.totalorder %s135, %s136
      %p150 = scmp.eq.s32.totalorder %s18, 1
      %p151 = por %p149, %p150
      %p153 = scmp.ne.s32.totalorder %s136, %s152
      %p154 = scmp.eq.s32.totalorder %s18, 0
      %p155 = por %p153, %p154
      %p156 = scmp.le.s32.totalorder 1, %s12
      %p157 = scmp.lt.s32.totalorder %s12, 3
      %p158 = pnand %p156, %p157
      %p159 = pneg %p158
      // Predicated region
      $region9: #{tpu_custom_call.1} parent=5 // pred_check
        _
      $region10: #{tpu_custom_call.1} parent=5 // pred_check_branch
        %161 = sbr.rel (%p158) target = $region12
      $region11: #{tpu_custom_call.1} parent=5 // pred_region
        %s162 = ssub.s32 %s12, 1
        // Predicated region
        $region13: #{tpu_custom_call.1} parent=11 // pred_check
          %p163 = pneg %p59
        $region14: #{tpu_custom_call.1} parent=11 // pred_check_branch
          %165 = sbr.rel (%p163) target = $region16
        $region15: #{tpu_custom_call.1} parent=11 // pred_region
          _
        $region16: #{tpu_custom_call.1} parent=11 // pred_fallthru
          _
        // Predicated region
        $region17: #{tpu_custom_call.1} parent=11 // pred_check
          %p166 = pneg %p80
        $region18: #{tpu_custom_call.1} parent=11 // pred_check_branch
          %168 = sbr.rel (%p166) target = $region20
        $region19: #{tpu_custom_call.1} parent=11 // pred_region
          _
        $region20: #{tpu_custom_call.1} parent=11 // pred_fallthru
          _
        // Predicated region
        $region21: #{tpu_custom_call.1} parent=11 // pred_check
          %p169 = pneg %p101
        $region22: #{tpu_custom_call.1} parent=11 // pred_check_branch
          %171 = sbr.rel (%p169) target = $region24
        $region23: #{tpu_custom_call.1} parent=11 // pred_region
          _
        $region24: #{tpu_custom_call.1} parent=11 // pred_fallthru
          _
        // Predicated region
        $region25: #{tpu_custom_call.1} parent=11 // pred_check
          %p172 = pneg %p122
        $region26: #{tpu_custom_call.1} parent=11 // pred_check_branch
          %174 = sbr.rel (%p172) target = $region28
        $region27: #{tpu_custom_call.1} parent=11 // pred_region
          _
        $region28: #{tpu_custom_call.1} parent=11 // pred_fallthru
          _
      $region12: #{tpu_custom_call.1} parent=5 // pred_fallthru
        _
      %p175 = scmp.lt.s32.totalorder %s12, 2
      // Predicated region
      $region29: #{tpu_custom_call.1} parent=5 // pred_check
        %p176 = pneg %p175
      $region30: #{tpu_custom_call.1} parent=5 // pred_check_branch
        %178 = sbr.rel (%p176) target = $region32
      $region31: #{tpu_custom_call.1} parent=5 // pred_region
        // Predicated region
        $region33: #{tpu_custom_call.1} parent=31 // pred_check
          %p179 = pneg %p32
        $region34: #{tpu_custom_call.1} parent=31 // pred_check_branch
          %181 = sbr.rel (%p179) target = $region36
        $region35: #{tpu_custom_call.1} parent=31 // pred_region
          %s182 = smul.u32 48, %s12
          %s183 = ssub.s32 75, %s182
          %p184 = scmp.lt.s32.totalorder %s183, 48
          %s185 = scalar_select %p184, %s183, 48
          %s186 = smul.u32 8, %s185
          %s187 = smul.u32 %s186, 7
          %p188 = scmp.lt.s32.totalorder %s182, 74
          %s189 = scalar_select %p188, %s182, 74
          %s190 = smul.addr %s189, 7
          %s191 = smul.addr %s190, 8
          %s192 = scalar_lea.vmem %s0, %s191
          %s193 = smul.u32 48, %s12
          %s194 = ssub.s32 75, %s193
          %p195 = scmp.lt.s32.totalorder %s194, 48
          %s196 = scalar_select %p195, %s194, 48
          %s197 = smul.u32 8, %s196
          %s198 = smul.u32 %s197, 7
        $region36: #{tpu_custom_call.1} parent=31 // pred_fallthru
          _
      $region32: #{tpu_custom_call.1} parent=5 // pred_fallthru
        _
      %p199 = scmp.le.s32.totalorder 1, %s12
      %p200 = scmp.lt.s32.totalorder %s12, 3
      %p201 = pnand %p199, %p200
      %p202 = pneg %p201
      // Predicated region
      $region37: #{tpu_custom_call.1} parent=5 // pred_check
        _
      $region38: #{tpu_custom_call.1} parent=5 // pred_check_branch
        %204 = sbr.rel (%p201) target = $region40
      $region39: #{tpu_custom_call.1} parent=5 // pred_region
        %s205 = ssub.s32 %s12, 1
        %s206 = smul.u32 48, %s17
        %s207 = ssub.s32 75, %s206
        %p208 = scmp.lt.s32.totalorder %s207, 48
        %s209 = scalar_select %p208, %s207, 48
        %s210 = smul.u32 8, %s209
        %s211 = smul.u32 %s210, 7
        %p212 = scmp.lt.s32.totalorder %s206, 74
        %s213 = scalar_select %p212, %s206, 74
        %s214 = smul.addr %s213, 7
        %s215 = smul.addr %s214, 8
        %s216 = scalar_lea.vmem %s0, %s215
        %p217 = pneg %p38
        %p218 = pneg %p35
        %p219 = pneg %p59
        %p220 = pneg %p56
        %p221 = pneg %p80
        %p222 = pneg %p77
        %p223 = pneg %p101
        %p224 = pneg %p98
        %p225 = pneg %p122
        %p226 = pneg %p119
        %p227 = pneg %p148
        %p228 = pneg %p145
        %s229 = sand.u32 %s135, 1
        %s230 = sand.u32 %s135, 1
        %s231 = smul.addr %s230, 384
        %s232 = scalar_lea.vmem [#allocation3], %s231
        %s233 = smul.u32 48, %s17
        %s234 = ssub.s32 75, %s233
        %p235 = scmp.lt.s32.totalorder %s234, 48
        %s236 = scalar_select %p235, %s234, 48
        %s237 = smul.u32 8, %s236
        %s238 = smul.u32 %s237, 7
        %p239 = scmp.lt.s32.totalorder %s233, 74
        %s240 = scalar_select %p239, %s233, 74
        %s241 = smul.addr %s240, 7
        %s242 = smul.addr %s241, 8
        %s243 = scalar_lea.vmem %s0, %s242
        %s244 = smul.u32 48, %s17
        %s245 = ssub.s32 75, %s244
        %p246 = scmp.lt.s32.totalorder %s245, 48
        %s247 = scalar_select %p246, %s245, 48
        %s248 = smul.u32 8, %s247
        %s249 = smul.u32 %s248, 7
        %s250 = smul.u32 48, %s17
        %s251 = ssub.s32 75, %s250
        %p252 = scmp.lt.s32.totalorder %s251, 48
        %s253 = scalar_select %p252, %s251, 48
        %s254 = smul.u32 8, %s253
        %v256 = vld [vmem:[%s243] sm:$0xff]
        %v257 = vld [vmem:[%s243 + $0x8] sm:$0xff]
        %v258 = vld [vmem:[%s243 + $0x10] sm:$0xff]
        %v259 = vld [vmem:[%s243 + $0x18] sm:$0xff]
        %v260 = vld [vmem:[%s243 + $0x20] sm:$0xff]
        %v261 = vld [vmem:[%s243 + $0x28] sm:$0xff]
        %v262 = vld [vmem:[%s243 + $0x30] sm:$0xff]
        %v263 = vld [vmem:[%s243 + $0x38] sm:$0xff]
        %v264 = vld [vmem:[%s243 + $0x40] sm:$0xff]
        %v265 = vld [vmem:[%s243 + $0x48] sm:$0xff]
        %v266 = vld [vmem:[%s243 + $0x50] sm:$0xff]
        %v267 = vld [vmem:[%s243 + $0x58] sm:$0xff]
        %v268 = vld [vmem:[%s243 + $0x60] sm:$0xff]
        %v269 = vld [vmem:[%s243 + $0x68] sm:$0xff]
        %v270 = vld [vmem:[%s243 + $0x70] sm:$0xff]
        %v271 = vld [vmem:[%s243 + $0x78] sm:$0xff]
        %v272 = vld [vmem:[%s243 + $0x80] sm:$0xff]
        %v273 = vld [vmem:[%s243 + $0x88] sm:$0xff]
        %v274 = vld [vmem:[%s243 + $0x90] sm:$0xff]
        %v275 = vld [vmem:[%s243 + $0x98] sm:$0xff]
        %v276 = vld [vmem:[%s243 + $0xa0] sm:$0xff]
        %v277 = vld [vmem:[%s243 + $0xa8] sm:$0xff]
        %v278 = vld [vmem:[%s243 + $0xb0] sm:$0xff]
        %v279 = vld [vmem:[%s243 + $0xb8] sm:$0xff]
        %v280 = vld [vmem:[%s243 + $0xc0] sm:$0xff]
        %v281 = vld [vmem:[%s243 + $0xc8] sm:$0xff]
        %v282 = vld [vmem:[%s243 + $0xd0] sm:$0xff]
        %v283 = vld [vmem:[%s243 + $0xd8] sm:$0xff]
        %v284 = vld [vmem:[%s243 + $0xe0] sm:$0xff]
        %v285 = vld [vmem:[%s243 + $0xe8] sm:$0xff]
        %v286 = vld [vmem:[%s243 + $0xf0] sm:$0xff]
        %v287 = vld [vmem:[%s243 + $0xf8] sm:$0xff]
        %v288 = vld [vmem:[%s243 + $0x100] sm:$0xff]
        %v289 = vld [vmem:[%s243 + $0x108] sm:$0xff]
        %v290 = vld [vmem:[%s243 + $0x110] sm:$0xff]
        %v291 = vld [vmem:[%s243 + $0x118] sm:$0xff]
        %v292 = vld [vmem:[%s243 + $0x120] sm:$0xff]
        %v293 = vld [vmem:[%s243 + $0x128] sm:$0xff]
        %v294 = vld [vmem:[%s243 + $0x130] sm:$0xff]
        %v295 = vld [vmem:[%s243 + $0x138] sm:$0xff]
        %v296 = vld [vmem:[%s243 + $0x140] sm:$0xff]
        %v297 = vld [vmem:[%s243 + $0x148] sm:$0xff]
        %v298 = vld [vmem:[%s243 + $0x150] sm:$0xff]
        %v299 = vld [vmem:[%s243 + $0x158] sm:$0xff]
        %v300 = vld [vmem:[%s243 + $0x160] sm:$0xff]
        %v301 = vld [vmem:[%s243 + $0x168] sm:$0xff]
        %v302 = vld [vmem:[%s243 + $0x170] sm:$0xff]
        %v303 = vld [vmem:[%s243 + $0x178] sm:$0xff]
        %v304 = vld [vmem:[%s243 + $0x180] sm:$0xff]
        %v305 = vld [vmem:[%s243 + $0x188] sm:$0xff]
        %v306 = vld [vmem:[%s243 + $0x190] sm:$0xff]
        %v307 = vld [vmem:[%s243 + $0x198] sm:$0xff]
        %v308 = vld [vmem:[%s243 + $0x1a0] sm:$0xff]
        %v309 = vld [vmem:[%s243 + $0x1a8] sm:$0xff]
        %v310 = vld [vmem:[%s243 + $0x1b0] sm:$0xff]
        %v311 = vld [vmem:[%s243 + $0x1b8] sm:$0xff]
        %v312 = vld [vmem:[%s243 + $0x1c0] sm:$0xff]
        %v313 = vld [vmem:[%s243 + $0x1c8] sm:$0xff]
        %v314 = vld [vmem:[%s243 + $0x1d0] sm:$0xff]
        %v315 = vld [vmem:[%s243 + $0x1d8] sm:$0xff]
        %v316 = vld [vmem:[%s243 + $0x1e0] sm:$0xff]
        %v317 = vld [vmem:[%s243 + $0x1e8] sm:$0xff]
        %v318 = vld [vmem:[%s243 + $0x1f0] sm:$0xff]
        %v319 = vld [vmem:[%s243 + $0x1f8] sm:$0xff]
        %v320 = vld [vmem:[%s243 + $0x200] sm:$0xff]
        %v321 = vld [vmem:[%s243 + $0x208] sm:$0xff]
        %v322 = vld [vmem:[%s243 + $0x210] sm:$0xff]
        %v323 = vld [vmem:[%s243 + $0x218] sm:$0xff]
        %v324 = vld [vmem:[%s243 + $0x220] sm:$0xff]
        %v325 = vld [vmem:[%s243 + $0x228] sm:$0xff]
        %v326 = vld [vmem:[%s243 + $0x230] sm:$0xff]
        %v327 = vld [vmem:[%s243 + $0x238] sm:$0xff]
        %v328 = vld [vmem:[%s243 + $0x240] sm:$0xff]
        %v329 = vld [vmem:[%s243 + $0x248] sm:$0xff]
        %v330 = vld [vmem:[%s243 + $0x250] sm:$0xff]
        %v331 = vld [vmem:[%s243 + $0x258] sm:$0xff]
        %v332 = vld [vmem:[%s243 + $0x260] sm:$0xff]
        %v333 = vld [vmem:[%s243 + $0x268] sm:$0xff]
        %v334 = vld [vmem:[%s243 + $0x270] sm:$0xff]
        %v335 = vld [vmem:[%s243 + $0x278] sm:$0xff]
        %v336 = vld [vmem:[%s243 + $0x280] sm:$0xff]
        %v337 = vld [vmem:[%s243 + $0x288] sm:$0xff]
        %v338 = vld [vmem:[%s243 + $0x290] sm:$0xff]
        %v339 = vld [vmem:[%s243 + $0x298] sm:$0xff]
        %v340 = vld [vmem:[%s243 + $0x2a0] sm:$0xff]
        %v341 = vld [vmem:[%s243 + $0x2a8] sm:$0xff]
        %v342 = vld [vmem:[%s243 + $0x2b0] sm:$0xff]
        %v343 = vld [vmem:[%s243 + $0x2b8] sm:$0xff]
        %v344 = vld [vmem:[%s243 + $0x2c0] sm:$0xff]
        %v345 = vld [vmem:[%s243 + $0x2c8] sm:$0xff]
        %v346 = vld [vmem:[%s243 + $0x2d0] sm:$0xff]
        %v347 = vld [vmem:[%s243 + $0x2d8] sm:$0xff]
        %v348 = vld [vmem:[%s243 + $0x2e0] sm:$0xff]
        %v349 = vld [vmem:[%s243 + $0x2e8] sm:$0xff]
        %v350 = vld [vmem:[%s243 + $0x2f0] sm:$0xff]
        %v351 = vld [vmem:[%s243 + $0x2f8] sm:$0xff]
        %v352 = vld [vmem:[%s243 + $0x300] sm:$0xff]
        %v353 = vld [vmem:[%s243 + $0x308] sm:$0xff]
        %v354 = vld [vmem:[%s243 + $0x310] sm:$0xff]
        %v355 = vld [vmem:[%s243 + $0x318] sm:$0xff]
        %v356 = vld [vmem:[%s243 + $0x320] sm:$0xff]
        %v357 = vld [vmem:[%s243 + $0x328] sm:$0xff]
        %v358 = vld [vmem:[%s243 + $0x330] sm:$0xff]
        %v359 = vld [vmem:[%s243 + $0x338] sm:$0xff]
        %v360 = vld [vmem:[%s243 + $0x340] sm:$0xff]
        %v361 = vld [vmem:[%s243 + $0x348] sm:$0xff]
        %v362 = vld [vmem:[%s243 + $0x350] sm:$0xff]
        %v363 = vld [vmem:[%s243 + $0x358] sm:$0xff]
        %v364 = vld [vmem:[%s243 + $0x360] sm:$0xff]
        %v365 = vld [vmem:[%s243 + $0x368] sm:$0xff]
        %v366 = vld [vmem:[%s243 + $0x370] sm:$0xff]
        %v367 = vld [vmem:[%s243 + $0x378] sm:$0xff]
        %v368 = vld [vmem:[%s243 + $0x380] sm:$0xff]
        %v369 = vld [vmem:[%s243 + $0x388] sm:$0xff]
        %v370 = vld [vmem:[%s243 + $0x390] sm:$0xff]
        %v371 = vld [vmem:[%s243 + $0x398] sm:$0xff]
        %v372 = vld [vmem:[%s243 + $0x3a0] sm:$0xff]
        %v373 = vld [vmem:[%s243 + $0x3a8] sm:$0xff]
        %v374 = vld [vmem:[%s243 + $0x3b0] sm:$0xff]
        %v375 = vld [vmem:[%s243 + $0x3b8] sm:$0xff]
        %v376 = vld [vmem:[%s243 + $0x3c0] sm:$0xff]
        %v377 = vld [vmem:[%s243 + $0x3c8] sm:$0xff]
        %v378 = vld [vmem:[%s243 + $0x3d0] sm:$0xff]
        %v379 = vld [vmem:[%s243 + $0x3d8] sm:$0xff]
        %v380 = vld [vmem:[%s243 + $0x3e0] sm:$0xff]
        %v381 = vld [vmem:[%s243 + $0x3e8] sm:$0xff]
        %v382 = vld [vmem:[%s243 + $0x3f0] sm:$0xff]
        %v383 = vld [vmem:[%s243 + $0x3f8] sm:$0xff]
        %v384 = vld [vmem:[%s243 + $0x400] sm:$0xff]
        %v385 = vld [vmem:[%s243 + $0x408] sm:$0xff]
        %v386 = vld [vmem:[%s243 + $0x410] sm:$0xff]
        %v387 = vld [vmem:[%s243 + $0x418] sm:$0xff]
        %v388 = vld [vmem:[%s243 + $0x420] sm:$0xff]
        %v389 = vld [vmem:[%s243 + $0x428] sm:$0xff]
        %v390 = vld [vmem:[%s243 + $0x430] sm:$0xff]
        %v391 = vld [vmem:[%s243 + $0x438] sm:$0xff]
        %v392 = vld [vmem:[%s243 + $0x440] sm:$0xff]
        %v393 = vld [vmem:[%s243 + $0x448] sm:$0xff]
        %v394 = vld [vmem:[%s243 + $0x450] sm:$0xff]
        %v395 = vld [vmem:[%s243 + $0x458] sm:$0xff]
        %v396 = vld [vmem:[%s243 + $0x460] sm:$0xff]
        %v397 = vld [vmem:[%s243 + $0x468] sm:$0xff]
        %v398 = vld [vmem:[%s243 + $0x470] sm:$0xff]
        %v399 = vld [vmem:[%s243 + $0x478] sm:$0xff]
        %v400 = vld [vmem:[%s243 + $0x480] sm:$0xff]
        %v401 = vld [vmem:[%s243 + $0x488] sm:$0xff]
        %v402 = vld [vmem:[%s243 + $0x490] sm:$0xff]
        %v403 = vld [vmem:[%s243 + $0x498] sm:$0xff]
        %v404 = vld [vmem:[%s243 + $0x4a0] sm:$0xff]
        %v405 = vld [vmem:[%s243 + $0x4a8] sm:$0xff]
        %v406 = vld [vmem:[%s243 + $0x4b0] sm:$0xff]
        %v407 = vld [vmem:[%s243 + $0x4b8] sm:$0xff]
        %v408 = vld [vmem:[%s243 + $0x4c0] sm:$0xff]
        %v409 = vld [vmem:[%s243 + $0x4c8] sm:$0xff]
        %v410 = vld [vmem:[%s243 + $0x4d0] sm:$0xff]
        %v411 = vld [vmem:[%s243 + $0x4d8] sm:$0xff]
        %v412 = vld [vmem:[%s243 + $0x4e0] sm:$0xff]
        %v413 = vld [vmem:[%s243 + $0x4e8] sm:$0xff]
        %v414 = vld [vmem:[%s243 + $0x4f0] sm:$0xff]
        %v415 = vld [vmem:[%s243 + $0x4f8] sm:$0xff]
        %v416 = vld [vmem:[%s243 + $0x500] sm:$0xff]
        %v417 = vld [vmem:[%s243 + $0x508] sm:$0xff]
        %v418 = vld [vmem:[%s243 + $0x510] sm:$0xff]
        %v419 = vld [vmem:[%s243 + $0x518] sm:$0xff]
        %v420 = vld [vmem:[%s243 + $0x520] sm:$0xff]
        %v421 = vld [vmem:[%s243 + $0x528] sm:$0xff]
        %v422 = vld [vmem:[%s243 + $0x530] sm:$0xff]
        %v423 = vld [vmem:[%s243 + $0x538] sm:$0xff]
        %v424 = vld [vmem:[%s243 + $0x540] sm:$0xff]
        %v425 = vld [vmem:[%s243 + $0x548] sm:$0xff]
        %v426 = vld [vmem:[%s243 + $0x550] sm:$0xff]
        %v427 = vld [vmem:[%s243 + $0x558] sm:$0xff]
        %v428 = vld [vmem:[%s243 + $0x560] sm:$0xff]
        %v429 = vld [vmem:[%s243 + $0x568] sm:$0xff]
        %v430 = vld [vmem:[%s243 + $0x570] sm:$0xff]
        %v431 = vld [vmem:[%s243 + $0x578] sm:$0xff]
        %v432 = vld [vmem:[%s243 + $0x580] sm:$0xff]
        %v433 = vld [vmem:[%s243 + $0x588] sm:$0xff]
        %v434 = vld [vmem:[%s243 + $0x590] sm:$0xff]
        %v435 = vld [vmem:[%s243 + $0x598] sm:$0xff]
        %v436 = vld [vmem:[%s243 + $0x5a0] sm:$0xff]
        %v437 = vld [vmem:[%s243 + $0x5a8] sm:$0xff]
        %v438 = vld [vmem:[%s243 + $0x5b0] sm:$0xff]
        %v439 = vld [vmem:[%s243 + $0x5b8] sm:$0xff]
        %v440 = vld [vmem:[%s243 + $0x5c0] sm:$0xff]
        %v441 = vld [vmem:[%s243 + $0x5c8] sm:$0xff]
        %v442 = vld [vmem:[%s243 + $0x5d0] sm:$0xff]
        %v443 = vld [vmem:[%s243 + $0x5d8] sm:$0xff]
        %v444 = vld [vmem:[%s243 + $0x5e0] sm:$0xff]
        %v445 = vld [vmem:[%s243 + $0x5e8] sm:$0xff]
        %v446 = vld [vmem:[%s243 + $0x5f0] sm:$0xff]
        %v447 = vld [vmem:[%s243 + $0x5f8] sm:$0xff]
        %v448 = vld [vmem:[%s243 + $0x600] sm:$0xff]
        %v449 = vld [vmem:[%s243 + $0x608] sm:$0xff]
        %v450 = vld [vmem:[%s243 + $0x610] sm:$0xff]
        %v451 = vld [vmem:[%s243 + $0x618] sm:$0xff]
        %v452 = vld [vmem:[%s243 + $0x620] sm:$0xff]
        %v453 = vld [vmem:[%s243 + $0x628] sm:$0xff]
        %v454 = vld [vmem:[%s243 + $0x630] sm:$0xff]
        %v455 = vld [vmem:[%s243 + $0x638] sm:$0xff]
        %v456 = vld [vmem:[%s243 + $0x640] sm:$0xff]
        %v457 = vld [vmem:[%s243 + $0x648] sm:$0xff]
        %v458 = vld [vmem:[%s243 + $0x650] sm:$0xff]
        %v459 = vld [vmem:[%s243 + $0x658] sm:$0xff]
        %v460 = vld [vmem:[%s243 + $0x660] sm:$0xff]
        %v461 = vld [vmem:[%s243 + $0x668] sm:$0xff]
        %v462 = vld [vmem:[%s243 + $0x670] sm:$0xff]
        %v463 = vld [vmem:[%s243 + $0x678] sm:$0xff]
        %v464 = vld [vmem:[%s243 + $0x680] sm:$0xff]
        %v465 = vld [vmem:[%s243 + $0x688] sm:$0xff]
        %v466 = vld [vmem:[%s243 + $0x690] sm:$0xff]
        %v467 = vld [vmem:[%s243 + $0x698] sm:$0xff]
        %v468 = vld [vmem:[%s243 + $0x6a0] sm:$0xff]
        %v469 = vld [vmem:[%s243 + $0x6a8] sm:$0xff]
        %v470 = vld [vmem:[%s243 + $0x6b0] sm:$0xff]
        %v471 = vld [vmem:[%s243 + $0x6b8] sm:$0xff]
        %v472 = vld [vmem:[%s243 + $0x6c0] sm:$0xff]
        %v473 = vld [vmem:[%s243 + $0x6c8] sm:$0xff]
        %v474 = vld [vmem:[%s243 + $0x6d0] sm:$0xff]
        %v475 = vld [vmem:[%s243 + $0x6d8] sm:$0xff]
        %v476 = vld [vmem:[%s243 + $0x6e0] sm:$0xff]
        %v477 = vld [vmem:[%s243 + $0x6e8] sm:$0xff]
        %v478 = vld [vmem:[%s243 + $0x6f0] sm:$0xff]
        %v479 = vld [vmem:[%s243 + $0x6f8] sm:$0xff]
        %v480 = vld [vmem:[%s243 + $0x700] sm:$0xff]
        %v481 = vld [vmem:[%s243 + $0x708] sm:$0xff]
        %v482 = vld [vmem:[%s243 + $0x710] sm:$0xff]
        %v483 = vld [vmem:[%s243 + $0x718] sm:$0xff]
        %v484 = vld [vmem:[%s243 + $0x720] sm:$0xff]
        %v485 = vld [vmem:[%s243 + $0x728] sm:$0xff]
        %v486 = vld [vmem:[%s243 + $0x730] sm:$0xff]
        %v487 = vld [vmem:[%s243 + $0x738] sm:$0xff]
        %v488 = vld [vmem:[%s243 + $0x740] sm:$0xff]
        %v489 = vld [vmem:[%s243 + $0x748] sm:$0xff]
        %v490 = vld [vmem:[%s243 + $0x750] sm:$0xff]
        %v491 = vld [vmem:[%s243 + $0x758] sm:$0xff]
        %v492 = vld [vmem:[%s243 + $0x760] sm:$0xff]
        %v493 = vld [vmem:[%s243 + $0x768] sm:$0xff]
        %v494 = vld [vmem:[%s243 + $0x770] sm:$0xff]
        %v495 = vld [vmem:[%s243 + $0x778] sm:$0xff]
        %v496 = vld [vmem:[%s243 + $0x780] sm:$0xff]
        %v497 = vld [vmem:[%s243 + $0x788] sm:$0xff]
        %v498 = vld [vmem:[%s243 + $0x790] sm:$0xff]
        %v499 = vld [vmem:[%s243 + $0x798] sm:$0xff]
        %v500 = vld [vmem:[%s243 + $0x7a0] sm:$0xff]
        %v501 = vld [vmem:[%s243 + $0x7a8] sm:$0xff]
        %v502 = vld [vmem:[%s243 + $0x7b0] sm:$0xff]
        %v503 = vld [vmem:[%s243 + $0x7b8] sm:$0xff]
        %v504 = vld [vmem:[%s243 + $0x7c0] sm:$0xff]
        %v505 = vld [vmem:[%s243 + $0x7c8] sm:$0xff]
        %v506 = vld [vmem:[%s243 + $0x7d0] sm:$0xff]
        %v507 = vld [vmem:[%s243 + $0x7d8] sm:$0xff]
        %v508 = vld [vmem:[%s243 + $0x7e0] sm:$0xff]
        %v509 = vld [vmem:[%s243 + $0x7e8] sm:$0xff]
        %v510 = vld [vmem:[%s243 + $0x7f0] sm:$0xff]
        %v511 = vld [vmem:[%s243 + $0x7f8] sm:$0xff]
        %v512 = vld [vmem:[%s243 + $0x800] sm:$0xff]
        %v513 = vld [vmem:[%s243 + $0x808] sm:$0xff]
        %v514 = vld [vmem:[%s243 + $0x810] sm:$0xff]
        %v515 = vld [vmem:[%s243 + $0x818] sm:$0xff]
        %v516 = vld [vmem:[%s243 + $0x820] sm:$0xff]
        %v517 = vld [vmem:[%s243 + $0x828] sm:$0xff]
        %v518 = vld [vmem:[%s243 + $0x830] sm:$0xff]
        %v519 = vld [vmem:[%s243 + $0x838] sm:$0xff]
        %v520 = vld [vmem:[%s243 + $0x840] sm:$0xff]
        %v521 = vld [vmem:[%s243 + $0x848] sm:$0xff]
        %v522 = vld [vmem:[%s243 + $0x850] sm:$0xff]
        %v523 = vld [vmem:[%s243 + $0x858] sm:$0xff]
        %v524 = vld [vmem:[%s243 + $0x860] sm:$0xff]
        %v525 = vld [vmem:[%s243 + $0x868] sm:$0xff]
        %v526 = vld [vmem:[%s243 + $0x870] sm:$0xff]
        %v527 = vld [vmem:[%s243 + $0x878] sm:$0xff]
        %v528 = vld [vmem:[%s243 + $0x880] sm:$0xff]
        %v529 = vld [vmem:[%s243 + $0x888] sm:$0xff]
        %v530 = vld [vmem:[%s243 + $0x890] sm:$0xff]
        %v531 = vld [vmem:[%s243 + $0x898] sm:$0xff]
        %v532 = vld [vmem:[%s243 + $0x8a0] sm:$0xff]
        %v533 = vld [vmem:[%s243 + $0x8a8] sm:$0xff]
        %v534 = vld [vmem:[%s243 + $0x8b0] sm:$0xff]
        %v535 = vld [vmem:[%s243 + $0x8b8] sm:$0xff]
        %v536 = vld [vmem:[%s243 + $0x8c0] sm:$0xff]
        %v537 = vld [vmem:[%s243 + $0x8c8] sm:$0xff]
        %v538 = vld [vmem:[%s243 + $0x8d0] sm:$0xff]
        %v539 = vld [vmem:[%s243 + $0x8d8] sm:$0xff]
        %v540 = vld [vmem:[%s243 + $0x8e0] sm:$0xff]
        %v541 = vld [vmem:[%s243 + $0x8e8] sm:$0xff]
        %v542 = vld [vmem:[%s243 + $0x8f0] sm:$0xff]
        %v543 = vld [vmem:[%s243 + $0x8f8] sm:$0xff]
        %v544 = vld [vmem:[%s243 + $0x900] sm:$0xff]
        %v545 = vld [vmem:[%s243 + $0x908] sm:$0xff]
        %v546 = vld [vmem:[%s243 + $0x910] sm:$0xff]
        %v547 = vld [vmem:[%s243 + $0x918] sm:$0xff]
        %v548 = vld [vmem:[%s243 + $0x920] sm:$0xff]
        %v549 = vld [vmem:[%s243 + $0x928] sm:$0xff]
        %v550 = vld [vmem:[%s243 + $0x930] sm:$0xff]
        %v551 = vld [vmem:[%s243 + $0x938] sm:$0xff]
        %v552 = vld [vmem:[%s243 + $0x940] sm:$0xff]
        %v553 = vld [vmem:[%s243 + $0x948] sm:$0xff]
        %v554 = vld [vmem:[%s243 + $0x950] sm:$0xff]
        %v555 = vld [vmem:[%s243 + $0x958] sm:$0xff]
        %v556 = vld [vmem:[%s243 + $0x960] sm:$0xff]
        %v557 = vld [vmem:[%s243 + $0x968] sm:$0xff]
        %v558 = vld [vmem:[%s243 + $0x970] sm:$0xff]
        %v559 = vld [vmem:[%s243 + $0x978] sm:$0xff]
        %v560 = vld [vmem:[%s243 + $0x980] sm:$0xff]
        %v561 = vld [vmem:[%s243 + $0x988] sm:$0xff]
        %v562 = vld [vmem:[%s243 + $0x990] sm:$0xff]
        %v563 = vld [vmem:[%s243 + $0x998] sm:$0xff]
        %v564 = vld [vmem:[%s243 + $0x9a0] sm:$0xff]
        %v565 = vld [vmem:[%s243 + $0x9a8] sm:$0xff]
        %v566 = vld [vmem:[%s243 + $0x9b0] sm:$0xff]
        %v567 = vld [vmem:[%s243 + $0x9b8] sm:$0xff]
        %v568 = vld [vmem:[%s243 + $0x9c0] sm:$0xff]
        %v569 = vld [vmem:[%s243 + $0x9c8] sm:$0xff]
        %v570 = vld [vmem:[%s243 + $0x9d0] sm:$0xff]
        %v571 = vld [vmem:[%s243 + $0x9d8] sm:$0xff]
        %v572 = vld [vmem:[%s243 + $0x9e0] sm:$0xff]
        %v573 = vld [vmem:[%s243 + $0x9e8] sm:$0xff]
        %v574 = vld [vmem:[%s243 + $0x9f0] sm:$0xff]
        %v575 = vld [vmem:[%s243 + $0x9f8] sm:$0xff]
        %v576 = vld [vmem:[%s243 + $0xa00] sm:$0xff]
        %v577 = vld [vmem:[%s243 + $0xa08] sm:$0xff]
        %v578 = vld [vmem:[%s243 + $0xa10] sm:$0xff]
        %v579 = vld [vmem:[%s243 + $0xa18] sm:$0xff]
        %v580 = vld [vmem:[%s243 + $0xa20] sm:$0xff]
        %v581 = vld [vmem:[%s243 + $0xa28] sm:$0xff]
        %v582 = vld [vmem:[%s243 + $0xa30] sm:$0xff]
        %v583 = vld [vmem:[%s243 + $0xa38] sm:$0xff]
        %v584 = vld [vmem:[%s243 + $0xa40] sm:$0xff]
        %v585 = vld [vmem:[%s243 + $0xa48] sm:$0xff]
        %v586 = vld [vmem:[%s243 + $0xa50] sm:$0xff]
        %v587 = vld [vmem:[%s243 + $0xa58] sm:$0xff]
        %v588 = vld [vmem:[%s243 + $0xa60] sm:$0xff]
        %v589 = vld [vmem:[%s243 + $0xa68] sm:$0xff]
        %v590 = vld [vmem:[%s243 + $0xa70] sm:$0xff]
        %v591 = vld [vmem:[%s243 + $0xa78] sm:$0xff]
        %v592 = vpack.c.bf16 %v263, %v256
        %v593 = vpack.c.bf16 %v264, %v257
        %v594 = vpack.c.bf16 %v265, %v258
        %v595 = vpack.c.bf16 %v266, %v259
        %v596 = vpack.c.bf16 %v267, %v260
        %v597 = vpack.c.bf16 %v268, %v261
        %v598 = vpack.c.bf16 %v269, %v262
        %v599 = vpack.c.bf16 %v277, %v270
        %v600 = vpack.c.bf16 %v278, %v271
        %v601 = vpack.c.bf16 %v279, %v272
        %v602 = vpack.c.bf16 %v280, %v273
        %v603 = vpack.c.bf16 %v281, %v274
        %v604 = vpack.c.bf16 %v282, %v275
        %v605 = vpack.c.bf16 %v283, %v276
        %v606 = vpack.c.bf16 %v291, %v284
        %v607 = vpack.c.bf16 %v292, %v285
        %v608 = vpack.c.bf16 %v293, %v286
        %v609 = vpack.c.bf16 %v294, %v287
        %v610 = vpack.c.bf16 %v295, %v288
        %v611 = vpack.c.bf16 %v296, %v289
        %v612 = vpack.c.bf16 %v297, %v290
        %v613 = vpack.c.bf16 %v305, %v298
        %v614 = vpack.c.bf16 %v306, %v299
        %v615 = vpack.c.bf16 %v307, %v300
        %v616 = vpack.c.bf16 %v308, %v301
        %v617 = vpack.c.bf16 %v309, %v302
        %v618 = vpack.c.bf16 %v310, %v303
        %v619 = vpack.c.bf16 %v311, %v304
        %v620 = vpack.c.bf16 %v319, %v312
        %v621 = vpack.c.bf16 %v320, %v313
        %v622 = vpack.c.bf16 %v321, %v314
        %v623 = vpack.c.bf16 %v322, %v315
        %v624 = vpack.c.bf16 %v323, %v316
        %v625 = vpack.c.bf16 %v324, %v317
        %v626 = vpack.c.bf16 %v325, %v318
        %v627 = vpack.c.bf16 %v333, %v326
        %v628 = vpack.c.bf16 %v334, %v327
        %v629 = vpack.c.bf16 %v335, %v328
        %v630 = vpack.c.bf16 %v336, %v329
        %v631 = vpack.c.bf16 %v337, %v330
        %v632 = vpack.c.bf16 %v338, %v331
        %v633 = vpack.c.bf16 %v339, %v332
        %v634 = vpack.c.bf16 %v347, %v340
        %v635 = vpack.c.bf16 %v348, %v341
        %v636 = vpack.c.bf16 %v349, %v342
        %v637 = vpack.c.bf16 %v350, %v343
        %v638 = vpack.c.bf16 %v351, %v344
        %v639 = vpack.c.bf16 %v352, %v345
        %v640 = vpack.c.bf16 %v353, %v346
        %v641 = vpack.c.bf16 %v361, %v354
        %v642 = vpack.c.bf16 %v362, %v355
        %v643 = vpack.c.bf16 %v363, %v356
        %v644 = vpack.c.bf16 %v364, %v357
        %v645 = vpack.c.bf16 %v365, %v358
        %v646 = vpack.c.bf16 %v366, %v359
        %v647 = vpack.c.bf16 %v367, %v360
        %v648 = vpack.c.bf16 %v375, %v368
        %v649 = vpack.c.bf16 %v376, %v369
        %v650 = vpack.c.bf16 %v377, %v370
        %v651 = vpack.c.bf16 %v378, %v371
        %v652 = vpack.c.bf16 %v379, %v372
        %v653 = vpack.c.bf16 %v380, %v373
        %v654 = vpack.c.bf16 %v381, %v374
        %v655 = vpack.c.bf16 %v389, %v382
        %v656 = vpack.c.bf16 %v390, %v383
        %v657 = vpack.c.bf16 %v391, %v384
        %v658 = vpack.c.bf16 %v392, %v385
        %v659 = vpack.c.bf16 %v393, %v386
        %v660 = vpack.c.bf16 %v394, %v387
        %v661 = vpack.c.bf16 %v395, %v388
        %v662 = vpack.c.bf16 %v403, %v396
        %v663 = vpack.c.bf16 %v404, %v397
        %v664 = vpack.c.bf16 %v405, %v398
        %v665 = vpack.c.bf16 %v406, %v399
        %v666 = vpack.c.bf16 %v407, %v400
        %v667 = vpack.c.bf16 %v408, %v401
        %v668 = vpack.c.bf16 %v409, %v402
        %v669 = vpack.c.bf16 %v417, %v410
        %v670 = vpack.c.bf16 %v418, %v411
        %v671 = vpack.c.bf16 %v419, %v412
        %v672 = vpack.c.bf16 %v420, %v413
        %v673 = vpack.c.bf16 %v421, %v414
        %v674 = vpack.c.bf16 %v422, %v415
        %v675 = vpack.c.bf16 %v423, %v416
        %v676 = vpack.c.bf16 %v431, %v424
        %v677 = vpack.c.bf16 %v432, %v425
        %v678 = vpack.c.bf16 %v433, %v426
        %v679 = vpack.c.bf16 %v434, %v427
        %v680 = vpack.c.bf16 %v435, %v428
        %v681 = vpack.c.bf16 %v436, %v429
        %v682 = vpack.c.bf16 %v437, %v430
        %v683 = vpack.c.bf16 %v445, %v438
        %v684 = vpack.c.bf16 %v446, %v439
        %v685 = vpack.c.bf16 %v447, %v440
        %v686 = vpack.c.bf16 %v448, %v441
        %v687 = vpack.c.bf16 %v449, %v442
        %v688 = vpack.c.bf16 %v450, %v443
        %v689 = vpack.c.bf16 %v451, %v444
        %v690 = vpack.c.bf16 %v459, %v452
        %v691 = vpack.c.bf16 %v460, %v453
        %v692 = vpack.c.bf16 %v461, %v454
        %v693 = vpack.c.bf16 %v462, %v455
        %v694 = vpack.c.bf16 %v463, %v456
        %v695 = vpack.c.bf16 %v464, %v457
        %v696 = vpack.c.bf16 %v465, %v458
        %v697 = vpack.c.bf16 %v473, %v466
        %v698 = vpack.c.bf16 %v474, %v467
        %v699 = vpack.c.bf16 %v475, %v468
        %v700 = vpack.c.bf16 %v476, %v469
        %v701 = vpack.c.bf16 %v477, %v470
        %v702 = vpack.c.bf16 %v478, %v471
        %v703 = vpack.c.bf16 %v479, %v472
        %v704 = vpack.c.bf16 %v487, %v480
        %v705 = vpack.c.bf16 %v488, %v481
        %v706 = vpack.c.bf16 %v489, %v482
        %v707 = vpack.c.bf16 %v490, %v483
        %v708 = vpack.c.bf16 %v491, %v484
        %v709 = vpack.c.bf16 %v492, %v485
        %v710 = vpack.c.bf16 %v493, %v486
        %v711 = vpack.c.bf16 %v501, %v494
        %v712 = vpack.c.bf16 %v502, %v495
        %v713 = vpack.c.bf16 %v503, %v496
        %v714 = vpack.c.bf16 %v504, %v497
        %v715 = vpack.c.bf16 %v505, %v498
        %v716 = vpack.c.bf16 %v506, %v499
        %v717 = vpack.c.bf16 %v507, %v500
        %v718 = vpack.c.bf16 %v515, %v508
        %v719 = vpack.c.bf16 %v516, %v509
        %v720 = vpack.c.bf16 %v517, %v510
        %v721 = vpack.c.bf16 %v518, %v511
        %v722 = vpack.c.bf16 %v519, %v512
        %v723 = vpack.c.bf16 %v520, %v513
        %v724 = vpack.c.bf16 %v521, %v514
        %v725 = vpack.c.bf16 %v529, %v522
        %v726 = vpack.c.bf16 %v530, %v523
        %v727 = vpack.c.bf16 %v531, %v524
        %v728 = vpack.c.bf16 %v532, %v525
        %v729 = vpack.c.bf16 %v533, %v526
        %v730 = vpack.c.bf16 %v534, %v527
        %v731 = vpack.c.bf16 %v535, %v528
        %v732 = vpack.c.bf16 %v543, %v536
        %v733 = vpack.c.bf16 %v544, %v537
        %v734 = vpack.c.bf16 %v545, %v538
        %v735 = vpack.c.bf16 %v546, %v539
        %v736 = vpack.c.bf16 %v547, %v540
        %v737 = vpack.c.bf16 %v548, %v541
        %v738 = vpack.c.bf16 %v549, %v542
        %v739 = vpack.c.bf16 %v557, %v550
        %v740 = vpack.c.bf16 %v558, %v551
        %v741 = vpack.c.bf16 %v559, %v552
        %v742 = vpack.c.bf16 %v560, %v553
        %v743 = vpack.c.bf16 %v561, %v554
        %v744 = vpack.c.bf16 %v562, %v555
        %v745 = vpack.c.bf16 %v563, %v556
        %v746 = vpack.c.bf16 %v571, %v564
        %v747 = vpack.c.bf16 %v572, %v565
        %v748 = vpack.c.bf16 %v573, %v566
        %v749 = vpack.c.bf16 %v574, %v567
        %v750 = vpack.c.bf16 %v575, %v568
        %v751 = vpack.c.bf16 %v576, %v569
        %v752 = vpack.c.bf16 %v577, %v570
        %v753 = vpack.c.bf16 %v585, %v578
        %v754 = vpack.c.bf16 %v586, %v579
        %v755 = vpack.c.bf16 %v587, %v580
        %v756 = vpack.c.bf16 %v588, %v581
        %v757 = vpack.c.bf16 %v589, %v582
        %v758 = vpack.c.bf16 %v590, %v583
        %v759 = vpack.c.bf16 %v591, %v584
        %v760 = vld [vmem:[%s1] sm:$0xf]
        %v761 = vld [vmem:[%s1 + $0x4] sm:$0xf]
        %v762 = vld [vmem:[%s1 + $0x8] sm:$0xf]
        %v763 = vld [vmem:[%s1 + $0xc] sm:$0xf]
        %v764 = vld [vmem:[%s1 + $0x10] sm:$0xf]
        %v765 = vld [vmem:[%s1 + $0x14] sm:$0xf]
        %v766 = vld [vmem:[%s1 + $0x18] sm:$0xf]
        %v767 = vld [vmem:[%s1 + $0x1c] sm:$0xf]
        %v768 = vld [vmem:[%s1 + $0x20] sm:$0xf]
        %v769 = vld [vmem:[%s1 + $0x24] sm:$0xf]
        %v770 = vld [vmem:[%s1 + $0x28] sm:$0xf]
        %v771 = vld [vmem:[%s1 + $0x2c] sm:$0xf]
        %v772 = vld [vmem:[%s1 + $0x30] sm:$0xf]
        %v773 = vld [vmem:[%s1 + $0x34] sm:$0xf]
        %v774 = vld [vmem:[%s1 + $0x38] sm:$0xf]
        %v775 = vld [vmem:[%s1 + $0x3c] sm:$0xf]
        %v776 = vld [vmem:[%s1 + $0x40] sm:$0xf]
        %v777 = vld [vmem:[%s1 + $0x44] sm:$0xf]
        %v778 = vld [vmem:[%s1 + $0x48] sm:$0xf]
        %v779 = vld [vmem:[%s1 + $0x4c] sm:$0xf]
        %v780 = vld [vmem:[%s1 + $0x50] sm:$0xf]
        %v781 = vld [vmem:[%s1 + $0x54] sm:$0xf]
        %v782 = vld [vmem:[%s1 + $0x58] sm:$0xf]
        %v783 = vld [vmem:[%s1 + $0x5c] sm:$0xf]
        %v784 = vld [vmem:[%s1 + $0x60] sm:$0xf]
        %v785 = vld [vmem:[%s1 + $0x64] sm:$0xf]
        %v786 = vld [vmem:[%s1 + $0x68] sm:$0xf]
        %v787 = vld [vmem:[%s1 + $0x6c] sm:$0xf]
        %v788 = vld [vmem:[%s1 + $0x70] sm:$0xf]
        %v789 = vld [vmem:[%s1 + $0x74] sm:$0xf]
        %v790 = vld [vmem:[%s1 + $0x78] sm:$0xf]
        %v791 = vld [vmem:[%s1 + $0x7c] sm:$0xf]
        %v792 = vld [vmem:[%s1 + $0x80] sm:$0xf]
        %v793 = vld [vmem:[%s1 + $0x84] sm:$0xf]
        %v794 = vld [vmem:[%s1 + $0x88] sm:$0xf]
        %v795 = vld [vmem:[%s1 + $0x8c] sm:$0xf]
        %v796 = vld [vmem:[%s1 + $0x90] sm:$0xf]
        %v797 = vld [vmem:[%s1 + $0x94] sm:$0xf]
        %v798 = vld [vmem:[%s1 + $0x98] sm:$0xf]
        %v799 = vld [vmem:[%s1 + $0x9c] sm:$0xf]
        %v800 = vld [vmem:[%s1 + $0xa0] sm:$0xf]
        %v801 = vld [vmem:[%s1 + $0xa4] sm:$0xf]
        %v802 = vld [vmem:[%s1 + $0xa8] sm:$0xf]
        %v803 = vld [vmem:[%s1 + $0xac] sm:$0xf]
        %v804 = vld [vmem:[%s1 + $0xb0] sm:$0xf]
        %v805 = vld [vmem:[%s1 + $0xb4] sm:$0xf]
        %v806 = vld [vmem:[%s1 + $0xb8] sm:$0xf]
        %v807 = vld [vmem:[%s1 + $0xbc] sm:$0xf]
        %v808 = vld [vmem:[%s1 + $0xc0] sm:$0xf]
        %v809 = vld [vmem:[%s1 + $0xc4] sm:$0xf]
        %v810 = vld [vmem:[%s1 + $0xc8] sm:$0xf]
        %v811 = vld [vmem:[%s1 + $0xcc] sm:$0xf]
        %v812 = vld [vmem:[%s1 + $0xd0] sm:$0xf]
        %v813 = vld [vmem:[%s1 + $0xd4] sm:$0xf]
        %v814 = vld [vmem:[%s1 + $0xd8] sm:$0xf]
        %v815 = vld [vmem:[%s1 + $0xdc] sm:$0xf]
        %v816 = vld [vmem:[%s1 + $0xe0] sm:$0xf]
        %v817 = vld [vmem:[%s1 + $0xe4] sm:$0xf]
        %v818 = vld [vmem:[%s1 + $0xe8] sm:$0xf]
        %v819 = vld [vmem:[%s1 + $0xec] sm:$0xf]
        %v820 = vld [vmem:[%s1 + $0xf0] sm:$0xf]
        %v821 = vld [vmem:[%s1 + $0xf4] sm:$0xf]
        %v822 = vld [vmem:[%s1 + $0xf8] sm:$0xf]
        %v823 = vld [vmem:[%s1 + $0xfc] sm:$0xf]
        %v824 = vld [vmem:[%s1 + $0x100] sm:$0xf]
        %v825 = vld [vmem:[%s1 + $0x104] sm:$0xf]
        %v826 = vld [vmem:[%s1 + $0x108] sm:$0xf]
        %v827 = vld [vmem:[%s1 + $0x10c] sm:$0xf]
        %v828 = vld [vmem:[%s1 + $0x110] sm:$0xf]
        %v829 = vld [vmem:[%s1 + $0x114] sm:$0xf]
        %v830 = vld [vmem:[%s1 + $0x118] sm:$0xf]
        %v831 = vld [vmem:[%s1 + $0x11c] sm:$0xf]
        %v832 = vld [vmem:[%s1 + $0x120] sm:$0xf]
        %v833 = vld [vmem:[%s1 + $0x124] sm:$0xf]
        %v834 = vld [vmem:[%s1 + $0x128] sm:$0xf]
        %v835 = vld [vmem:[%s1 + $0x12c] sm:$0xf]
        %v836 = vld [vmem:[%s1 + $0x130] sm:$0xf]
        %v837 = vld [vmem:[%s1 + $0x134] sm:$0xf]
        %v838 = vld [vmem:[%s1 + $0x138] sm:$0xf]
        %v839 = vld [vmem:[%s1 + $0x13c] sm:$0xf]
        %v840 = vld [vmem:[%s1 + $0x140] sm:$0xf]
        %v841 = vld [vmem:[%s1 + $0x144] sm:$0xf]
        %v842 = vld [vmem:[%s1 + $0x148] sm:$0xf]
        %v843 = vld [vmem:[%s1 + $0x14c] sm:$0xf]
        %v844 = vld [vmem:[%s1 + $0x150] sm:$0xf]
        %v845 = vld [vmem:[%s1 + $0x154] sm:$0xf]
        %v846 = vld [vmem:[%s1 + $0x158] sm:$0xf]
        %v847 = vld [vmem:[%s1 + $0x15c] sm:$0xf]
        %v848 = vld [vmem:[%s1 + $0x160] sm:$0xf]
        %v849 = vld [vmem:[%s1 + $0x164] sm:$0xf]
        %v850 = vld [vmem:[%s1 + $0x168] sm:$0xf]
        %v851 = vld [vmem:[%s1 + $0x16c] sm:$0xf]
        %v852 = vld [vmem:[%s1 + $0x170] sm:$0xf]
        %v853 = vld [vmem:[%s1 + $0x174] sm:$0xf]
        %v854 = vld [vmem:[%s1 + $0x178] sm:$0xf]
        %v855 = vld [vmem:[%s1 + $0x17c] sm:$0xf]
        %v856 = vld [vmem:[%s1 + $0x180] sm:$0xf]
        %v857 = vld [vmem:[%s1 + $0x184] sm:$0xf]
        %v858 = vld [vmem:[%s2] sm:$0x1]
        %v860 = vperm.slane %v858, 0
        %v960 = vunpack.c.l.b16 %v760
        %v961 = vunpack.c.l.b16 %v761
        %v962 = vunpack.c.l.b16 %v762
        %v963 = vunpack.c.l.b16 %v763
        %v964 = vunpack.c.l.b16 %v764
        %v965 = vunpack.c.l.b16 %v765
        %v966 = vunpack.c.l.b16 %v766
        %v967 = vunpack.c.l.b16 %v767
        %v968 = vunpack.c.l.b16 %v768
        %v969 = vunpack.c.l.b16 %v769
        %v970 = vunpack.c.l.b16 %v770
        %v971 = vunpack.c.l.b16 %v771
        %v972 = vunpack.c.l.b16 %v772
        %v973 = vunpack.c.l.b16 %v773
        %v974 = vunpack.c.l.b16 %v774
        %v975 = vunpack.c.l.b16 %v775
        %v976 = vunpack.c.l.b16 %v776
        %v977 = vunpack.c.l.b16 %v777
        %v978 = vunpack.c.l.b16 %v778
        %v979 = vunpack.c.l.b16 %v779
        %v980 = vunpack.c.l.b16 %v780
        %v981 = vunpack.c.l.b16 %v781
        %v982 = vunpack.c.l.b16 %v782
        %v983 = vunpack.c.l.b16 %v783
        %v984 = vunpack.c.l.b16 %v784
        %v985 = vunpack.c.l.b16 %v785
        %v986 = vunpack.c.l.b16 %v786
        %v987 = vunpack.c.l.b16 %v787
        %v988 = vunpack.c.l.b16 %v788
        %v989 = vunpack.c.l.b16 %v789
        %v990 = vunpack.c.l.b16 %v790
        %v991 = vunpack.c.l.b16 %v791
        %v992 = vunpack.c.l.b16 %v792
        %v993 = vunpack.c.l.b16 %v793
        %v994 = vunpack.c.l.b16 %v794
        %v995 = vunpack.c.l.b16 %v795
        %v996 = vunpack.c.l.b16 %v796
        %v997 = vunpack.c.l.b16 %v797
        %v998 = vunpack.c.l.b16 %v798
        %v999 = vunpack.c.l.b16 %v799
        %v1000 = vunpack.c.l.b16 %v800
        %v1001 = vunpack.c.l.b16 %v801
        %v1002 = vunpack.c.l.b16 %v802
        %v1003 = vunpack.c.l.b16 %v803
        %v1004 = vunpack.c.l.b16 %v804
        %v1005 = vunpack.c.l.b16 %v805
        %v1006 = vunpack.c.l.b16 %v806
        %v1007 = vunpack.c.l.b16 %v807
        %v1008 = vunpack.c.l.b16 %v808
        %v1009 = vunpack.c.l.b16 %v809
        %v1010 = vunpack.c.l.b16 %v810
        %v1011 = vunpack.c.l.b16 %v811
        %v1012 = vunpack.c.l.b16 %v812
        %v1013 = vunpack.c.l.b16 %v813
        %v1014 = vunpack.c.l.b16 %v814
        %v1015 = vunpack.c.l.b16 %v815
        %v1016 = vunpack.c.l.b16 %v816
        %v1017 = vunpack.c.l.b16 %v817
        %v1018 = vunpack.c.l.b16 %v818
        %v1019 = vunpack.c.l.b16 %v819
        %v1020 = vunpack.c.l.b16 %v820
        %v1021 = vunpack.c.l.b16 %v821
        %v1022 = vunpack.c.l.b16 %v822
        %v1023 = vunpack.c.l.b16 %v823
        %v1024 = vunpack.c.l.b16 %v824
        %v1025 = vunpack.c.l.b16 %v825
        %v1026 = vunpack.c.l.b16 %v826
        %v1027 = vunpack.c.l.b16 %v827
        %v1028 = vunpack.c.l.b16 %v828
        %v1029 = vunpack.c.l.b16 %v829
        %v1030 = vunpack.c.l.b16 %v830
        %v1031 = vunpack.c.l.b16 %v831
        %v1032 = vunpack.c.l.b16 %v832
        %v1033 = vunpack.c.l.b16 %v833
        %v1034 = vunpack.c.l.b16 %v834
        %v1035 = vunpack.c.l.b16 %v835
        %v1036 = vunpack.c.l.b16 %v836
        %v1037 = vunpack.c.l.b16 %v837
        %v1038 = vunpack.c.l.b16 %v838
        %v1039 = vunpack.c.l.b16 %v839
        %v1040 = vunpack.c.l.b16 %v840
        %v1041 = vunpack.c.l.b16 %v841
        %v1042 = vunpack.c.l.b16 %v842
        %v1043 = vunpack.c.l.b16 %v843
        %v1044 = vunpack.c.l.b16 %v844
        %v1045 = vunpack.c.l.b16 %v845
        %v1046 = vunpack.c.l.b16 %v846
        %v1047 = vunpack.c.l.b16 %v847
        %v1048 = vunpack.c.l.b16 %v848
        %v1049 = vunpack.c.l.b16 %v849
        %v1050 = vunpack.c.l.b16 %v850
        %v1051 = vunpack.c.l.b16 %v851
        %v1052 = vunpack.c.l.b16 %v852
        %v1053 = vunpack.c.l.b16 %v853
        %v1054 = vunpack.c.l.b16 %v854
        %v1055 = vunpack.c.l.b16 %v855
        %v1056 = vunpack.c.l.b16 %v856
        %v1057 = vunpack.c.l.b16 %v857
        %v1058 = vpack.c.b16 %v961, %v960
        %v1059 = vpack.c.b16 %v963, %v962
        %v1060 = vpack.c.b16 %v965, %v964
        %v1061 = vpack.c.b16 %v967, %v966
        %v1062 = vpack.c.b16 %v969, %v968
        %v1063 = vpack.c.b16 %v971, %v970
        %v1064 = vpack.c.b16 %v973, %v972
        %v1065 = vpack.c.b16 %v975, %v974
        %v1066 = vpack.c.b16 %v977, %v976
        %v1067 = vpack.c.b16 %v979, %v978
        %v1068 = vpack.c.b16 %v981, %v980
        %v1069 = vpack.c.b16 %v983, %v982
        %v1070 = vpack.c.b16 %v985, %v984
        %v1071 = vpack.c.b16 %v987, %v986
        %v1072 = vpack.c.b16 %v989, %v988
        %v1073 = vpack.c.b16 %v991, %v990
        %v1074 = vpack.c.b16 %v993, %v992
        %v1075 = vpack.c.b16 %v995, %v994
        %v1076 = vpack.c.b16 %v997, %v996
        %v1077 = vpack.c.b16 %v999, %v998
        %v1078 = vpack.c.b16 %v1001, %v1000
        %v1079 = vpack.c.b16 %v1003, %v1002
        %v1080 = vpack.c.b16 %v1005, %v1004
        %v1081 = vpack.c.b16 %v1007, %v1006
        %v1082 = vpack.c.b16 %v1009, %v1008
        %v1083 = vpack.c.b16 %v1011, %v1010
        %v1084 = vpack.c.b16 %v1013, %v1012
        %v1085 = vpack.c.b16 %v1015, %v1014
        %v1086 = vpack.c.b16 %v1017, %v1016
        %v1087 = vpack.c.b16 %v1019, %v1018
        %v1088 = vpack.c.b16 %v1021, %v1020
        %v1089 = vpack.c.b16 %v1023, %v1022
        %v1090 = vpack.c.b16 %v1025, %v1024
        %v1091 = vpack.c.b16 %v1027, %v1026
        %v1092 = vpack.c.b16 %v1029, %v1028
        %v1093 = vpack.c.b16 %v1031, %v1030
        %v1094 = vpack.c.b16 %v1033, %v1032
        %v1095 = vpack.c.b16 %v1035, %v1034
        %v1096 = vpack.c.b16 %v1037, %v1036
        %v1097 = vpack.c.b16 %v1039, %v1038
        %v1098 = vpack.c.b16 %v1041, %v1040
        %v1099 = vpack.c.b16 %v1043, %v1042
        %v1100 = vpack.c.b16 %v1045, %v1044
        %v1101 = vpack.c.b16 %v1047, %v1046
        %v1102 = vpack.c.b16 %v1049, %v1048
        %v1103 = vpack.c.b16 %v1051, %v1050
        %v1104 = vpack.c.b16 %v1053, %v1052
        %v1105 = vpack.c.b16 %v1055, %v1054
        %v1106 = vpack.c.b16 %v1057, %v1056
        %vm1156 = vcmask 130048
        %v1158 = vsel %vm1156, %v598, 0
        %v1161 = vsel %vm1156, %v605, 0
        %v1164 = vsel %vm1156, %v612, 0
        %v1167 = vsel %vm1156, %v619, 0
        %v1170 = vsel %vm1156, %v626, 0
        %v1173 = vsel %vm1156, %v633, 0
        %v1176 = vsel %vm1156, %v640, 0
        %v1179 = vsel %vm1156, %v647, 0
        %v1182 = vsel %vm1156, %v654, 0
        %v1185 = vsel %vm1156, %v661, 0
        %v1188 = vsel %vm1156, %v668, 0
        %v1191 = vsel %vm1156, %v675, 0
        %v1194 = vsel %vm1156, %v682, 0
        %v1197 = vsel %vm1156, %v689, 0
        %v1200 = vsel %vm1156, %v696, 0
        %v1203 = vsel %vm1156, %v703, 0
        %v1206 = vsel %vm1156, %v710, 0
        %v1209 = vsel %vm1156, %v717, 0
        %v1212 = vsel %vm1156, %v724, 0
        %v1215 = vsel %vm1156, %v731, 0
        %v1218 = vsel %vm1156, %v738, 0
        %v1221 = vsel %vm1156, %v745, 0
        %v1224 = vsel %vm1156, %v752, 0
        %v1227 = vsel %vm1156, %v759, 0
        %1229 = vmatpush.bf16.msra.mxu0 %v1065
        %1230 = vmatpush.bf16.msra.mxu0 %v1064
        %1231 = vmatpush.bf16.msra.mxu0 %v1063
        %1232 = vmatpush.bf16.msra.mxu0 %v1062
        %1233 = vmatpush.bf16.msra.mxu0 %v1061
        %1234 = vmatpush.bf16.msra.mxu0 %v1060
        %1235 = vmatpush.bf16.msra.mxu0 %v1059
        %1236 = vmatpush.bf16.msra.mxu0 %v1058
        %1237 = vmatmul.bf16.gmra.mxu0 %v592
        %v1238 = vpop.f32.mrf.mxu0
        %v1239 = vadd.f32 %v860, %v1238
        %v1240 = vpop.f32.mrf.mxu0
        %v1241 = vadd.f32 %v860, %v1240
        %1242 = vmatmul.bf16.gmra.mxu0 %v599
        %v1243 = vpop.f32.mrf.mxu0
        %v1244 = vadd.f32 %v860, %v1243
        %v1245 = vpop.f32.mrf.mxu0
        %v1246 = vadd.f32 %v860, %v1245
        %1247 = vmatmul.bf16.gmra.mxu0 %v606
        %v1248 = vpop.f32.mrf.mxu0
        %v1249 = vadd.f32 %v860, %v1248
        %v1250 = vpop.f32.mrf.mxu0
        %v1251 = vadd.f32 %v860, %v1250
        %1252 = vmatmul.bf16.gmra.mxu0 %v613
        %v1253 = vpop.f32.mrf.mxu0
        %v1254 = vadd.f32 %v860, %v1253
        %v1255 = vpop.f32.mrf.mxu0
        %v1256 = vadd.f32 %v860, %v1255
        %1257 = vmatmul.bf16.gmra.mxu0 %v620
        %v1258 = vpop.f32.mrf.mxu0
        %v1259 = vadd.f32 %v860, %v1258
        %v1260 = vpop.f32.mrf.mxu0
        %v1261 = vadd.f32 %v860, %v1260
        %1262 = vmatmul.bf16.gmra.mxu0 %v627
        %v1263 = vpop.f32.mrf.mxu0
        %v1264 = vadd.f32 %v860, %v1263
        %v1265 = vpop.f32.mrf.mxu0
        %v1266 = vadd.f32 %v860, %v1265
        %1267 = vmatmul.bf16.gmra.mxu0 %v634
        %v1268 = vpop.f32.mrf.mxu0
        %v1269 = vadd.f32 %v860, %v1268
        %v1270 = vpop.f32.mrf.mxu0
        %v1271 = vadd.f32 %v860, %v1270
        %1272 = vmatmul.bf16.gmra.mxu0 %v641
        %v1273 = vpop.f32.mrf.mxu0
        %v1274 = vadd.f32 %v860, %v1273
        %v1275 = vpop.f32.mrf.mxu0
        %v1276 = vadd.f32 %v860, %v1275
        %1277 = vmatmul.bf16.gmra.mxu0 %v648
        %v1278 = vpop.f32.mrf.mxu0
        %v1279 = vadd.f32 %v860, %v1278
        %v1280 = vpop.f32.mrf.mxu0
        %v1281 = vadd.f32 %v860, %v1280
        %1282 = vmatmul.bf16.gmra.mxu0 %v655
        %v1283 = vpop.f32.mrf.mxu0
        %v1284 = vadd.f32 %v860, %v1283
        %v1285 = vpop.f32.mrf.mxu0
        %v1286 = vadd.f32 %v860, %v1285
        %1287 = vmatmul.bf16.gmra.mxu0 %v662
        %v1288 = vpop.f32.mrf.mxu0
        %v1289 = vadd.f32 %v860, %v1288
        %v1290 = vpop.f32.mrf.mxu0
        %v1291 = vadd.f32 %v860, %v1290
        %1292 = vmatmul.bf16.gmra.mxu0 %v669
        %v1293 = vpop.f32.mrf.mxu0
        %v1294 = vadd.f32 %v860, %v1293
        %v1295 = vpop.f32.mrf.mxu0
        %v1296 = vadd.f32 %v860, %v1295
        %1297 = vmatmul.bf16.gmra.mxu0 %v676
        %v1298 = vpop.f32.mrf.mxu0
        %v1299 = vadd.f32 %v860, %v1298
        %v1300 = vpop.f32.mrf.mxu0
        %v1301 = vadd.f32 %v860, %v1300
        %1302 = vmatmul.bf16.gmra.mxu0 %v683
        %v1303 = vpop.f32.mrf.mxu0
        %v1304 = vadd.f32 %v860, %v1303
        %v1305 = vpop.f32.mrf.mxu0
        %v1306 = vadd.f32 %v860, %v1305
        %1307 = vmatmul.bf16.gmra.mxu0 %v690
        %v1308 = vpop.f32.mrf.mxu0
        %v1309 = vadd.f32 %v860, %v1308
        %v1310 = vpop.f32.mrf.mxu0
        %v1311 = vadd.f32 %v860, %v1310
        %1312 = vmatmul.bf16.gmra.mxu0 %v697
        %v1313 = vpop.f32.mrf.mxu0
        %v1314 = vadd.f32 %v860, %v1313
        %v1315 = vpop.f32.mrf.mxu0
        %v1316 = vadd.f32 %v860, %v1315
        %1317 = vmatmul.bf16.gmra.mxu0 %v704
        %v1318 = vpop.f32.mrf.mxu0
        %v1319 = vadd.f32 %v860, %v1318
        %v1320 = vpop.f32.mrf.mxu0
        %v1321 = vadd.f32 %v860, %v1320
        %1322 = vmatmul.bf16.gmra.mxu0 %v711
        %v1323 = vpop.f32.mrf.mxu0
        %v1324 = vadd.f32 %v860, %v1323
        %v1325 = vpop.f32.mrf.mxu0
        %v1326 = vadd.f32 %v860, %v1325
        %1327 = vmatmul.bf16.gmra.mxu0 %v718
        %v1328 = vpop.f32.mrf.mxu0
        %v1329 = vadd.f32 %v860, %v1328
        %v1330 = vpop.f32.mrf.mxu0
        %v1331 = vadd.f32 %v860, %v1330
        %1332 = vmatmul.bf16.gmra.mxu0 %v725
        %v1333 = vpop.f32.mrf.mxu0
        %v1334 = vadd.f32 %v860, %v1333
        %v1335 = vpop.f32.mrf.mxu0
        %v1336 = vadd.f32 %v860, %v1335
        %1337 = vmatmul.bf16.gmra.mxu0 %v732
        %v1338 = vpop.f32.mrf.mxu0
        %v1339 = vadd.f32 %v860, %v1338
        %v1340 = vpop.f32.mrf.mxu0
        %v1341 = vadd.f32 %v860, %v1340
        %1342 = vmatmul.bf16.gmra.mxu0 %v739
        %v1343 = vpop.f32.mrf.mxu0
        %v1344 = vadd.f32 %v860, %v1343
        %v1345 = vpop.f32.mrf.mxu0
        %v1346 = vadd.f32 %v860, %v1345
        %1347 = vmatmul.bf16.gmra.mxu0 %v746
        %v1348 = vpop.f32.mrf.mxu0
        %v1349 = vadd.f32 %v860, %v1348
        %v1350 = vpop.f32.mrf.mxu0
        %v1351 = vadd.f32 %v860, %v1350
        %1352 = vmatmul.bf16.gmra.mxu0 %v753
        %v1353 = vpop.f32.mrf.mxu0
        %v1354 = vadd.f32 %v860, %v1353
        %v1355 = vpop.f32.mrf.mxu0
        %v1356 = vadd.f32 %v860, %v1355
        %1357 = vdwg.mxu0
        %1358 = vmatpush.bf16.msra.mxu0 %v1073
        %1359 = vmatpush.bf16.msra.mxu0 %v1072
        %1360 = vmatpush.bf16.msra.mxu0 %v1071
        %1361 = vmatpush.bf16.msra.mxu0 %v1070
        %1362 = vmatpush.bf16.msra.mxu0 %v1069
        %1363 = vmatpush.bf16.msra.mxu0 %v1068
        %1364 = vmatpush.bf16.msra.mxu0 %v1067
        %1365 = vmatpush.bf16.msra.mxu0 %v1066
        %1366 = vmatmul.bf16.gmra.mxu0 %v593
        %v1367 = vpop.f32.mrf.mxu0
        %v1368 = vadd.f32 %v1239, %v1367
        %v1369 = vpop.f32.mrf.mxu0
        %v1370 = vadd.f32 %v1241, %v1369
        %1371 = vmatmul.bf16.gmra.mxu0 %v600
        %v1372 = vpop.f32.mrf.mxu0
        %v1373 = vadd.f32 %v1244, %v1372
        %v1374 = vpop.f32.mrf.mxu0
        %v1375 = vadd.f32 %v1246, %v1374
        %1376 = vmatmul.bf16.gmra.mxu0 %v607
        %v1377 = vpop.f32.mrf.mxu0
        %v1378 = vadd.f32 %v1249, %v1377
        %v1379 = vpop.f32.mrf.mxu0
        %v1380 = vadd.f32 %v1251, %v1379
        %1381 = vmatmul.bf16.gmra.mxu0 %v614
        %v1382 = vpop.f32.mrf.mxu0
        %v1383 = vadd.f32 %v1254, %v1382
        %v1384 = vpop.f32.mrf.mxu0
        %v1385 = vadd.f32 %v1256, %v1384
        %1386 = vmatmul.bf16.gmra.mxu0 %v621
        %v1387 = vpop.f32.mrf.mxu0
        %v1388 = vadd.f32 %v1259, %v1387
        %v1389 = vpop.f32.mrf.mxu0
        %v1390 = vadd.f32 %v1261, %v1389
        %1391 = vmatmul.bf16.gmra.mxu0 %v628
        %v1392 = vpop.f32.mrf.mxu0
        %v1393 = vadd.f32 %v1264, %v1392
        %v1394 = vpop.f32.mrf.mxu0
        %v1395 = vadd.f32 %v1266, %v1394
        %1396 = vmatmul.bf16.gmra.mxu0 %v635
        %v1397 = vpop.f32.mrf.mxu0
        %v1398 = vadd.f32 %v1269, %v1397
        %v1399 = vpop.f32.mrf.mxu0
        %v1400 = vadd.f32 %v1271, %v1399
        %1401 = vmatmul.bf16.gmra.mxu0 %v642
        %v1402 = vpop.f32.mrf.mxu0
        %v1403 = vadd.f32 %v1274, %v1402
        %v1404 = vpop.f32.mrf.mxu0
        %v1405 = vadd.f32 %v1276, %v1404
        %1406 = vmatmul.bf16.gmra.mxu0 %v649
        %v1407 = vpop.f32.mrf.mxu0
        %v1408 = vadd.f32 %v1279, %v1407
        %v1409 = vpop.f32.mrf.mxu0
        %v1410 = vadd.f32 %v1281, %v1409
        %1411 = vmatmul.bf16.gmra.mxu0 %v656
        %v1412 = vpop.f32.mrf.mxu0
        %v1413 = vadd.f32 %v1284, %v1412
        %v1414 = vpop.f32.mrf.mxu0
        %v1415 = vadd.f32 %v1286, %v1414
        %1416 = vmatmul.bf16.gmra.mxu0 %v663
        %v1417 = vpop.f32.mrf.mxu0
        %v1418 = vadd.f32 %v1289, %v1417
        %v1419 = vpop.f32.mrf.mxu0
        %v1420 = vadd.f32 %v1291, %v1419
        %1421 = vmatmul.bf16.gmra.mxu0 %v670
        %v1422 = vpop.f32.mrf.mxu0
        %v1423 = vadd.f32 %v1294, %v1422
        %v1424 = vpop.f32.mrf.mxu0
        %v1425 = vadd.f32 %v1296, %v1424
        %1426 = vmatmul.bf16.gmra.mxu0 %v677
        %v1427 = vpop.f32.mrf.mxu0
        %v1428 = vadd.f32 %v1299, %v1427
        %v1429 = vpop.f32.mrf.mxu0
        %v1430 = vadd.f32 %v1301, %v1429
        %1431 = vmatmul.bf16.gmra.mxu0 %v684
        %v1432 = vpop.f32.mrf.mxu0
        %v1433 = vadd.f32 %v1304, %v1432
        %v1434 = vpop.f32.mrf.mxu0
        %v1435 = vadd.f32 %v1306, %v1434
        %1436 = vmatmul.bf16.gmra.mxu0 %v691
        %v1437 = vpop.f32.mrf.mxu0
        %v1438 = vadd.f32 %v1309, %v1437
        %v1439 = vpop.f32.mrf.mxu0
        %v1440 = vadd.f32 %v1311, %v1439
        %1441 = vmatmul.bf16.gmra.mxu0 %v698
        %v1442 = vpop.f32.mrf.mxu0
        %v1443 = vadd.f32 %v1314, %v1442
        %v1444 = vpop.f32.mrf.mxu0
        %v1445 = vadd.f32 %v1316, %v1444
        %1446 = vmatmul.bf16.gmra.mxu0 %v705
        %v1447 = vpop.f32.mrf.mxu0
        %v1448 = vadd.f32 %v1319, %v1447
        %v1449 = vpop.f32.mrf.mxu0
        %v1450 = vadd.f32 %v1321, %v1449
        %1451 = vmatmul.bf16.gmra.mxu0 %v712
        %v1452 = vpop.f32.mrf.mxu0
        %v1453 = vadd.f32 %v1324, %v1452
        %v1454 = vpop.f32.mrf.mxu0
        %v1455 = vadd.f32 %v1326, %v1454
        %1456 = vmatmul.bf16.gmra.mxu0 %v719
        %v1457 = vpop.f32.mrf.mxu0
        %v1458 = vadd.f32 %v1329, %v1457
        %v1459 = vpop.f32.mrf.mxu0
        %v1460 = vadd.f32 %v1331, %v1459
        %1461 = vmatmul.bf16.gmra.mxu0 %v726
        %v1462 = vpop.f32.mrf.mxu0
        %v1463 = vadd.f32 %v1334, %v1462
        %v1464 = vpop.f32.mrf.mxu0
        %v1465 = vadd.f32 %v1336, %v1464
        %1466 = vmatmul.bf16.gmra.mxu0 %v733
        %v1467 = vpop.f32.mrf.mxu0
        %v1468 = vadd.f32 %v1339, %v1467
        %v1469 = vpop.f32.mrf.mxu0
        %v1470 = vadd.f32 %v1341, %v1469
        %1471 = vmatmul.bf16.gmra.mxu0 %v740
        %v1472 = vpop.f32.mrf.mxu0
        %v1473 = vadd.f32 %v1344, %v1472
        %v1474 = vpop.f32.mrf.mxu0
        %v1475 = vadd.f32 %v1346, %v1474
        %1476 = vmatmul.bf16.gmra.mxu0 %v747
        %v1477 = vpop.f32.mrf.mxu0
        %v1478 = vadd.f32 %v1349, %v1477
        %v1479 = vpop.f32.mrf.mxu0
        %v1480 = vadd.f32 %v1351, %v1479
        %1481 = vmatmul.bf16.gmra.mxu0 %v754
        %v1482 = vpop.f32.mrf.mxu0
        %v1483 = vadd.f32 %v1354, %v1482
        %v1484 = vpop.f32.mrf.mxu0
        %v1485 = vadd.f32 %v1356, %v1484
        %1486 = vdwg.mxu0
        %1487 = vmatpush.bf16.msra.mxu0 %v1081
        %1488 = vmatpush.bf16.msra.mxu0 %v1080
        %1489 = vmatpush.bf16.msra.mxu0 %v1079
        %1490 = vmatpush.bf16.msra.mxu0 %v1078
        %1491 = vmatpush.bf16.msra.mxu0 %v1077
        %1492 = vmatpush.bf16.msra.mxu0 %v1076
        %1493 = vmatpush.bf16.msra.mxu0 %v1075
        %1494 = vmatpush.bf16.msra.mxu0 %v1074
        %1495 = vmatmul.bf16.gmra.mxu0 %v594
        %v1496 = vpop.f32.mrf.mxu0
        %v1497 = vadd.f32 %v1368, %v1496
        %v1498 = vpop.f32.mrf.mxu0
        %v1499 = vadd.f32 %v1370, %v1498
        %1500 = vmatmul.bf16.gmra.mxu0 %v601
        %v1501 = vpop.f32.mrf.mxu0
        %v1502 = vadd.f32 %v1373, %v1501
        %v1503 = vpop.f32.mrf.mxu0
        %v1504 = vadd.f32 %v1375, %v1503
        %1505 = vmatmul.bf16.gmra.mxu0 %v608
        %v1506 = vpop.f32.mrf.mxu0
        %v1507 = vadd.f32 %v1378, %v1506
        %v1508 = vpop.f32.mrf.mxu0
        %v1509 = vadd.f32 %v1380, %v1508
        %1510 = vmatmul.bf16.gmra.mxu0 %v615
        %v1511 = vpop.f32.mrf.mxu0
        %v1512 = vadd.f32 %v1383, %v1511
        %v1513 = vpop.f32.mrf.mxu0
        %v1514 = vadd.f32 %v1385, %v1513
        %1515 = vmatmul.bf16.gmra.mxu0 %v622
        %v1516 = vpop.f32.mrf.mxu0
        %v1517 = vadd.f32 %v1388, %v1516
        %v1518 = vpop.f32.mrf.mxu0
        %v1519 = vadd.f32 %v1390, %v1518
        %1520 = vmatmul.bf16.gmra.mxu0 %v629
        %v1521 = vpop.f32.mrf.mxu0
        %v1522 = vadd.f32 %v1393, %v1521
        %v1523 = vpop.f32.mrf.mxu0
        %v1524 = vadd.f32 %v1395, %v1523
        %1525 = vmatmul.bf16.gmra.mxu0 %v636
        %v1526 = vpop.f32.mrf.mxu0
        %v1527 = vadd.f32 %v1398, %v1526
        %v1528 = vpop.f32.mrf.mxu0
        %v1529 = vadd.f32 %v1400, %v1528
        %1530 = vmatmul.bf16.gmra.mxu0 %v643
        %v1531 = vpop.f32.mrf.mxu0
        %v1532 = vadd.f32 %v1403, %v1531
        %v1533 = vpop.f32.mrf.mxu0
        %v1534 = vadd.f32 %v1405, %v1533
        %1535 = vmatmul.bf16.gmra.mxu0 %v650
        %v1536 = vpop.f32.mrf.mxu0
        %v1537 = vadd.f32 %v1408, %v1536
        %v1538 = vpop.f32.mrf.mxu0
        %v1539 = vadd.f32 %v1410, %v1538
        %1540 = vmatmul.bf16.gmra.mxu0 %v657
        %v1541 = vpop.f32.mrf.mxu0
        %v1542 = vadd.f32 %v1413, %v1541
        %v1543 = vpop.f32.mrf.mxu0
        %v1544 = vadd.f32 %v1415, %v1543
        %1545 = vmatmul.bf16.gmra.mxu0 %v664
        %v1546 = vpop.f32.mrf.mxu0
        %v1547 = vadd.f32 %v1418, %v1546
        %v1548 = vpop.f32.mrf.mxu0
        %v1549 = vadd.f32 %v1420, %v1548
        %1550 = vmatmul.bf16.gmra.mxu0 %v671
        %v1551 = vpop.f32.mrf.mxu0
        %v1552 = vadd.f32 %v1423, %v1551
        %v1553 = vpop.f32.mrf.mxu0
        %v1554 = vadd.f32 %v1425, %v1553
        %1555 = vmatmul.bf16.gmra.mxu0 %v678
        %v1556 = vpop.f32.mrf.mxu0
        %v1557 = vadd.f32 %v1428, %v1556
        %v1558 = vpop.f32.mrf.mxu0
        %v1559 = vadd.f32 %v1430, %v1558
        %1560 = vmatmul.bf16.gmra.mxu0 %v685
        %v1561 = vpop.f32.mrf.mxu0
        %v1562 = vadd.f32 %v1433, %v1561
        %v1563 = vpop.f32.mrf.mxu0
        %v1564 = vadd.f32 %v1435, %v1563
        %1565 = vmatmul.bf16.gmra.mxu0 %v692
        %v1566 = vpop.f32.mrf.mxu0
        %v1567 = vadd.f32 %v1438, %v1566
        %v1568 = vpop.f32.mrf.mxu0
        %v1569 = vadd.f32 %v1440, %v1568
        %1570 = vmatmul.bf16.gmra.mxu0 %v699
        %v1571 = vpop.f32.mrf.mxu0
        %v1572 = vadd.f32 %v1443, %v1571
        %v1573 = vpop.f32.mrf.mxu0
        %v1574 = vadd.f32 %v1445, %v1573
        %1575 = vmatmul.bf16.gmra.mxu0 %v706
        %v1576 = vpop.f32.mrf.mxu0
        %v1577 = vadd.f32 %v1448, %v1576
        %v1578 = vpop.f32.mrf.mxu0
        %v1579 = vadd.f32 %v1450, %v1578
        %1580 = vmatmul.bf16.gmra.mxu0 %v713
        %v1581 = vpop.f32.mrf.mxu0
        %v1582 = vadd.f32 %v1453, %v1581
        %v1583 = vpop.f32.mrf.mxu0
        %v1584 = vadd.f32 %v1455, %v1583
        %1585 = vmatmul.bf16.gmra.mxu0 %v720
        %v1586 = vpop.f32.mrf.mxu0
        %v1587 = vadd.f32 %v1458, %v1586
        %v1588 = vpop.f32.mrf.mxu0
        %v1589 = vadd.f32 %v1460, %v1588
        %1590 = vmatmul.bf16.gmra.mxu0 %v727
        %v1591 = vpop.f32.mrf.mxu0
        %v1592 = vadd.f32 %v1463, %v1591
        %v1593 = vpop.f32.mrf.mxu0
        %v1594 = vadd.f32 %v1465, %v1593
        %1595 = vmatmul.bf16.gmra.mxu0 %v734
        %v1596 = vpop.f32.mrf.mxu0
        %v1597 = vadd.f32 %v1468, %v1596
        %v1598 = vpop.f32.mrf.mxu0
        %v1599 = vadd.f32 %v1470, %v1598
        %1600 = vmatmul.bf16.gmra.mxu0 %v741
        %v1601 = vpop.f32.mrf.mxu0
        %v1602 = vadd.f32 %v1473, %v1601
        %v1603 = vpop.f32.mrf.mxu0
        %v1604 = vadd.f32 %v1475, %v1603
        %1605 = vmatmul.bf16.gmra.mxu0 %v748
        %v1606 = vpop.f32.mrf.mxu0
        %v1607 = vadd.f32 %v1478, %v1606
        %v1608 = vpop.f32.mrf.mxu0
        %v1609 = vadd.f32 %v1480, %v1608
        %1610 = vmatmul.bf16.gmra.mxu0 %v755
        %v1611 = vpop.f32.mrf.mxu0
        %v1612 = vadd.f32 %v1483, %v1611
        %v1613 = vpop.f32.mrf.mxu0
        %v1614 = vadd.f32 %v1485, %v1613
        %1615 = vdwg.mxu0
        %1616 = vmatpush.bf16.msra.mxu0 %v1089
        %1617 = vmatpush.bf16.msra.mxu0 %v1088
        %1618 = vmatpush.bf16.msra.mxu0 %v1087
        %1619 = vmatpush.bf16.msra.mxu0 %v1086
        %1620 = vmatpush.bf16.msra.mxu0 %v1085
        %1621 = vmatpush.bf16.msra.mxu0 %v1084
        %1622 = vmatpush.bf16.msra.mxu0 %v1083
        %1623 = vmatpush.bf16.msra.mxu0 %v1082
        %1624 = vmatmul.bf16.gmra.mxu0 %v595
        %v1625 = vpop.f32.mrf.mxu0
        %v1626 = vadd.f32 %v1497, %v1625
        %v1627 = vpop.f32.mrf.mxu0
        %v1628 = vadd.f32 %v1499, %v1627
        %1629 = vmatmul.bf16.gmra.mxu0 %v602
        %v1630 = vpop.f32.mrf.mxu0
        %v1631 = vadd.f32 %v1502, %v1630
        %v1632 = vpop.f32.mrf.mxu0
        %v1633 = vadd.f32 %v1504, %v1632
        %1634 = vmatmul.bf16.gmra.mxu0 %v609
        %v1635 = vpop.f32.mrf.mxu0
        %v1636 = vadd.f32 %v1507, %v1635
        %v1637 = vpop.f32.mrf.mxu0
        %v1638 = vadd.f32 %v1509, %v1637
        %1639 = vmatmul.bf16.gmra.mxu0 %v616
        %v1640 = vpop.f32.mrf.mxu0
        %v1641 = vadd.f32 %v1512, %v1640
        %v1642 = vpop.f32.mrf.mxu0
        %v1643 = vadd.f32 %v1514, %v1642
        %1644 = vmatmul.bf16.gmra.mxu0 %v623
        %v1645 = vpop.f32.mrf.mxu0
        %v1646 = vadd.f32 %v1517, %v1645
        %v1647 = vpop.f32.mrf.mxu0
        %v1648 = vadd.f32 %v1519, %v1647
        %1649 = vmatmul.bf16.gmra.mxu0 %v630
        %v1650 = vpop.f32.mrf.mxu0
        %v1651 = vadd.f32 %v1522, %v1650
        %v1652 = vpop.f32.mrf.mxu0
        %v1653 = vadd.f32 %v1524, %v1652
        %1654 = vmatmul.bf16.gmra.mxu0 %v637
        %v1655 = vpop.f32.mrf.mxu0
        %v1656 = vadd.f32 %v1527, %v1655
        %v1657 = vpop.f32.mrf.mxu0
        %v1658 = vadd.f32 %v1529, %v1657
        %1659 = vmatmul.bf16.gmra.mxu0 %v644
        %v1660 = vpop.f32.mrf.mxu0
        %v1661 = vadd.f32 %v1532, %v1660
        %v1662 = vpop.f32.mrf.mxu0
        %v1663 = vadd.f32 %v1534, %v1662
        %1664 = vmatmul.bf16.gmra.mxu0 %v651
        %v1665 = vpop.f32.mrf.mxu0
        %v1666 = vadd.f32 %v1537, %v1665
        %v1667 = vpop.f32.mrf.mxu0
        %v1668 = vadd.f32 %v1539, %v1667
        %1669 = vmatmul.bf16.gmra.mxu0 %v658
        %v1670 = vpop.f32.mrf.mxu0
        %v1671 = vadd.f32 %v1542, %v1670
        %v1672 = vpop.f32.mrf.mxu0
        %v1673 = vadd.f32 %v1544, %v1672
        %1674 = vmatmul.bf16.gmra.mxu0 %v665
        %v1675 = vpop.f32.mrf.mxu0
        %v1676 = vadd.f32 %v1547, %v1675
        %v1677 = vpop.f32.mrf.mxu0
        %v1678 = vadd.f32 %v1549, %v1677
        %1679 = vmatmul.bf16.gmra.mxu0 %v672
        %v1680 = vpop.f32.mrf.mxu0
        %v1681 = vadd.f32 %v1552, %v1680
        %v1682 = vpop.f32.mrf.mxu0
        %v1683 = vadd.f32 %v1554, %v1682
        %1684 = vmatmul.bf16.gmra.mxu0 %v679
        %v1685 = vpop.f32.mrf.mxu0
        %v1686 = vadd.f32 %v1557, %v1685
        %v1687 = vpop.f32.mrf.mxu0
        %v1688 = vadd.f32 %v1559, %v1687
        %1689 = vmatmul.bf16.gmra.mxu0 %v686
        %v1690 = vpop.f32.mrf.mxu0
        %v1691 = vadd.f32 %v1562, %v1690
        %v1692 = vpop.f32.mrf.mxu0
        %v1693 = vadd.f32 %v1564, %v1692
        %1694 = vmatmul.bf16.gmra.mxu0 %v693
        %v1695 = vpop.f32.mrf.mxu0
        %v1696 = vadd.f32 %v1567, %v1695
        %v1697 = vpop.f32.mrf.mxu0
        %v1698 = vadd.f32 %v1569, %v1697
        %1699 = vmatmul.bf16.gmra.mxu0 %v700
        %v1700 = vpop.f32.mrf.mxu0
        %v1701 = vadd.f32 %v1572, %v1700
        %v1702 = vpop.f32.mrf.mxu0
        %v1703 = vadd.f32 %v1574, %v1702
        %1704 = vmatmul.bf16.gmra.mxu0 %v707
        %v1705 = vpop.f32.mrf.mxu0
        %v1706 = vadd.f32 %v1577, %v1705
        %v1707 = vpop.f32.mrf.mxu0
        %v1708 = vadd.f32 %v1579, %v1707
        %1709 = vmatmul.bf16.gmra.mxu0 %v714
        %v1710 = vpop.f32.mrf.mxu0
        %v1711 = vadd.f32 %v1582, %v1710
        %v1712 = vpop.f32.mrf.mxu0
        %v1713 = vadd.f32 %v1584, %v1712
        %1714 = vmatmul.bf16.gmra.mxu0 %v721
        %v1715 = vpop.f32.mrf.mxu0
        %v1716 = vadd.f32 %v1587, %v1715
        %v1717 = vpop.f32.mrf.mxu0
        %v1718 = vadd.f32 %v1589, %v1717
        %1719 = vmatmul.bf16.gmra.mxu0 %v728
        %v1720 = vpop.f32.mrf.mxu0
        %v1721 = vadd.f32 %v1592, %v1720
        %v1722 = vpop.f32.mrf.mxu0
        %v1723 = vadd.f32 %v1594, %v1722
        %1724 = vmatmul.bf16.gmra.mxu0 %v735
        %v1725 = vpop.f32.mrf.mxu0
        %v1726 = vadd.f32 %v1597, %v1725
        %v1727 = vpop.f32.mrf.mxu0
        %v1728 = vadd.f32 %v1599, %v1727
        %1729 = vmatmul.bf16.gmra.mxu0 %v742
        %v1730 = vpop.f32.mrf.mxu0
        %v1731 = vadd.f32 %v1602, %v1730
        %v1732 = vpop.f32.mrf.mxu0
        %v1733 = vadd.f32 %v1604, %v1732
        %1734 = vmatmul.bf16.gmra.mxu0 %v749
        %v1735 = vpop.f32.mrf.mxu0
        %v1736 = vadd.f32 %v1607, %v1735
        %v1737 = vpop.f32.mrf.mxu0
        %v1738 = vadd.f32 %v1609, %v1737
        %1739 = vmatmul.bf16.gmra.mxu0 %v756
        %v1740 = vpop.f32.mrf.mxu0
        %v1741 = vadd.f32 %v1612, %v1740
        %v1742 = vpop.f32.mrf.mxu0
        %v1743 = vadd.f32 %v1614, %v1742
        %1744 = vdwg.mxu0
        %1745 = vmatpush.bf16.msra.mxu0 %v1097
        %1746 = vmatpush.bf16.msra.mxu0 %v1096
        %1747 = vmatpush.bf16.msra.mxu0 %v1095
        %1748 = vmatpush.bf16.msra.mxu0 %v1094
        %1749 = vmatpush.bf16.msra.mxu0 %v1093
        %1750 = vmatpush.bf16.msra.mxu0 %v1092
        %1751 = vmatpush.bf16.msra.mxu0 %v1091
        %1752 = vmatpush.bf16.msra.mxu0 %v1090
        %1753 = vmatmul.bf16.gmra.mxu0 %v596
        %v1754 = vpop.f32.mrf.mxu0
        %v1755 = vadd.f32 %v1626, %v1754
        %v1756 = vpop.f32.mrf.mxu0
        %v1757 = vadd.f32 %v1628, %v1756
        %1758 = vmatmul.bf16.gmra.mxu0 %v603
        %v1759 = vpop.f32.mrf.mxu0
        %v1760 = vadd.f32 %v1631, %v1759
        %v1761 = vpop.f32.mrf.mxu0
        %v1762 = vadd.f32 %v1633, %v1761
        %1763 = vmatmul.bf16.gmra.mxu0 %v610
        %v1764 = vpop.f32.mrf.mxu0
        %v1765 = vadd.f32 %v1636, %v1764
        %v1766 = vpop.f32.mrf.mxu0
        %v1767 = vadd.f32 %v1638, %v1766
        %1768 = vmatmul.bf16.gmra.mxu0 %v617
        %v1769 = vpop.f32.mrf.mxu0
        %v1770 = vadd.f32 %v1641, %v1769
        %v1771 = vpop.f32.mrf.mxu0
        %v1772 = vadd.f32 %v1643, %v1771
        %1773 = vmatmul.bf16.gmra.mxu0 %v624
        %v1774 = vpop.f32.mrf.mxu0
        %v1775 = vadd.f32 %v1646, %v1774
        %v1776 = vpop.f32.mrf.mxu0
        %v1777 = vadd.f32 %v1648, %v1776
        %1778 = vmatmul.bf16.gmra.mxu0 %v631
        %v1779 = vpop.f32.mrf.mxu0
        %v1780 = vadd.f32 %v1651, %v1779
        %v1781 = vpop.f32.mrf.mxu0
        %v1782 = vadd.f32 %v1653, %v1781
        %1783 = vmatmul.bf16.gmra.mxu0 %v638
        %v1784 = vpop.f32.mrf.mxu0
        %v1785 = vadd.f32 %v1656, %v1784
        %v1786 = vpop.f32.mrf.mxu0
        %v1787 = vadd.f32 %v1658, %v1786
        %1788 = vmatmul.bf16.gmra.mxu0 %v645
        %v1789 = vpop.f32.mrf.mxu0
        %v1790 = vadd.f32 %v1661, %v1789
        %v1791 = vpop.f32.mrf.mxu0
        %v1792 = vadd.f32 %v1663, %v1791
        %1793 = vmatmul.bf16.gmra.mxu0 %v652
        %v1794 = vpop.f32.mrf.mxu0
        %v1795 = vadd.f32 %v1666, %v1794
        %v1796 = vpop.f32.mrf.mxu0
        %v1797 = vadd.f32 %v1668, %v1796
        %1798 = vmatmul.bf16.gmra.mxu0 %v659
        %v1799 = vpop.f32.mrf.mxu0
        %v1800 = vadd.f32 %v1671, %v1799
        %v1801 = vpop.f32.mrf.mxu0
        %v1802 = vadd.f32 %v1673, %v1801
        %1803 = vmatmul.bf16.gmra.mxu0 %v666
        %v1804 = vpop.f32.mrf.mxu0
        %v1805 = vadd.f32 %v1676, %v1804
        %v1806 = vpop.f32.mrf.mxu0
        %v1807 = vadd.f32 %v1678, %v1806
        %1808 = vmatmul.bf16.gmra.mxu0 %v673
        %v1809 = vpop.f32.mrf.mxu0
        %v1810 = vadd.f32 %v1681, %v1809
        %v1811 = vpop.f32.mrf.mxu0
        %v1812 = vadd.f32 %v1683, %v1811
        %1813 = vmatmul.bf16.gmra.mxu0 %v680
        %v1814 = vpop.f32.mrf.mxu0
        %v1815 = vadd.f32 %v1686, %v1814
        %v1816 = vpop.f32.mrf.mxu0
        %v1817 = vadd.f32 %v1688, %v1816
        %1818 = vmatmul.bf16.gmra.mxu0 %v687
        %v1819 = vpop.f32.mrf.mxu0
        %v1820 = vadd.f32 %v1691, %v1819
        %v1821 = vpop.f32.mrf.mxu0
        %v1822 = vadd.f32 %v1693, %v1821
        %1823 = vmatmul.bf16.gmra.mxu0 %v694
        %v1824 = vpop.f32.mrf.mxu0
        %v1825 = vadd.f32 %v1696, %v1824
        %v1826 = vpop.f32.mrf.mxu0
        %v1827 = vadd.f32 %v1698, %v1826
        %1828 = vmatmul.bf16.gmra.mxu0 %v701
        %v1829 = vpop.f32.mrf.mxu0
        %v1830 = vadd.f32 %v1701, %v1829
        %v1831 = vpop.f32.mrf.mxu0
        %v1832 = vadd.f32 %v1703, %v1831
        %1833 = vmatmul.bf16.gmra.mxu0 %v708
        %v1834 = vpop.f32.mrf.mxu0
        %v1835 = vadd.f32 %v1706, %v1834
        %v1836 = vpop.f32.mrf.mxu0
        %v1837 = vadd.f32 %v1708, %v1836
        %1838 = vmatmul.bf16.gmra.mxu0 %v715
        %v1839 = vpop.f32.mrf.mxu0
        %v1840 = vadd.f32 %v1711, %v1839
        %v1841 = vpop.f32.mrf.mxu0
        %v1842 = vadd.f32 %v1713, %v1841
        %1843 = vmatmul.bf16.gmra.mxu0 %v722
        %v1844 = vpop.f32.mrf.mxu0
        %v1845 = vadd.f32 %v1716, %v1844
        %v1846 = vpop.f32.mrf.mxu0
        %v1847 = vadd.f32 %v1718, %v1846
        %1848 = vmatmul.bf16.gmra.mxu0 %v729
        %v1849 = vpop.f32.mrf.mxu0
        %v1850 = vadd.f32 %v1721, %v1849
        %v1851 = vpop.f32.mrf.mxu0
        %v1852 = vadd.f32 %v1723, %v1851
        %1853 = vmatmul.bf16.gmra.mxu0 %v736
        %v1854 = vpop.f32.mrf.mxu0
        %v1855 = vadd.f32 %v1726, %v1854
        %v1856 = vpop.f32.mrf.mxu0
        %v1857 = vadd.f32 %v1728, %v1856
        %1858 = vmatmul.bf16.gmra.mxu0 %v743
        %v1859 = vpop.f32.mrf.mxu0
        %v1860 = vadd.f32 %v1731, %v1859
        %v1861 = vpop.f32.mrf.mxu0
        %v1862 = vadd.f32 %v1733, %v1861
        %1863 = vmatmul.bf16.gmra.mxu0 %v750
        %v1864 = vpop.f32.mrf.mxu0
        %v1865 = vadd.f32 %v1736, %v1864
        %v1866 = vpop.f32.mrf.mxu0
        %v1867 = vadd.f32 %v1738, %v1866
        %1868 = vmatmul.bf16.gmra.mxu0 %v757
        %v1869 = vpop.f32.mrf.mxu0
        %v1870 = vadd.f32 %v1741, %v1869
        %v1871 = vpop.f32.mrf.mxu0
        %v1872 = vadd.f32 %v1743, %v1871
        %1873 = vdwg.mxu0
        %1874 = vmatpush.bf16.msra.mxu0 %v1105
        %1875 = vmatpush.bf16.msra.mxu0 %v1104
        %1876 = vmatpush.bf16.msra.mxu0 %v1103
        %1877 = vmatpush.bf16.msra.mxu0 %v1102
        %1878 = vmatpush.bf16.msra.mxu0 %v1101
        %1879 = vmatpush.bf16.msra.mxu0 %v1100
        %1880 = vmatpush.bf16.msra.mxu0 %v1099
        %1881 = vmatpush.bf16.msra.mxu0 %v1098
        %1882 = vmatmul.bf16.gmra.mxu0 %v597
        %v1883 = vpop.f32.mrf.mxu0
        %v1884 = vadd.f32 %v1755, %v1883
        %v1885 = vpop.f32.mrf.mxu0
        %v1886 = vadd.f32 %v1757, %v1885
        %1887 = vmatmul.bf16.gmra.mxu0 %v604
        %v1888 = vpop.f32.mrf.mxu0
        %v1889 = vadd.f32 %v1760, %v1888
        %v1890 = vpop.f32.mrf.mxu0
        %v1891 = vadd.f32 %v1762, %v1890
        %1892 = vmatmul.bf16.gmra.mxu0 %v611
        %v1893 = vpop.f32.mrf.mxu0
        %v1894 = vadd.f32 %v1765, %v1893
        %v1895 = vpop.f32.mrf.mxu0
        %v1896 = vadd.f32 %v1767, %v1895
        %1897 = vmatmul.bf16.gmra.mxu0 %v618
        %v1898 = vpop.f32.mrf.mxu0
        %v1899 = vadd.f32 %v1770, %v1898
        %v1900 = vpop.f32.mrf.mxu0
        %v1901 = vadd.f32 %v1772, %v1900
        %1902 = vmatmul.bf16.gmra.mxu0 %v625
        %v1903 = vpop.f32.mrf.mxu0
        %v1904 = vadd.f32 %v1775, %v1903
        %v1905 = vpop.f32.mrf.mxu0
        %v1906 = vadd.f32 %v1777, %v1905
        %1907 = vmatmul.bf16.gmra.mxu0 %v632
        %v1908 = vpop.f32.mrf.mxu0
        %v1909 = vadd.f32 %v1780, %v1908
        %v1910 = vpop.f32.mrf.mxu0
        %v1911 = vadd.f32 %v1782, %v1910
        %1912 = vmatmul.bf16.gmra.mxu0 %v639
        %v1913 = vpop.f32.mrf.mxu0
        %v1914 = vadd.f32 %v1785, %v1913
        %v1915 = vpop.f32.mrf.mxu0
        %v1916 = vadd.f32 %v1787, %v1915
        %1917 = vmatmul.bf16.gmra.mxu0 %v646
        %v1918 = vpop.f32.mrf.mxu0
        %v1919 = vadd.f32 %v1790, %v1918
        %v1920 = vpop.f32.mrf.mxu0
        %v1921 = vadd.f32 %v1792, %v1920
        %1922 = vmatmul.bf16.gmra.mxu0 %v653
        %v1923 = vpop.f32.mrf.mxu0
        %v1924 = vadd.f32 %v1795, %v1923
        %v1925 = vpop.f32.mrf.mxu0
        %v1926 = vadd.f32 %v1797, %v1925
        %1927 = vmatmul.bf16.gmra.mxu0 %v660
        %v1928 = vpop.f32.mrf.mxu0
        %v1929 = vadd.f32 %v1800, %v1928
        %v1930 = vpop.f32.mrf.mxu0
        %v1931 = vadd.f32 %v1802, %v1930
        %1932 = vmatmul.bf16.gmra.mxu0 %v667
        %v1933 = vpop.f32.mrf.mxu0
        %v1934 = vadd.f32 %v1805, %v1933
        %v1935 = vpop.f32.mrf.mxu0
        %v1936 = vadd.f32 %v1807, %v1935
        %1937 = vmatmul.bf16.gmra.mxu0 %v674
        %v1938 = vpop.f32.mrf.mxu0
        %v1939 = vadd.f32 %v1810, %v1938
        %v1940 = vpop.f32.mrf.mxu0
        %v1941 = vadd.f32 %v1812, %v1940
        %1942 = vmatmul.bf16.gmra.mxu0 %v681
        %v1943 = vpop.f32.mrf.mxu0
        %v1944 = vadd.f32 %v1815, %v1943
        %v1945 = vpop.f32.mrf.mxu0
        %v1946 = vadd.f32 %v1817, %v1945
        %1947 = vmatmul.bf16.gmra.mxu0 %v688
        %v1948 = vpop.f32.mrf.mxu0
        %v1949 = vadd.f32 %v1820, %v1948
        %v1950 = vpop.f32.mrf.mxu0
        %v1951 = vadd.f32 %v1822, %v1950
        %1952 = vmatmul.bf16.gmra.mxu0 %v695
        %v1953 = vpop.f32.mrf.mxu0
        %v1954 = vadd.f32 %v1825, %v1953
        %v1955 = vpop.f32.mrf.mxu0
        %v1956 = vadd.f32 %v1827, %v1955
        %1957 = vmatmul.bf16.gmra.mxu0 %v702
        %v1958 = vpop.f32.mrf.mxu0
        %v1959 = vadd.f32 %v1830, %v1958
        %v1960 = vpop.f32.mrf.mxu0
        %v1961 = vadd.f32 %v1832, %v1960
        %1962 = vmatmul.bf16.gmra.mxu0 %v709
        %v1963 = vpop.f32.mrf.mxu0
        %v1964 = vadd.f32 %v1835, %v1963
        %v1965 = vpop.f32.mrf.mxu0
        %v1966 = vadd.f32 %v1837, %v1965
        %1967 = vmatmul.bf16.gmra.mxu0 %v716
        %v1968 = vpop.f32.mrf.mxu0
        %v1969 = vadd.f32 %v1840, %v1968
        %v1970 = vpop.f32.mrf.mxu0
        %v1971 = vadd.f32 %v1842, %v1970
        %1972 = vmatmul.bf16.gmra.mxu0 %v723
        %v1973 = vpop.f32.mrf.mxu0
        %v1974 = vadd.f32 %v1845, %v1973
        %v1975 = vpop.f32.mrf.mxu0
        %v1976 = vadd.f32 %v1847, %v1975
        %1977 = vmatmul.bf16.gmra.mxu0 %v730
        %v1978 = vpop.f32.mrf.mxu0
        %v1979 = vadd.f32 %v1850, %v1978
        %v1980 = vpop.f32.mrf.mxu0
        %v1981 = vadd.f32 %v1852, %v1980
        %1982 = vmatmul.bf16.gmra.mxu0 %v737
        %v1983 = vpop.f32.mrf.mxu0
        %v1984 = vadd.f32 %v1855, %v1983
        %v1985 = vpop.f32.mrf.mxu0
        %v1986 = vadd.f32 %v1857, %v1985
        %1987 = vmatmul.bf16.gmra.mxu0 %v744
        %v1988 = vpop.f32.mrf.mxu0
        %v1989 = vadd.f32 %v1860, %v1988
        %v1990 = vpop.f32.mrf.mxu0
        %v1991 = vadd.f32 %v1862, %v1990
        %1992 = vmatmul.bf16.gmra.mxu0 %v751
        %v1993 = vpop.f32.mrf.mxu0
        %v1994 = vadd.f32 %v1865, %v1993
        %v1995 = vpop.f32.mrf.mxu0
        %v1996 = vadd.f32 %v1867, %v1995
        %1997 = vmatmul.bf16.gmra.mxu0 %v758
        %v1998 = vpop.f32.mrf.mxu0
        %v1999 = vadd.f32 %v1870, %v1998
        %v2000 = vpop.f32.mrf.mxu0
        %v2001 = vadd.f32 %v1872, %v2000
        %2002 = vdwg.mxu0
        %2003 = vmatpush.bf16.msra.mxu0 0
        %2004 = vmatpush.bf16.msra.mxu0 0
        %2005 = vmatpush.bf16.msra.mxu0 0
        %2006 = vmatpush.bf16.msra.mxu0 0
        %2007 = vmatpush.bf16.msra.mxu0 0
        %2008 = vmatpush.bf16.msra.mxu0 0
        %2009 = vmatpush.bf16.msra.mxu0 0
        %2010 = vmatpush.bf16.msra.mxu0 %v1106
        %2011 = vmatmul.bf16.gmra.mxu0 %v1158
        %v2012 = vpop.f32.mrf.mxu0
        %v2013 = vadd.f32 %v1884, %v2012
        %v2014 = vpop.f32.mrf.mxu0
        %v2015 = vadd.f32 %v1886, %v2014
        %2016 = vmatmul.bf16.gmra.mxu0 %v1161
        %v2017 = vpop.f32.mrf.mxu0
        %v2018 = vadd.f32 %v1889, %v2017
        %v2019 = vpop.f32.mrf.mxu0
        %v2020 = vadd.f32 %v1891, %v2019
        %2021 = vmatmul.bf16.gmra.mxu0 %v1164
        %v2022 = vpop.f32.mrf.mxu0
        %v2023 = vadd.f32 %v1894, %v2022
        %v2024 = vpop.f32.mrf.mxu0
        %v2025 = vadd.f32 %v1896, %v2024
        %2026 = vmatmul.bf16.gmra.mxu0 %v1167
        %v2027 = vpop.f32.mrf.mxu0
        %v2028 = vadd.f32 %v1899, %v2027
        %v2029 = vpop.f32.mrf.mxu0
        %v2030 = vadd.f32 %v1901, %v2029
        %2031 = vmatmul.bf16.gmra.mxu0 %v1170
        %v2032 = vpop.f32.mrf.mxu0
        %v2033 = vadd.f32 %v1904, %v2032
        %v2034 = vpop.f32.mrf.mxu0
        %v2035 = vadd.f32 %v1906, %v2034
        %2036 = vmatmul.bf16.gmra.mxu0 %v1173
        %v2037 = vpop.f32.mrf.mxu0
        %v2038 = vadd.f32 %v1909, %v2037
        %v2039 = vpop.f32.mrf.mxu0
        %v2040 = vadd.f32 %v1911, %v2039
        %2041 = vmatmul.bf16.gmra.mxu0 %v1176
        %v2042 = vpop.f32.mrf.mxu0
        %v2043 = vadd.f32 %v1914, %v2042
        %v2044 = vpop.f32.mrf.mxu0
        %v2045 = vadd.f32 %v1916, %v2044
        %2046 = vmatmul.bf16.gmra.mxu0 %v1179
        %v2047 = vpop.f32.mrf.mxu0
        %v2048 = vadd.f32 %v1919, %v2047
        %v2049 = vpop.f32.mrf.mxu0
        %v2050 = vadd.f32 %v1921, %v2049
        %2051 = vmatmul.bf16.gmra.mxu0 %v1182
        %v2052 = vpop.f32.mrf.mxu0
        %v2053 = vadd.f32 %v1924, %v2052
        %v2054 = vpop.f32.mrf.mxu0
        %v2055 = vadd.f32 %v1926, %v2054
        %2056 = vmatmul.bf16.gmra.mxu0 %v1185
        %v2057 = vpop.f32.mrf.mxu0
        %v2058 = vadd.f32 %v1929, %v2057
        %v2059 = vpop.f32.mrf.mxu0
        %v2060 = vadd.f32 %v1931, %v2059
        %2061 = vmatmul.bf16.gmra.mxu0 %v1188
        %v2062 = vpop.f32.mrf.mxu0
        %v2063 = vadd.f32 %v1934, %v2062
        %v2064 = vpop.f32.mrf.mxu0
        %v2065 = vadd.f32 %v1936, %v2064
        %2066 = vmatmul.bf16.gmra.mxu0 %v1191
        %v2067 = vpop.f32.mrf.mxu0
        %v2068 = vadd.f32 %v1939, %v2067
        %v2069 = vpop.f32.mrf.mxu0
        %v2070 = vadd.f32 %v1941, %v2069
        %2071 = vmatmul.bf16.gmra.mxu0 %v1194
        %v2072 = vpop.f32.mrf.mxu0
        %v2073 = vadd.f32 %v1944, %v2072
        %v2074 = vpop.f32.mrf.mxu0
        %v2075 = vadd.f32 %v1946, %v2074
        %2076 = vmatmul.bf16.gmra.mxu0 %v1197
        %v2077 = vpop.f32.mrf.mxu0
        %v2078 = vadd.f32 %v1949, %v2077
        %v2079 = vpop.f32.mrf.mxu0
        %v2080 = vadd.f32 %v1951, %v2079
        %2081 = vmatmul.bf16.gmra.mxu0 %v1200
        %v2082 = vpop.f32.mrf.mxu0
        %v2083 = vadd.f32 %v1954, %v2082
        %v2084 = vpop.f32.mrf.mxu0
        %v2085 = vadd.f32 %v1956, %v2084
        %2086 = vmatmul.bf16.gmra.mxu0 %v1203
        %v2087 = vpop.f32.mrf.mxu0
        %v2088 = vadd.f32 %v1959, %v2087
        %v2089 = vpop.f32.mrf.mxu0
        %v2090 = vadd.f32 %v1961, %v2089
        %2091 = vmatmul.bf16.gmra.mxu0 %v1206
        %v2092 = vpop.f32.mrf.mxu0
        %v2093 = vadd.f32 %v1964, %v2092
        %v2094 = vpop.f32.mrf.mxu0
        %v2095 = vadd.f32 %v1966, %v2094
        %2096 = vmatmul.bf16.gmra.mxu0 %v1209
        %v2097 = vpop.f32.mrf.mxu0
        %v2098 = vadd.f32 %v1969, %v2097
        %v2099 = vpop.f32.mrf.mxu0
        %v2100 = vadd.f32 %v1971, %v2099
        %2101 = vmatmul.bf16.gmra.mxu0 %v1212
        %v2102 = vpop.f32.mrf.mxu0
        %v2103 = vadd.f32 %v1974, %v2102
        %v2104 = vpop.f32.mrf.mxu0
        %v2105 = vadd.f32 %v1976, %v2104
        %2106 = vmatmul.bf16.gmra.mxu0 %v1215
        %v2107 = vpop.f32.mrf.mxu0
        %v2108 = vadd.f32 %v1979, %v2107
        %v2109 = vpop.f32.mrf.mxu0
        %v2110 = vadd.f32 %v1981, %v2109
        %2111 = vmatmul.bf16.gmra.mxu0 %v1218
        %v2112 = vpop.f32.mrf.mxu0
        %v2113 = vadd.f32 %v1984, %v2112
        %v2114 = vpop.f32.mrf.mxu0
        %v2115 = vadd.f32 %v1986, %v2114
        %2116 = vmatmul.bf16.gmra.mxu0 %v1221
        %v2117 = vpop.f32.mrf.mxu0
        %v2118 = vadd.f32 %v1989, %v2117
        %v2119 = vpop.f32.mrf.mxu0
        %v2120 = vadd.f32 %v1991, %v2119
        %2121 = vmatmul.bf16.gmra.mxu0 %v1224
        %v2122 = vpop.f32.mrf.mxu0
        %v2123 = vadd.f32 %v1994, %v2122
        %v2124 = vpop.f32.mrf.mxu0
        %v2125 = vadd.f32 %v1996, %v2124
        %2126 = vmatmul.bf16.gmra.mxu0 %v1227
        %v2127 = vpop.f32.mrf.mxu0
        %v2128 = vadd.f32 %v1999, %v2127
        %v2129 = vpop.f32.mrf.mxu0
        %v2130 = vadd.f32 %v2001, %v2129
        %2131 = vdwg.mxu0
        %v2132 = vmax.f32 %v2013, 0.0
        %v2133 = vmax.f32 %v2015, 0.0
        %v2134 = vmax.f32 %v2018, 0.0
        %v2135 = vmax.f32 %v2020, 0.0
        %v2136 = vmax.f32 %v2023, 0.0
        %v2137 = vmax.f32 %v2025, 0.0
        %v2138 = vmax.f32 %v2028, 0.0
        %v2139 = vmax.f32 %v2030, 0.0
        %v2140 = vmax.f32 %v2033, 0.0
        %v2141 = vmax.f32 %v2035, 0.0
        %v2142 = vmax.f32 %v2038, 0.0
        %v2143 = vmax.f32 %v2040, 0.0
        %v2144 = vmax.f32 %v2043, 0.0
        %v2145 = vmax.f32 %v2045, 0.0
        %v2146 = vmax.f32 %v2048, 0.0
        %v2147 = vmax.f32 %v2050, 0.0
        %v2148 = vmax.f32 %v2053, 0.0
        %v2149 = vmax.f32 %v2055, 0.0
        %v2150 = vmax.f32 %v2058, 0.0
        %v2151 = vmax.f32 %v2060, 0.0
        %v2152 = vmax.f32 %v2063, 0.0
        %v2153 = vmax.f32 %v2065, 0.0
        %v2154 = vmax.f32 %v2068, 0.0
        %v2155 = vmax.f32 %v2070, 0.0
        %v2156 = vmax.f32 %v2073, 0.0
        %v2157 = vmax.f32 %v2075, 0.0
        %v2158 = vmax.f32 %v2078, 0.0
        %v2159 = vmax.f32 %v2080, 0.0
        %v2160 = vmax.f32 %v2083, 0.0
        %v2161 = vmax.f32 %v2085, 0.0
        %v2162 = vmax.f32 %v2088, 0.0
        %v2163 = vmax.f32 %v2090, 0.0
        %v2164 = vmax.f32 %v2093, 0.0
        %v2165 = vmax.f32 %v2095, 0.0
        %v2166 = vmax.f32 %v2098, 0.0
        %v2167 = vmax.f32 %v2100, 0.0
        %v2168 = vmax.f32 %v2103, 0.0
        %v2169 = vmax.f32 %v2105, 0.0
        %v2170 = vmax.f32 %v2108, 0.0
        %v2171 = vmax.f32 %v2110, 0.0
        %v2172 = vmax.f32 %v2113, 0.0
        %v2173 = vmax.f32 %v2115, 0.0
        %v2174 = vmax.f32 %v2118, 0.0
        %v2175 = vmax.f32 %v2120, 0.0
        %v2176 = vmax.f32 %v2123, 0.0
        %v2177 = vmax.f32 %v2125, 0.0
        %v2178 = vmax.f32 %v2128, 0.0
        %v2179 = vmax.f32 %v2130, 0.0
        %v2180 = vld [vmem:[%s3] sm:$0x1]
        %v2182 = vperm.slane %v2180, 0
        %v2184 = vmul.f32 %v2132, %v2182
        %v2185 = vmul.f32 %v2133, %v2182
        %v2186 = vmul.f32 %v2134, %v2182
        %v2187 = vmul.f32 %v2135, %v2182
        %v2188 = vmul.f32 %v2136, %v2182
        %v2189 = vmul.f32 %v2137, %v2182
        %v2190 = vmul.f32 %v2138, %v2182
        %v2191 = vmul.f32 %v2139, %v2182
        %v2192 = vmul.f32 %v2140, %v2182
        %v2193 = vmul.f32 %v2141, %v2182
        %v2194 = vmul.f32 %v2142, %v2182
        %v2195 = vmul.f32 %v2143, %v2182
        %v2196 = vmul.f32 %v2144, %v2182
        %v2197 = vmul.f32 %v2145, %v2182
        %v2198 = vmul.f32 %v2146, %v2182
        %v2199 = vmul.f32 %v2147, %v2182
        %v2200 = vmul.f32 %v2148, %v2182
        %v2201 = vmul.f32 %v2149, %v2182
        %v2202 = vmul.f32 %v2150, %v2182
        %v2203 = vmul.f32 %v2151, %v2182
        %v2204 = vmul.f32 %v2152, %v2182
        %v2205 = vmul.f32 %v2153, %v2182
        %v2206 = vmul.f32 %v2154, %v2182
        %v2207 = vmul.f32 %v2155, %v2182
        %v2208 = vmul.f32 %v2156, %v2182
        %v2209 = vmul.f32 %v2157, %v2182
        %v2210 = vmul.f32 %v2158, %v2182
        %v2211 = vmul.f32 %v2159, %v2182
        %v2212 = vmul.f32 %v2160, %v2182
        %v2213 = vmul.f32 %v2161, %v2182
        %v2214 = vmul.f32 %v2162, %v2182
        %v2215 = vmul.f32 %v2163, %v2182
        %v2216 = vmul.f32 %v2164, %v2182
        %v2217 = vmul.f32 %v2165, %v2182
        %v2218 = vmul.f32 %v2166, %v2182
        %v2219 = vmul.f32 %v2167, %v2182
        %v2220 = vmul.f32 %v2168, %v2182
        %v2221 = vmul.f32 %v2169, %v2182
        %v2222 = vmul.f32 %v2170, %v2182
        %v2223 = vmul.f32 %v2171, %v2182
        %v2224 = vmul.f32 %v2172, %v2182
        %v2225 = vmul.f32 %v2173, %v2182
        %v2226 = vmul.f32 %v2174, %v2182
        %v2227 = vmul.f32 %v2175, %v2182
        %v2228 = vmul.f32 %v2176, %v2182
        %v2229 = vmul.f32 %v2177, %v2182
        %v2230 = vmul.f32 %v2178, %v2182
        %v2231 = vmul.f32 %v2179, %v2182
        %2232 = vadd.xlane.f32.xlu0 %v2184
        %v2233 = vpop.xlane.xlu0 %2232
        %2234 = vadd.xlane.f32.xlu0 %v2185
        %v2235 = vpop.xlane.xlu0 %2234
        %2236 = vadd.xlane.f32.xlu0 %v2186
        %v2237 = vpop.xlane.xlu0 %2236
        %2238 = vadd.xlane.f32.xlu0 %v2187
        %v2239 = vpop.xlane.xlu0 %2238
        %2240 = vadd.xlane.f32.xlu0 %v2188
        %v2241 = vpop.xlane.xlu0 %2240
        %2242 = vadd.xlane.f32.xlu0 %v2189
        %v2243 = vpop.xlane.xlu0 %2242
        %2244 = vadd.xlane.f32.xlu0 %v2190
        %v2245 = vpop.xlane.xlu0 %2244
        %2246 = vadd.xlane.f32.xlu0 %v2191
        %v2247 = vpop.xlane.xlu0 %2246
        %2248 = vadd.xlane.f32.xlu0 %v2192
        %v2249 = vpop.xlane.xlu0 %2248
        %2250 = vadd.xlane.f32.xlu0 %v2193
        %v2251 = vpop.xlane.xlu0 %2250
        %2252 = vadd.xlane.f32.xlu0 %v2194
        %v2253 = vpop.xlane.xlu0 %2252
        %2254 = vadd.xlane.f32.xlu0 %v2195
        %v2255 = vpop.xlane.xlu0 %2254
        %2256 = vadd.xlane.f32.xlu0 %v2196
        %v2257 = vpop.xlane.xlu0 %2256
        %2258 = vadd.xlane.f32.xlu0 %v2197
        %v2259 = vpop.xlane.xlu0 %2258
        %2260 = vadd.xlane.f32.xlu0 %v2198
        %v2261 = vpop.xlane.xlu0 %2260
        %2262 = vadd.xlane.f32.xlu0 %v2199
        %v2263 = vpop.xlane.xlu0 %2262
        %2264 = vadd.xlane.f32.xlu0 %v2200
        %v2265 = vpop.xlane.xlu0 %2264
        %2266 = vadd.xlane.f32.xlu0 %v2201
        %v2267 = vpop.xlane.xlu0 %2266
        %2268 = vadd.xlane.f32.xlu0 %v2202
        %v2269 = vpop.xlane.xlu0 %2268
        %2270 = vadd.xlane.f32.xlu0 %v2203
        %v2271 = vpop.xlane.xlu0 %2270
        %2272 = vadd.xlane.f32.xlu0 %v2204
        %v2273 = vpop.xlane.xlu0 %2272
        %2274 = vadd.xlane.f32.xlu0 %v2205
        %v2275 = vpop.xlane.xlu0 %2274
        %2276 = vadd.xlane.f32.xlu0 %v2206
        %v2277 = vpop.xlane.xlu0 %2276
        %2278 = vadd.xlane.f32.xlu0 %v2207
        %v2279 = vpop.xlane.xlu0 %2278
        %2280 = vadd.xlane.f32.xlu0 %v2208
        %v2281 = vpop.xlane.xlu0 %2280
        %2282 = vadd.xlane.f32.xlu0 %v2209
        %v2283 = vpop.xlane.xlu0 %2282
        %2284 = vadd.xlane.f32.xlu0 %v2210
        %v2285 = vpop.xlane.xlu0 %2284
        %2286 = vadd.xlane.f32.xlu0 %v2211
        %v2287 = vpop.xlane.xlu0 %2286
        %2288 = vadd.xlane.f32.xlu0 %v2212
        %v2289 = vpop.xlane.xlu0 %2288
        %2290 = vadd.xlane.f32.xlu0 %v2213
        %v2291 = vpop.xlane.xlu0 %2290
        %2292 = vadd.xlane.f32.xlu0 %v2214
        %v2293 = vpop.xlane.xlu0 %2292
        %2294 = vadd.xlane.f32.xlu0 %v2215
        %v2295 = vpop.xlane.xlu0 %2294
        %2296 = vadd.xlane.f32.xlu0 %v2216
        %v2297 = vpop.xlane.xlu0 %2296
        %2298 = vadd.xlane.f32.xlu0 %v2217
        %v2299 = vpop.xlane.xlu0 %2298
        %2300 = vadd.xlane.f32.xlu0 %v2218
        %v2301 = vpop.xlane.xlu0 %2300
        %2302 = vadd.xlane.f32.xlu0 %v2219
        %v2303 = vpop.xlane.xlu0 %2302
        %2304 = vadd.xlane.f32.xlu0 %v2220
        %v2305 = vpop.xlane.xlu0 %2304
        %2306 = vadd.xlane.f32.xlu0 %v2221
        %v2307 = vpop.xlane.xlu0 %2306
        %2308 = vadd.xlane.f32.xlu0 %v2222
        %v2309 = vpop.xlane.xlu0 %2308
        %2310 = vadd.xlane.f32.xlu0 %v2223
        %v2311 = vpop.xlane.xlu0 %2310
        %2312 = vadd.xlane.f32.xlu0 %v2224
        %v2313 = vpop.xlane.xlu0 %2312
        %2314 = vadd.xlane.f32.xlu0 %v2225
        %v2315 = vpop.xlane.xlu0 %2314
        %2316 = vadd.xlane.f32.xlu0 %v2226
        %v2317 = vpop.xlane.xlu0 %2316
        %2318 = vadd.xlane.f32.xlu0 %v2227
        %v2319 = vpop.xlane.xlu0 %2318
        %2320 = vadd.xlane.f32.xlu0 %v2228
        %v2321 = vpop.xlane.xlu0 %2320
        %2322 = vadd.xlane.f32.xlu0 %v2229
        %v2323 = vpop.xlane.xlu0 %2322
        %2324 = vadd.xlane.f32.xlu0 %v2230
        %v2325 = vpop.xlane.xlu0 %2324
        %2326 = vadd.xlane.f32.xlu0 %v2231
        %v2327 = vpop.xlane.xlu0 %2326
        %s2328 = sld [smem:[#allocation2]]
        %v2329 = vstv %s2328
        %v2330 = vadd.f32 %v2233, %v2329
        %v2331 = vadd.f32 %v2235, %v2329
        %v2332 = vadd.f32 %v2237, %v2329
        %v2333 = vadd.f32 %v2239, %v2329
        %v2334 = vadd.f32 %v2241, %v2329
        %v2335 = vadd.f32 %v2243, %v2329
        %v2336 = vadd.f32 %v2245, %v2329
        %v2337 = vadd.f32 %v2247, %v2329
        %v2338 = vadd.f32 %v2249, %v2329
        %v2339 = vadd.f32 %v2251, %v2329
        %v2340 = vadd.f32 %v2253, %v2329
        %v2341 = vadd.f32 %v2255, %v2329
        %v2342 = vadd.f32 %v2257, %v2329
        %v2343 = vadd.f32 %v2259, %v2329
        %v2344 = vadd.f32 %v2261, %v2329
        %v2345 = vadd.f32 %v2263, %v2329
        %v2346 = vadd.f32 %v2265, %v2329
        %v2347 = vadd.f32 %v2267, %v2329
        %v2348 = vadd.f32 %v2269, %v2329
        %v2349 = vadd.f32 %v2271, %v2329
        %v2350 = vadd.f32 %v2273, %v2329
        %v2351 = vadd.f32 %v2275, %v2329
        %v2352 = vadd.f32 %v2277, %v2329
        %v2353 = vadd.f32 %v2279, %v2329
        %v2354 = vadd.f32 %v2281, %v2329
        %v2355 = vadd.f32 %v2283, %v2329
        %v2356 = vadd.f32 %v2285, %v2329
        %v2357 = vadd.f32 %v2287, %v2329
        %v2358 = vadd.f32 %v2289, %v2329
        %v2359 = vadd.f32 %v2291, %v2329
        %v2360 = vadd.f32 %v2293, %v2329
        %v2361 = vadd.f32 %v2295, %v2329
        %v2362 = vadd.f32 %v2297, %v2329
        %v2363 = vadd.f32 %v2299, %v2329
        %v2364 = vadd.f32 %v2301, %v2329
        %v2365 = vadd.f32 %v2303, %v2329
        %v2366 = vadd.f32 %v2305, %v2329
        %v2367 = vadd.f32 %v2307, %v2329
        %v2368 = vadd.f32 %v2309, %v2329
        %v2369 = vadd.f32 %v2311, %v2329
        %v2370 = vadd.f32 %v2313, %v2329
        %v2371 = vadd.f32 %v2315, %v2329
        %v2372 = vadd.f32 %v2317, %v2329
        %v2373 = vadd.f32 %v2319, %v2329
        %v2374 = vadd.f32 %v2321, %v2329
        %v2375 = vadd.f32 %v2323, %v2329
        %v2376 = vadd.f32 %v2325, %v2329
        %v2377 = vadd.f32 %v2327, %v2329
        %v2378 = vxor.u32 %v2330, 2147483648
        %v2379 = vxor.u32 %v2331, 2147483648
        %v2380 = vxor.u32 %v2332, 2147483648
        %v2381 = vxor.u32 %v2333, 2147483648
        %v2382 = vxor.u32 %v2334, 2147483648
        %v2383 = vxor.u32 %v2335, 2147483648
        %v2384 = vxor.u32 %v2336, 2147483648
        %v2385 = vxor.u32 %v2337, 2147483648
        %v2386 = vxor.u32 %v2338, 2147483648
        %v2387 = vxor.u32 %v2339, 2147483648
        %v2388 = vxor.u32 %v2340, 2147483648
        %v2389 = vxor.u32 %v2341, 2147483648
        %v2390 = vxor.u32 %v2342, 2147483648
        %v2391 = vxor.u32 %v2343, 2147483648
        %v2392 = vxor.u32 %v2344, 2147483648
        %v2393 = vxor.u32 %v2345, 2147483648
        %v2394 = vxor.u32 %v2346, 2147483648
        %v2395 = vxor.u32 %v2347, 2147483648
        %v2396 = vxor.u32 %v2348, 2147483648
        %v2397 = vxor.u32 %v2349, 2147483648
        %v2398 = vxor.u32 %v2350, 2147483648
        %v2399 = vxor.u32 %v2351, 2147483648
        %v2400 = vxor.u32 %v2352, 2147483648
        %v2401 = vxor.u32 %v2353, 2147483648
        %v2402 = vxor.u32 %v2354, 2147483648
        %v2403 = vxor.u32 %v2355, 2147483648
        %v2404 = vxor.u32 %v2356, 2147483648
        %v2405 = vxor.u32 %v2357, 2147483648
        %v2406 = vxor.u32 %v2358, 2147483648
        %v2407 = vxor.u32 %v2359, 2147483648
        %v2408 = vxor.u32 %v2360, 2147483648
        %v2409 = vxor.u32 %v2361, 2147483648
        %v2410 = vxor.u32 %v2362, 2147483648
        %v2411 = vxor.u32 %v2363, 2147483648
        %v2412 = vxor.u32 %v2364, 2147483648
        %v2413 = vxor.u32 %v2365, 2147483648
        %v2414 = vxor.u32 %v2366, 2147483648
        %v2415 = vxor.u32 %v2367, 2147483648
        %v2416 = vxor.u32 %v2368, 2147483648
        %v2417 = vxor.u32 %v2369, 2147483648
        %v2418 = vxor.u32 %v2370, 2147483648
        %v2419 = vxor.u32 %v2371, 2147483648
        %v2420 = vxor.u32 %v2372, 2147483648
        %v2421 = vxor.u32 %v2373, 2147483648
        %v2422 = vxor.u32 %v2374, 2147483648
        %v2423 = vxor.u32 %v2375, 2147483648
        %v2424 = vxor.u32 %v2376, 2147483648
        %v2425 = vxor.u32 %v2377, 2147483648
        %v2426 = vmul.f32 %v2378, 1.442695
        %v2427 = vpow.pop %v2426
        %v2428 = vmul.f32 %v2379, 1.442695
        %v2429 = vpow.pop %v2428
        %v2430 = vmul.f32 %v2380, 1.442695
        %v2431 = vpow.pop %v2430
        %v2432 = vmul.f32 %v2381, 1.442695
        %v2433 = vpow.pop %v2432
        %v2434 = vmul.f32 %v2382, 1.442695
        %v2435 = vpow.pop %v2434
        %v2436 = vmul.f32 %v2383, 1.442695
        %v2437 = vpow.pop %v2436
        %v2438 = vmul.f32 %v2384, 1.442695
        %v2439 = vpow.pop %v2438
        %v2440 = vmul.f32 %v2385, 1.442695
        %v2441 = vpow.pop %v2440
        %v2442 = vmul.f32 %v2386, 1.442695
        %v2443 = vpow.pop %v2442
        %v2444 = vmul.f32 %v2387, 1.442695
        %v2445 = vpow.pop %v2444
        %v2446 = vmul.f32 %v2388, 1.442695
        %v2447 = vpow.pop %v2446
        %v2448 = vmul.f32 %v2389, 1.442695
        %v2449 = vpow.pop %v2448
        %v2450 = vmul.f32 %v2390, 1.442695
        %v2451 = vpow.pop %v2450
        %v2452 = vmul.f32 %v2391, 1.442695
        %v2453 = vpow.pop %v2452
        %v2454 = vmul.f32 %v2392, 1.442695
        %v2455 = vpow.pop %v2454
        %v2456 = vmul.f32 %v2393, 1.442695
        %v2457 = vpow.pop %v2456
        %v2458 = vmul.f32 %v2394, 1.442695
        %v2459 = vpow.pop %v2458
        %v2460 = vmul.f32 %v2395, 1.442695
        %v2461 = vpow.pop %v2460
        %v2462 = vmul.f32 %v2396, 1.442695
        %v2463 = vpow.pop %v2462
        %v2464 = vmul.f32 %v2397, 1.442695
        %v2465 = vpow.pop %v2464
        %v2466 = vmul.f32 %v2398, 1.442695
        %v2467 = vpow.pop %v2466
        %v2468 = vmul.f32 %v2399, 1.442695
        %v2469 = vpow.pop %v2468
        %v2470 = vmul.f32 %v2400, 1.442695
        %v2471 = vpow.pop %v2470
        %v2472 = vmul.f32 %v2401, 1.442695
        %v2473 = vpow.pop %v2472
        %v2474 = vmul.f32 %v2402, 1.442695
        %v2475 = vpow.pop %v2474
        %v2476 = vmul.f32 %v2403, 1.442695
        %v2477 = vpow.pop %v2476
        %v2478 = vmul.f32 %v2404, 1.442695
        %v2479 = vpow.pop %v2478
        %v2480 = vmul.f32 %v2405, 1.442695
        %v2481 = vpow.pop %v2480
        %v2482 = vmul.f32 %v2406, 1.442695
        %v2483 = vpow.pop %v2482
        %v2484 = vmul.f32 %v2407, 1.442695
        %v2485 = vpow.pop %v2484
        %v2486 = vmul.f32 %v2408, 1.442695
        %v2487 = vpow.pop %v2486
        %v2488 = vmul.f32 %v2409, 1.442695
        %v2489 = vpow.pop %v2488
        %v2490 = vmul.f32 %v2410, 1.442695
        %v2491 = vpow.pop %v2490
        %v2492 = vmul.f32 %v2411, 1.442695
        %v2493 = vpow.pop %v2492
        %v2494 = vmul.f32 %v2412, 1.442695
        %v2495 = vpow.pop %v2494
        %v2496 = vmul.f32 %v2413, 1.442695
        %v2497 = vpow.pop %v2496
        %v2498 = vmul.f32 %v2414, 1.442695
        %v2499 = vpow.pop %v2498
        %v2500 = vmul.f32 %v2415, 1.442695
        %v2501 = vpow.pop %v2500
        %v2502 = vmul.f32 %v2416, 1.442695
        %v2503 = vpow.pop %v2502
        %v2504 = vmul.f32 %v2417, 1.442695
        %v2505 = vpow.pop %v2504
        %v2506 = vmul.f32 %v2418, 1.442695
        %v2507 = vpow.pop %v2506
        %v2508 = vmul.f32 %v2419, 1.442695
        %v2509 = vpow.pop %v2508
        %v2510 = vmul.f32 %v2420, 1.442695
        %v2511 = vpow.pop %v2510
        %v2512 = vmul.f32 %v2421, 1.442695
        %v2513 = vpow.pop %v2512
        %v2514 = vmul.f32 %v2422, 1.442695
        %v2515 = vpow.pop %v2514
        %v2516 = vmul.f32 %v2423, 1.442695
        %v2517 = vpow.pop %v2516
        %v2518 = vmul.f32 %v2424, 1.442695
        %v2519 = vpow.pop %v2518
        %v2520 = vmul.f32 %v2425, 1.442695
        %v2521 = vpow.pop %v2520
        %v2522 = vadd.f32 %v2427, 1.0
        %v2523 = vadd.f32 %v2429, 1.0
        %v2524 = vadd.f32 %v2431, 1.0
        %v2525 = vadd.f32 %v2433, 1.0
        %v2526 = vadd.f32 %v2435, 1.0
        %v2527 = vadd.f32 %v2437, 1.0
        %v2528 = vadd.f32 %v2439, 1.0
        %v2529 = vadd.f32 %v2441, 1.0
        %v2530 = vadd.f32 %v2443, 1.0
        %v2531 = vadd.f32 %v2445, 1.0
        %v2532 = vadd.f32 %v2447, 1.0
        %v2533 = vadd.f32 %v2449, 1.0
        %v2534 = vadd.f32 %v2451, 1.0
        %v2535 = vadd.f32 %v2453, 1.0
        %v2536 = vadd.f32 %v2455, 1.0
        %v2537 = vadd.f32 %v2457, 1.0
        %v2538 = vadd.f32 %v2459, 1.0
        %v2539 = vadd.f32 %v2461, 1.0
        %v2540 = vadd.f32 %v2463, 1.0
        %v2541 = vadd.f32 %v2465, 1.0
        %v2542 = vadd.f32 %v2467, 1.0
        %v2543 = vadd.f32 %v2469, 1.0
        %v2544 = vadd.f32 %v2471, 1.0
        %v2545 = vadd.f32 %v2473, 1.0
        %v2546 = vadd.f32 %v2475, 1.0
        %v2547 = vadd.f32 %v2477, 1.0
        %v2548 = vadd.f32 %v2479, 1.0
        %v2549 = vadd.f32 %v2481, 1.0
        %v2550 = vadd.f32 %v2483, 1.0
        %v2551 = vadd.f32 %v2485, 1.0
        %v2552 = vadd.f32 %v2487, 1.0
        %v2553 = vadd.f32 %v2489, 1.0
        %v2554 = vadd.f32 %v2491, 1.0
        %v2555 = vadd.f32 %v2493, 1.0
        %v2556 = vadd.f32 %v2495, 1.0
        %v2557 = vadd.f32 %v2497, 1.0
        %v2558 = vadd.f32 %v2499, 1.0
        %v2559 = vadd.f32 %v2501, 1.0
        %v2560 = vadd.f32 %v2503, 1.0
        %v2561 = vadd.f32 %v2505, 1.0
        %v2562 = vadd.f32 %v2507, 1.0
        %v2563 = vadd.f32 %v2509, 1.0
        %v2564 = vadd.f32 %v2511, 1.0
        %v2565 = vadd.f32 %v2513, 1.0
        %v2566 = vadd.f32 %v2515, 1.0
        %v2567 = vadd.f32 %v2517, 1.0
        %v2568 = vadd.f32 %v2519, 1.0
        %v2569 = vadd.f32 %v2521, 1.0
        %v2570 = vrcp.pop %v2522
        %v2571 = vmul.f32 %v2522, %v2570
        %v2572 = vsub.f32 1.0, %v2571
        %v2573 = vmul.f32 %v2570, %v2572
        %v2574 = vadd.f32 %v2570, %v2573
        %vm2575 = vweird.f32 %v2522
        %vm2576 = vweird.f32 %v2570
        %vm2577 = vmor %vm2575, %vm2576
        %v2578 = vsel %vm2577, %v2570, %v2574
        %v2579 = vand.u32 2147483647, %v2522
        %vm2580 = vcmp.eq.f32.partialorder %v2579, 8.507059e+37
        %v2581 = vand.u32 %v2522, 2147483648
        %v2582 = vor.u32 1.1754944e-38, %v2581
        %v2583 = vsel %vm2580, %v2582, %v2578
        %v2584 = vmul.f32 1.0, %v2583
        %v2585 = vrcp.pop %v2523
        %v2586 = vmul.f32 %v2523, %v2585
        %v2587 = vsub.f32 1.0, %v2586
        %v2588 = vmul.f32 %v2585, %v2587
        %v2589 = vadd.f32 %v2585, %v2588
        %vm2590 = vweird.f32 %v2523
        %vm2591 = vweird.f32 %v2585
        %vm2592 = vmor %vm2590, %vm2591
        %v2593 = vsel %vm2592, %v2585, %v2589
        %v2594 = vand.u32 2147483647, %v2523
        %vm2595 = vcmp.eq.f32.partialorder %v2594, 8.507059e+37
        %v2596 = vand.u32 %v2523, 2147483648
        %v2597 = vor.u32 1.1754944e-38, %v2596
        %v2598 = vsel %vm2595, %v2597, %v2593
        %v2599 = vmul.f32 1.0, %v2598
        %v2600 = vrcp.pop %v2524
        %v2601 = vmul.f32 %v2524, %v2600
        %v2602 = vsub.f32 1.0, %v2601
        %v2603 = vmul.f32 %v2600, %v2602
        %v2604 = vadd.f32 %v2600, %v2603
        %vm2605 = vweird.f32 %v2524
        %vm2606 = vweird.f32 %v2600
        %vm2607 = vmor %vm2605, %vm2606
        %v2608 = vsel %vm2607, %v2600, %v2604
        %v2609 = vand.u32 2147483647, %v2524
        %vm2610 = vcmp.eq.f32.partialorder %v2609, 8.507059e+37
        %v2611 = vand.u32 %v2524, 2147483648
        %v2612 = vor.u32 1.1754944e-38, %v2611
        %v2613 = vsel %vm2610, %v2612, %v2608
        %v2614 = vmul.f32 1.0, %v2613
        %v2615 = vrcp.pop %v2525
        %v2616 = vmul.f32 %v2525, %v2615
        %v2617 = vsub.f32 1.0, %v2616
        %v2618 = vmul.f32 %v2615, %v2617
        %v2619 = vadd.f32 %v2615, %v2618
        %vm2620 = vweird.f32 %v2525
        %vm2621 = vweird.f32 %v2615
        %vm2622 = vmor %vm2620, %vm2621
        %v2623 = vsel %vm2622, %v2615, %v2619
        %v2624 = vand.u32 2147483647, %v2525
        %vm2625 = vcmp.eq.f32.partialorder %v2624, 8.507059e+37
        %v2626 = vand.u32 %v2525, 2147483648
        %v2627 = vor.u32 1.1754944e-38, %v2626
        %v2628 = vsel %vm2625, %v2627, %v2623
        %v2629 = vmul.f32 1.0, %v2628
        %v2630 = vrcp.pop %v2526
        %v2631 = vmul.f32 %v2526, %v2630
        %v2632 = vsub.f32 1.0, %v2631
        %v2633 = vmul.f32 %v2630, %v2632
        %v2634 = vadd.f32 %v2630, %v2633
        %vm2635 = vweird.f32 %v2526
        %vm2636 = vweird.f32 %v2630
        %vm2637 = vmor %vm2635, %vm2636
        %v2638 = vsel %vm2637, %v2630, %v2634
        %v2639 = vand.u32 2147483647, %v2526
        %vm2640 = vcmp.eq.f32.partialorder %v2639, 8.507059e+37
        %v2641 = vand.u32 %v2526, 2147483648
        %v2642 = vor.u32 1.1754944e-38, %v2641
        %v2643 = vsel %vm2640, %v2642, %v2638
        %v2644 = vmul.f32 1.0, %v2643
        %v2645 = vrcp.pop %v2527
        %v2646 = vmul.f32 %v2527, %v2645
        %v2647 = vsub.f32 1.0, %v2646
        %v2648 = vmul.f32 %v2645, %v2647
        %v2649 = vadd.f32 %v2645, %v2648
        %vm2650 = vweird.f32 %v2527
        %vm2651 = vweird.f32 %v2645
        %vm2652 = vmor %vm2650, %vm2651
        %v2653 = vsel %vm2652, %v2645, %v2649
        %v2654 = vand.u32 2147483647, %v2527
        %vm2655 = vcmp.eq.f32.partialorder %v2654, 8.507059e+37
        %v2656 = vand.u32 %v2527, 2147483648
        %v2657 = vor.u32 1.1754944e-38, %v2656
        %v2658 = vsel %vm2655, %v2657, %v2653
        %v2659 = vmul.f32 1.0, %v2658
        %v2660 = vrcp.pop %v2528
        %v2661 = vmul.f32 %v2528, %v2660
        %v2662 = vsub.f32 1.0, %v2661
        %v2663 = vmul.f32 %v2660, %v2662
        %v2664 = vadd.f32 %v2660, %v2663
        %vm2665 = vweird.f32 %v2528
        %vm2666 = vweird.f32 %v2660
        %vm2667 = vmor %vm2665, %vm2666
        %v2668 = vsel %vm2667, %v2660, %v2664
        %v2669 = vand.u32 2147483647, %v2528
        %vm2670 = vcmp.eq.f32.partialorder %v2669, 8.507059e+37
        %v2671 = vand.u32 %v2528, 2147483648
        %v2672 = vor.u32 1.1754944e-38, %v2671
        %v2673 = vsel %vm2670, %v2672, %v2668
        %v2674 = vmul.f32 1.0, %v2673
        %v2675 = vrcp.pop %v2529
        %v2676 = vmul.f32 %v2529, %v2675
        %v2677 = vsub.f32 1.0, %v2676
        %v2678 = vmul.f32 %v2675, %v2677
        %v2679 = vadd.f32 %v2675, %v2678
        %vm2680 = vweird.f32 %v2529
        %vm2681 = vweird.f32 %v2675
        %vm2682 = vmor %vm2680, %vm2681
        %v2683 = vsel %vm2682, %v2675, %v2679
        %v2684 = vand.u32 2147483647, %v2529
        %vm2685 = vcmp.eq.f32.partialorder %v2684, 8.507059e+37
        %v2686 = vand.u32 %v2529, 2147483648
        %v2687 = vor.u32 1.1754944e-38, %v2686
        %v2688 = vsel %vm2685, %v2687, %v2683
        %v2689 = vmul.f32 1.0, %v2688
        %v2690 = vrcp.pop %v2530
        %v2691 = vmul.f32 %v2530, %v2690
        %v2692 = vsub.f32 1.0, %v2691
        %v2693 = vmul.f32 %v2690, %v2692
        %v2694 = vadd.f32 %v2690, %v2693
        %vm2695 = vweird.f32 %v2530
        %vm2696 = vweird.f32 %v2690
        %vm2697 = vmor %vm2695, %vm2696
        %v2698 = vsel %vm2697, %v2690, %v2694
        %v2699 = vand.u32 2147483647, %v2530
        %vm2700 = vcmp.eq.f32.partialorder %v2699, 8.507059e+37
        %v2701 = vand.u32 %v2530, 2147483648
        %v2702 = vor.u32 1.1754944e-38, %v2701
        %v2703 = vsel %vm2700, %v2702, %v2698
        %v2704 = vmul.f32 1.0, %v2703
        %v2705 = vrcp.pop %v2531
        %v2706 = vmul.f32 %v2531, %v2705
        %v2707 = vsub.f32 1.0, %v2706
        %v2708 = vmul.f32 %v2705, %v2707
        %v2709 = vadd.f32 %v2705, %v2708
        %vm2710 = vweird.f32 %v2531
        %vm2711 = vweird.f32 %v2705
        %vm2712 = vmor %vm2710, %vm2711
        %v2713 = vsel %vm2712, %v2705, %v2709
        %v2714 = vand.u32 2147483647, %v2531
        %vm2715 = vcmp.eq.f32.partialorder %v2714, 8.507059e+37
        %v2716 = vand.u32 %v2531, 2147483648
        %v2717 = vor.u32 1.1754944e-38, %v2716
        %v2718 = vsel %vm2715, %v2717, %v2713
        %v2719 = vmul.f32 1.0, %v2718
        %v2720 = vrcp.pop %v2532
        %v2721 = vmul.f32 %v2532, %v2720
        %v2722 = vsub.f32 1.0, %v2721
        %v2723 = vmul.f32 %v2720, %v2722
        %v2724 = vadd.f32 %v2720, %v2723
        %vm2725 = vweird.f32 %v2532
        %vm2726 = vweird.f32 %v2720
        %vm2727 = vmor %vm2725, %vm2726
        %v2728 = vsel %vm2727, %v2720, %v2724
        %v2729 = vand.u32 2147483647, %v2532
        %vm2730 = vcmp.eq.f32.partialorder %v2729, 8.507059e+37
        %v2731 = vand.u32 %v2532, 2147483648
        %v2732 = vor.u32 1.1754944e-38, %v2731
        %v2733 = vsel %vm2730, %v2732, %v2728
        %v2734 = vmul.f32 1.0, %v2733
        %v2735 = vrcp.pop %v2533
        %v2736 = vmul.f32 %v2533, %v2735
        %v2737 = vsub.f32 1.0, %v2736
        %v2738 = vmul.f32 %v2735, %v2737
        %v2739 = vadd.f32 %v2735, %v2738
        %vm2740 = vweird.f32 %v2533
        %vm2741 = vweird.f32 %v2735
        %vm2742 = vmor %vm2740, %vm2741
        %v2743 = vsel %vm2742, %v2735, %v2739
        %v2744 = vand.u32 2147483647, %v2533
        %vm2745 = vcmp.eq.f32.partialorder %v2744, 8.507059e+37
        %v2746 = vand.u32 %v2533, 2147483648
        %v2747 = vor.u32 1.1754944e-38, %v2746
        %v2748 = vsel %vm2745, %v2747, %v2743
        %v2749 = vmul.f32 1.0, %v2748
        %v2750 = vrcp.pop %v2534
        %v2751 = vmul.f32 %v2534, %v2750
        %v2752 = vsub.f32 1.0, %v2751
        %v2753 = vmul.f32 %v2750, %v2752
        %v2754 = vadd.f32 %v2750, %v2753
        %vm2755 = vweird.f32 %v2534
        %vm2756 = vweird.f32 %v2750
        %vm2757 = vmor %vm2755, %vm2756
        %v2758 = vsel %vm2757, %v2750, %v2754
        %v2759 = vand.u32 2147483647, %v2534
        %vm2760 = vcmp.eq.f32.partialorder %v2759, 8.507059e+37
        %v2761 = vand.u32 %v2534, 2147483648
        %v2762 = vor.u32 1.1754944e-38, %v2761
        %v2763 = vsel %vm2760, %v2762, %v2758
        %v2764 = vmul.f32 1.0, %v2763
        %v2765 = vrcp.pop %v2535
        %v2766 = vmul.f32 %v2535, %v2765
        %v2767 = vsub.f32 1.0, %v2766
        %v2768 = vmul.f32 %v2765, %v2767
        %v2769 = vadd.f32 %v2765, %v2768
        %vm2770 = vweird.f32 %v2535
        %vm2771 = vweird.f32 %v2765
        %vm2772 = vmor %vm2770, %vm2771
        %v2773 = vsel %vm2772, %v2765, %v2769
        %v2774 = vand.u32 2147483647, %v2535
        %vm2775 = vcmp.eq.f32.partialorder %v2774, 8.507059e+37
        %v2776 = vand.u32 %v2535, 2147483648
        %v2777 = vor.u32 1.1754944e-38, %v2776
        %v2778 = vsel %vm2775, %v2777, %v2773
        %v2779 = vmul.f32 1.0, %v2778
        %v2780 = vrcp.pop %v2536
        %v2781 = vmul.f32 %v2536, %v2780
        %v2782 = vsub.f32 1.0, %v2781
        %v2783 = vmul.f32 %v2780, %v2782
        %v2784 = vadd.f32 %v2780, %v2783
        %vm2785 = vweird.f32 %v2536
        %vm2786 = vweird.f32 %v2780
        %vm2787 = vmor %vm2785, %vm2786
        %v2788 = vsel %vm2787, %v2780, %v2784
        %v2789 = vand.u32 2147483647, %v2536
        %vm2790 = vcmp.eq.f32.partialorder %v2789, 8.507059e+37
        %v2791 = vand.u32 %v2536, 2147483648
        %v2792 = vor.u32 1.1754944e-38, %v2791
        %v2793 = vsel %vm2790, %v2792, %v2788
        %v2794 = vmul.f32 1.0, %v2793
        %v2795 = vrcp.pop %v2537
        %v2796 = vmul.f32 %v2537, %v2795
        %v2797 = vsub.f32 1.0, %v2796
        %v2798 = vmul.f32 %v2795, %v2797
        %v2799 = vadd.f32 %v2795, %v2798
        %vm2800 = vweird.f32 %v2537
        %vm2801 = vweird.f32 %v2795
        %vm2802 = vmor %vm2800, %vm2801
        %v2803 = vsel %vm2802, %v2795, %v2799
        %v2804 = vand.u32 2147483647, %v2537
        %vm2805 = vcmp.eq.f32.partialorder %v2804, 8.507059e+37
        %v2806 = vand.u32 %v2537, 2147483648
        %v2807 = vor.u32 1.1754944e-38, %v2806
        %v2808 = vsel %vm2805, %v2807, %v2803
        %v2809 = vmul.f32 1.0, %v2808
        %v2810 = vrcp.pop %v2538
        %v2811 = vmul.f32 %v2538, %v2810
        %v2812 = vsub.f32 1.0, %v2811
        %v2813 = vmul.f32 %v2810, %v2812
        %v2814 = vadd.f32 %v2810, %v2813
        %vm2815 = vweird.f32 %v2538
        %vm2816 = vweird.f32 %v2810
        %vm2817 = vmor %vm2815, %vm2816
        %v2818 = vsel %vm2817, %v2810, %v2814
        %v2819 = vand.u32 2147483647, %v2538
        %vm2820 = vcmp.eq.f32.partialorder %v2819, 8.507059e+37
        %v2821 = vand.u32 %v2538, 2147483648
        %v2822 = vor.u32 1.1754944e-38, %v2821
        %v2823 = vsel %vm2820, %v2822, %v2818
        %v2824 = vmul.f32 1.0, %v2823
        %v2825 = vrcp.pop %v2539
        %v2826 = vmul.f32 %v2539, %v2825
        %v2827 = vsub.f32 1.0, %v2826
        %v2828 = vmul.f32 %v2825, %v2827
        %v2829 = vadd.f32 %v2825, %v2828
        %vm2830 = vweird.f32 %v2539
        %vm2831 = vweird.f32 %v2825
        %vm2832 = vmor %vm2830, %vm2831
        %v2833 = vsel %vm2832, %v2825, %v2829
        %v2834 = vand.u32 2147483647, %v2539
        %vm2835 = vcmp.eq.f32.partialorder %v2834, 8.507059e+37
        %v2836 = vand.u32 %v2539, 2147483648
        %v2837 = vor.u32 1.1754944e-38, %v2836
        %v2838 = vsel %vm2835, %v2837, %v2833
        %v2839 = vmul.f32 1.0, %v2838
        %v2840 = vrcp.pop %v2540
        %v2841 = vmul.f32 %v2540, %v2840
        %v2842 = vsub.f32 1.0, %v2841
        %v2843 = vmul.f32 %v2840, %v2842
        %v2844 = vadd.f32 %v2840, %v2843
        %vm2845 = vweird.f32 %v2540
        %vm2846 = vweird.f32 %v2840
        %vm2847 = vmor %vm2845, %vm2846
        %v2848 = vsel %vm2847, %v2840, %v2844
        %v2849 = vand.u32 2147483647, %v2540
        %vm2850 = vcmp.eq.f32.partialorder %v2849, 8.507059e+37
        %v2851 = vand.u32 %v2540, 2147483648
        %v2852 = vor.u32 1.1754944e-38, %v2851
        %v2853 = vsel %vm2850, %v2852, %v2848
        %v2854 = vmul.f32 1.0, %v2853
        %v2855 = vrcp.pop %v2541
        %v2856 = vmul.f32 %v2541, %v2855
        %v2857 = vsub.f32 1.0, %v2856
        %v2858 = vmul.f32 %v2855, %v2857
        %v2859 = vadd.f32 %v2855, %v2858
        %vm2860 = vweird.f32 %v2541
        %vm2861 = vweird.f32 %v2855
        %vm2862 = vmor %vm2860, %vm2861
        %v2863 = vsel %vm2862, %v2855, %v2859
        %v2864 = vand.u32 2147483647, %v2541
        %vm2865 = vcmp.eq.f32.partialorder %v2864, 8.507059e+37
        %v2866 = vand.u32 %v2541, 2147483648
        %v2867 = vor.u32 1.1754944e-38, %v2866
        %v2868 = vsel %vm2865, %v2867, %v2863
        %v2869 = vmul.f32 1.0, %v2868
        %v2870 = vrcp.pop %v2542
        %v2871 = vmul.f32 %v2542, %v2870
        %v2872 = vsub.f32 1.0, %v2871
        %v2873 = vmul.f32 %v2870, %v2872
        %v2874 = vadd.f32 %v2870, %v2873
        %vm2875 = vweird.f32 %v2542
        %vm2876 = vweird.f32 %v2870
        %vm2877 = vmor %vm2875, %vm2876
        %v2878 = vsel %vm2877, %v2870, %v2874
        %v2879 = vand.u32 2147483647, %v2542
        %vm2880 = vcmp.eq.f32.partialorder %v2879, 8.507059e+37
        %v2881 = vand.u32 %v2542, 2147483648
        %v2882 = vor.u32 1.1754944e-38, %v2881
        %v2883 = vsel %vm2880, %v2882, %v2878
        %v2884 = vmul.f32 1.0, %v2883
        %v2885 = vrcp.pop %v2543
        %v2886 = vmul.f32 %v2543, %v2885
        %v2887 = vsub.f32 1.0, %v2886
        %v2888 = vmul.f32 %v2885, %v2887
        %v2889 = vadd.f32 %v2885, %v2888
        %vm2890 = vweird.f32 %v2543
        %vm2891 = vweird.f32 %v2885
        %vm2892 = vmor %vm2890, %vm2891
        %v2893 = vsel %vm2892, %v2885, %v2889
        %v2894 = vand.u32 2147483647, %v2543
        %vm2895 = vcmp.eq.f32.partialorder %v2894, 8.507059e+37
        %v2896 = vand.u32 %v2543, 2147483648
        %v2897 = vor.u32 1.1754944e-38, %v2896
        %v2898 = vsel %vm2895, %v2897, %v2893
        %v2899 = vmul.f32 1.0, %v2898
        %v2900 = vrcp.pop %v2544
        %v2901 = vmul.f32 %v2544, %v2900
        %v2902 = vsub.f32 1.0, %v2901
        %v2903 = vmul.f32 %v2900, %v2902
        %v2904 = vadd.f32 %v2900, %v2903
        %vm2905 = vweird.f32 %v2544
        %vm2906 = vweird.f32 %v2900
        %vm2907 = vmor %vm2905, %vm2906
        %v2908 = vsel %vm2907, %v2900, %v2904
        %v2909 = vand.u32 2147483647, %v2544
        %vm2910 = vcmp.eq.f32.partialorder %v2909, 8.507059e+37
        %v2911 = vand.u32 %v2544, 2147483648
        %v2912 = vor.u32 1.1754944e-38, %v2911
        %v2913 = vsel %vm2910, %v2912, %v2908
        %v2914 = vmul.f32 1.0, %v2913
        %v2915 = vrcp.pop %v2545
        %v2916 = vmul.f32 %v2545, %v2915
        %v2917 = vsub.f32 1.0, %v2916
        %v2918 = vmul.f32 %v2915, %v2917
        %v2919 = vadd.f32 %v2915, %v2918
        %vm2920 = vweird.f32 %v2545
        %vm2921 = vweird.f32 %v2915
        %vm2922 = vmor %vm2920, %vm2921
        %v2923 = vsel %vm2922, %v2915, %v2919
        %v2924 = vand.u32 2147483647, %v2545
        %vm2925 = vcmp.eq.f32.partialorder %v2924, 8.507059e+37
        %v2926 = vand.u32 %v2545, 2147483648
        %v2927 = vor.u32 1.1754944e-38, %v2926
        %v2928 = vsel %vm2925, %v2927, %v2923
        %v2929 = vmul.f32 1.0, %v2928
        %v2930 = vrcp.pop %v2546
        %v2931 = vmul.f32 %v2546, %v2930
        %v2932 = vsub.f32 1.0, %v2931
        %v2933 = vmul.f32 %v2930, %v2932
        %v2934 = vadd.f32 %v2930, %v2933
        %vm2935 = vweird.f32 %v2546
        %vm2936 = vweird.f32 %v2930
        %vm2937 = vmor %vm2935, %vm2936
        %v2938 = vsel %vm2937, %v2930, %v2934
        %v2939 = vand.u32 2147483647, %v2546
        %vm2940 = vcmp.eq.f32.partialorder %v2939, 8.507059e+37
        %v2941 = vand.u32 %v2546, 2147483648
        %v2942 = vor.u32 1.1754944e-38, %v2941
        %v2943 = vsel %vm2940, %v2942, %v2938
        %v2944 = vmul.f32 1.0, %v2943
        %v2945 = vrcp.pop %v2547
        %v2946 = vmul.f32 %v2547, %v2945
        %v2947 = vsub.f32 1.0, %v2946
        %v2948 = vmul.f32 %v2945, %v2947
        %v2949 = vadd.f32 %v2945, %v2948
        %vm2950 = vweird.f32 %v2547
        %vm2951 = vweird.f32 %v2945
        %vm2952 = vmor %vm2950, %vm2951
        %v2953 = vsel %vm2952, %v2945, %v2949
        %v2954 = vand.u32 2147483647, %v2547
        %vm2955 = vcmp.eq.f32.partialorder %v2954, 8.507059e+37
        %v2956 = vand.u32 %v2547, 2147483648
        %v2957 = vor.u32 1.1754944e-38, %v2956
        %v2958 = vsel %vm2955, %v2957, %v2953
        %v2959 = vmul.f32 1.0, %v2958
        %v2960 = vrcp.pop %v2548
        %v2961 = vmul.f32 %v2548, %v2960
        %v2962 = vsub.f32 1.0, %v2961
        %v2963 = vmul.f32 %v2960, %v2962
        %v2964 = vadd.f32 %v2960, %v2963
        %vm2965 = vweird.f32 %v2548
        %vm2966 = vweird.f32 %v2960
        %vm2967 = vmor %vm2965, %vm2966
        %v2968 = vsel %vm2967, %v2960, %v2964
        %v2969 = vand.u32 2147483647, %v2548
        %vm2970 = vcmp.eq.f32.partialorder %v2969, 8.507059e+37
        %v2971 = vand.u32 %v2548, 2147483648
        %v2972 = vor.u32 1.1754944e-38, %v2971
        %v2973 = vsel %vm2970, %v2972, %v2968
        %v2974 = vmul.f32 1.0, %v2973
        %v2975 = vrcp.pop %v2549
        %v2976 = vmul.f32 %v2549, %v2975
        %v2977 = vsub.f32 1.0, %v2976
        %v2978 = vmul.f32 %v2975, %v2977
        %v2979 = vadd.f32 %v2975, %v2978
        %vm2980 = vweird.f32 %v2549
        %vm2981 = vweird.f32 %v2975
        %vm2982 = vmor %vm2980, %vm2981
        %v2983 = vsel %vm2982, %v2975, %v2979
        %v2984 = vand.u32 2147483647, %v2549
        %vm2985 = vcmp.eq.f32.partialorder %v2984, 8.507059e+37
        %v2986 = vand.u32 %v2549, 2147483648
        %v2987 = vor.u32 1.1754944e-38, %v2986
        %v2988 = vsel %vm2985, %v2987, %v2983
        %v2989 = vmul.f32 1.0, %v2988
        %v2990 = vrcp.pop %v2550
        %v2991 = vmul.f32 %v2550, %v2990
        %v2992 = vsub.f32 1.0, %v2991
        %v2993 = vmul.f32 %v2990, %v2992
        %v2994 = vadd.f32 %v2990, %v2993
        %vm2995 = vweird.f32 %v2550
        %vm2996 = vweird.f32 %v2990
        %vm2997 = vmor %vm2995, %vm2996
        %v2998 = vsel %vm2997, %v2990, %v2994
        %v2999 = vand.u32 2147483647, %v2550
        %vm3000 = vcmp.eq.f32.partialorder %v2999, 8.507059e+37
        %v3001 = vand.u32 %v2550, 2147483648
        %v3002 = vor.u32 1.1754944e-38, %v3001
        %v3003 = vsel %vm3000, %v3002, %v2998
        %v3004 = vmul.f32 1.0, %v3003
        %v3005 = vrcp.pop %v2551
        %v3006 = vmul.f32 %v2551, %v3005
        %v3007 = vsub.f32 1.0, %v3006
        %v3008 = vmul.f32 %v3005, %v3007
        %v3009 = vadd.f32 %v3005, %v3008
        %vm3010 = vweird.f32 %v2551
        %vm3011 = vweird.f32 %v3005
        %vm3012 = vmor %vm3010, %vm3011
        %v3013 = vsel %vm3012, %v3005, %v3009
        %v3014 = vand.u32 2147483647, %v2551
        %vm3015 = vcmp.eq.f32.partialorder %v3014, 8.507059e+37
        %v3016 = vand.u32 %v2551, 2147483648
        %v3017 = vor.u32 1.1754944e-38, %v3016
        %v3018 = vsel %vm3015, %v3017, %v3013
        %v3019 = vmul.f32 1.0, %v3018
        %v3020 = vrcp.pop %v2552
        %v3021 = vmul.f32 %v2552, %v3020
        %v3022 = vsub.f32 1.0, %v3021
        %v3023 = vmul.f32 %v3020, %v3022
        %v3024 = vadd.f32 %v3020, %v3023
        %vm3025 = vweird.f32 %v2552
        %vm3026 = vweird.f32 %v3020
        %vm3027 = vmor %vm3025, %vm3026
        %v3028 = vsel %vm3027, %v3020, %v3024
        %v3029 = vand.u32 2147483647, %v2552
        %vm3030 = vcmp.eq.f32.partialorder %v3029, 8.507059e+37
        %v3031 = vand.u32 %v2552, 2147483648
        %v3032 = vor.u32 1.1754944e-38, %v3031
        %v3033 = vsel %vm3030, %v3032, %v3028
        %v3034 = vmul.f32 1.0, %v3033
        %v3035 = vrcp.pop %v2553
        %v3036 = vmul.f32 %v2553, %v3035
        %v3037 = vsub.f32 1.0, %v3036
        %v3038 = vmul.f32 %v3035, %v3037
        %v3039 = vadd.f32 %v3035, %v3038
        %vm3040 = vweird.f32 %v2553
        %vm3041 = vweird.f32 %v3035
        %vm3042 = vmor %vm3040, %vm3041
        %v3043 = vsel %vm3042, %v3035, %v3039
        %v3044 = vand.u32 2147483647, %v2553
        %vm3045 = vcmp.eq.f32.partialorder %v3044, 8.507059e+37
        %v3046 = vand.u32 %v2553, 2147483648
        %v3047 = vor.u32 1.1754944e-38, %v3046
        %v3048 = vsel %vm3045, %v3047, %v3043
        %v3049 = vmul.f32 1.0, %v3048
        %v3050 = vrcp.pop %v2554
        %v3051 = vmul.f32 %v2554, %v3050
        %v3052 = vsub.f32 1.0, %v3051
        %v3053 = vmul.f32 %v3050, %v3052
        %v3054 = vadd.f32 %v3050, %v3053
        %vm3055 = vweird.f32 %v2554
        %vm3056 = vweird.f32 %v3050
        %vm3057 = vmor %vm3055, %vm3056
        %v3058 = vsel %vm3057, %v3050, %v3054
        %v3059 = vand.u32 2147483647, %v2554
        %vm3060 = vcmp.eq.f32.partialorder %v3059, 8.507059e+37
        %v3061 = vand.u32 %v2554, 2147483648
        %v3062 = vor.u32 1.1754944e-38, %v3061
        %v3063 = vsel %vm3060, %v3062, %v3058
        %v3064 = vmul.f32 1.0, %v3063
        %v3065 = vrcp.pop %v2555
        %v3066 = vmul.f32 %v2555, %v3065
        %v3067 = vsub.f32 1.0, %v3066
        %v3068 = vmul.f32 %v3065, %v3067
        %v3069 = vadd.f32 %v3065, %v3068
        %vm3070 = vweird.f32 %v2555
        %vm3071 = vweird.f32 %v3065
        %vm3072 = vmor %vm3070, %vm3071
        %v3073 = vsel %vm3072, %v3065, %v3069
        %v3074 = vand.u32 2147483647, %v2555
        %vm3075 = vcmp.eq.f32.partialorder %v3074, 8.507059e+37
        %v3076 = vand.u32 %v2555, 2147483648
        %v3077 = vor.u32 1.1754944e-38, %v3076
        %v3078 = vsel %vm3075, %v3077, %v3073
        %v3079 = vmul.f32 1.0, %v3078
        %v3080 = vrcp.pop %v2556
        %v3081 = vmul.f32 %v2556, %v3080
        %v3082 = vsub.f32 1.0, %v3081
        %v3083 = vmul.f32 %v3080, %v3082
        %v3084 = vadd.f32 %v3080, %v3083
        %vm3085 = vweird.f32 %v2556
        %vm3086 = vweird.f32 %v3080
        %vm3087 = vmor %vm3085, %vm3086
        %v3088 = vsel %vm3087, %v3080, %v3084
        %v3089 = vand.u32 2147483647, %v2556
        %vm3090 = vcmp.eq.f32.partialorder %v3089, 8.507059e+37
        %v3091 = vand.u32 %v2556, 2147483648
        %v3092 = vor.u32 1.1754944e-38, %v3091
        %v3093 = vsel %vm3090, %v3092, %v3088
        %v3094 = vmul.f32 1.0, %v3093
        %v3095 = vrcp.pop %v2557
        %v3096 = vmul.f32 %v2557, %v3095
        %v3097 = vsub.f32 1.0, %v3096
        %v3098 = vmul.f32 %v3095, %v3097
        %v3099 = vadd.f32 %v3095, %v3098
        %vm3100 = vweird.f32 %v2557
        %vm3101 = vweird.f32 %v3095
        %vm3102 = vmor %vm3100, %vm3101
        %v3103 = vsel %vm3102, %v3095, %v3099
        %v3104 = vand.u32 2147483647, %v2557
        %vm3105 = vcmp.eq.f32.partialorder %v3104, 8.507059e+37
        %v3106 = vand.u32 %v2557, 2147483648
        %v3107 = vor.u32 1.1754944e-38, %v3106
        %v3108 = vsel %vm3105, %v3107, %v3103
        %v3109 = vmul.f32 1.0, %v3108
        %v3110 = vrcp.pop %v2558
        %v3111 = vmul.f32 %v2558, %v3110
        %v3112 = vsub.f32 1.0, %v3111
        %v3113 = vmul.f32 %v3110, %v3112
        %v3114 = vadd.f32 %v3110, %v3113
        %vm3115 = vweird.f32 %v2558
        %vm3116 = vweird.f32 %v3110
        %vm3117 = vmor %vm3115, %vm3116
        %v3118 = vsel %vm3117, %v3110, %v3114
        %v3119 = vand.u32 2147483647, %v2558
        %vm3120 = vcmp.eq.f32.partialorder %v3119, 8.507059e+37
        %v3121 = vand.u32 %v2558, 2147483648
        %v3122 = vor.u32 1.1754944e-38, %v3121
        %v3123 = vsel %vm3120, %v3122, %v3118
        %v3124 = vmul.f32 1.0, %v3123
        %v3125 = vrcp.pop %v2559
        %v3126 = vmul.f32 %v2559, %v3125
        %v3127 = vsub.f32 1.0, %v3126
        %v3128 = vmul.f32 %v3125, %v3127
        %v3129 = vadd.f32 %v3125, %v3128
        %vm3130 = vweird.f32 %v2559
        %vm3131 = vweird.f32 %v3125
        %vm3132 = vmor %vm3130, %vm3131
        %v3133 = vsel %vm3132, %v3125, %v3129
        %v3134 = vand.u32 2147483647, %v2559
        %vm3135 = vcmp.eq.f32.partialorder %v3134, 8.507059e+37
        %v3136 = vand.u32 %v2559, 2147483648
        %v3137 = vor.u32 1.1754944e-38, %v3136
        %v3138 = vsel %vm3135, %v3137, %v3133
        %v3139 = vmul.f32 1.0, %v3138
        %v3140 = vrcp.pop %v2560
        %v3141 = vmul.f32 %v2560, %v3140
        %v3142 = vsub.f32 1.0, %v3141
        %v3143 = vmul.f32 %v3140, %v3142
        %v3144 = vadd.f32 %v3140, %v3143
        %vm3145 = vweird.f32 %v2560
        %vm3146 = vweird.f32 %v3140
        %vm3147 = vmor %vm3145, %vm3146
        %v3148 = vsel %vm3147, %v3140, %v3144
        %v3149 = vand.u32 2147483647, %v2560
        %vm3150 = vcmp.eq.f32.partialorder %v3149, 8.507059e+37
        %v3151 = vand.u32 %v2560, 2147483648
        %v3152 = vor.u32 1.1754944e-38, %v3151
        %v3153 = vsel %vm3150, %v3152, %v3148
        %v3154 = vmul.f32 1.0, %v3153
        %v3155 = vrcp.pop %v2561
        %v3156 = vmul.f32 %v2561, %v3155
        %v3157 = vsub.f32 1.0, %v3156
        %v3158 = vmul.f32 %v3155, %v3157
        %v3159 = vadd.f32 %v3155, %v3158
        %vm3160 = vweird.f32 %v2561
        %vm3161 = vweird.f32 %v3155
        %vm3162 = vmor %vm3160, %vm3161
        %v3163 = vsel %vm3162, %v3155, %v3159
        %v3164 = vand.u32 2147483647, %v2561
        %vm3165 = vcmp.eq.f32.partialorder %v3164, 8.507059e+37
        %v3166 = vand.u32 %v2561, 2147483648
        %v3167 = vor.u32 1.1754944e-38, %v3166
        %v3168 = vsel %vm3165, %v3167, %v3163
        %v3169 = vmul.f32 1.0, %v3168
        %v3170 = vrcp.pop %v2562
        %v3171 = vmul.f32 %v2562, %v3170
        %v3172 = vsub.f32 1.0, %v3171
        %v3173 = vmul.f32 %v3170, %v3172
        %v3174 = vadd.f32 %v3170, %v3173
        %vm3175 = vweird.f32 %v2562
        %vm3176 = vweird.f32 %v3170
        %vm3177 = vmor %vm3175, %vm3176
        %v3178 = vsel %vm3177, %v3170, %v3174
        %v3179 = vand.u32 2147483647, %v2562
        %vm3180 = vcmp.eq.f32.partialorder %v3179, 8.507059e+37
        %v3181 = vand.u32 %v2562, 2147483648
        %v3182 = vor.u32 1.1754944e-38, %v3181
        %v3183 = vsel %vm3180, %v3182, %v3178
        %v3184 = vmul.f32 1.0, %v3183
        %v3185 = vrcp.pop %v2563
        %v3186 = vmul.f32 %v2563, %v3185
        %v3187 = vsub.f32 1.0, %v3186
        %v3188 = vmul.f32 %v3185, %v3187
        %v3189 = vadd.f32 %v3185, %v3188
        %vm3190 = vweird.f32 %v2563
        %vm3191 = vweird.f32 %v3185
        %vm3192 = vmor %vm3190, %vm3191
        %v3193 = vsel %vm3192, %v3185, %v3189
        %v3194 = vand.u32 2147483647, %v2563
        %vm3195 = vcmp.eq.f32.partialorder %v3194, 8.507059e+37
        %v3196 = vand.u32 %v2563, 2147483648
        %v3197 = vor.u32 1.1754944e-38, %v3196
        %v3198 = vsel %vm3195, %v3197, %v3193
        %v3199 = vmul.f32 1.0, %v3198
        %v3200 = vrcp.pop %v2564
        %v3201 = vmul.f32 %v2564, %v3200
        %v3202 = vsub.f32 1.0, %v3201
        %v3203 = vmul.f32 %v3200, %v3202
        %v3204 = vadd.f32 %v3200, %v3203
        %vm3205 = vweird.f32 %v2564
        %vm3206 = vweird.f32 %v3200
        %vm3207 = vmor %vm3205, %vm3206
        %v3208 = vsel %vm3207, %v3200, %v3204
        %v3209 = vand.u32 2147483647, %v2564
        %vm3210 = vcmp.eq.f32.partialorder %v3209, 8.507059e+37
        %v3211 = vand.u32 %v2564, 2147483648
        %v3212 = vor.u32 1.1754944e-38, %v3211
        %v3213 = vsel %vm3210, %v3212, %v3208
        %v3214 = vmul.f32 1.0, %v3213
        %v3215 = vrcp.pop %v2565
        %v3216 = vmul.f32 %v2565, %v3215
        %v3217 = vsub.f32 1.0, %v3216
        %v3218 = vmul.f32 %v3215, %v3217
        %v3219 = vadd.f32 %v3215, %v3218
        %vm3220 = vweird.f32 %v2565
        %vm3221 = vweird.f32 %v3215
        %vm3222 = vmor %vm3220, %vm3221
        %v3223 = vsel %vm3222, %v3215, %v3219
        %v3224 = vand.u32 2147483647, %v2565
        %vm3225 = vcmp.eq.f32.partialorder %v3224, 8.507059e+37
        %v3226 = vand.u32 %v2565, 2147483648
        %v3227 = vor.u32 1.1754944e-38, %v3226
        %v3228 = vsel %vm3225, %v3227, %v3223
        %v3229 = vmul.f32 1.0, %v3228
        %v3230 = vrcp.pop %v2566
        %v3231 = vmul.f32 %v2566, %v3230
        %v3232 = vsub.f32 1.0, %v3231
        %v3233 = vmul.f32 %v3230, %v3232
        %v3234 = vadd.f32 %v3230, %v3233
        %vm3235 = vweird.f32 %v2566
        %vm3236 = vweird.f32 %v3230
        %vm3237 = vmor %vm3235, %vm3236
        %v3238 = vsel %vm3237, %v3230, %v3234
        %v3239 = vand.u32 2147483647, %v2566
        %vm3240 = vcmp.eq.f32.partialorder %v3239, 8.507059e+37
        %v3241 = vand.u32 %v2566, 2147483648
        %v3242 = vor.u32 1.1754944e-38, %v3241
        %v3243 = vsel %vm3240, %v3242, %v3238
        %v3244 = vmul.f32 1.0, %v3243
        %v3245 = vrcp.pop %v2567
        %v3246 = vmul.f32 %v2567, %v3245
        %v3247 = vsub.f32 1.0, %v3246
        %v3248 = vmul.f32 %v3245, %v3247
        %v3249 = vadd.f32 %v3245, %v3248
        %vm3250 = vweird.f32 %v2567
        %vm3251 = vweird.f32 %v3245
        %vm3252 = vmor %vm3250, %vm3251
        %v3253 = vsel %vm3252, %v3245, %v3249
        %v3254 = vand.u32 2147483647, %v2567
        %vm3255 = vcmp.eq.f32.partialorder %v3254, 8.507059e+37
        %v3256 = vand.u32 %v2567, 2147483648
        %v3257 = vor.u32 1.1754944e-38, %v3256
        %v3258 = vsel %vm3255, %v3257, %v3253
        %v3259 = vmul.f32 1.0, %v3258
        %v3260 = vrcp.pop %v2568
        %v3261 = vmul.f32 %v2568, %v3260
        %v3262 = vsub.f32 1.0, %v3261
        %v3263 = vmul.f32 %v3260, %v3262
        %v3264 = vadd.f32 %v3260, %v3263
        %vm3265 = vweird.f32 %v2568
        %vm3266 = vweird.f32 %v3260
        %vm3267 = vmor %vm3265, %vm3266
        %v3268 = vsel %vm3267, %v3260, %v3264
        %v3269 = vand.u32 2147483647, %v2568
        %vm3270 = vcmp.eq.f32.partialorder %v3269, 8.507059e+37
        %v3271 = vand.u32 %v2568, 2147483648
        %v3272 = vor.u32 1.1754944e-38, %v3271
        %v3273 = vsel %vm3270, %v3272, %v3268
        %v3274 = vmul.f32 1.0, %v3273
        %v3275 = vrcp.pop %v2569
        %v3276 = vmul.f32 %v2569, %v3275
        %v3277 = vsub.f32 1.0, %v3276
        %v3278 = vmul.f32 %v3275, %v3277
        %v3279 = vadd.f32 %v3275, %v3278
        %vm3280 = vweird.f32 %v2569
        %vm3281 = vweird.f32 %v3275
        %vm3282 = vmor %vm3280, %vm3281
        %v3283 = vsel %vm3282, %v3275, %v3279
        %v3284 = vand.u32 2147483647, %v2569
        %vm3285 = vcmp.eq.f32.partialorder %v3284, 8.507059e+37
        %v3286 = vand.u32 %v2569, 2147483648
        %v3287 = vor.u32 1.1754944e-38, %v3286
        %v3288 = vsel %vm3285, %v3287, %v3283
        %v3289 = vmul.f32 1.0, %v3288
        %vm3290 = vcmask 7168
        %3291 = vst.msk [vmem:[%s232] sm:$0xff] %vm3290, %v2584
        %3292 = vst.msk [vmem:[%s232 + $0x8] sm:$0xff] %vm3290, %v2599
        %3293 = vst.msk [vmem:[%s232 + $0x10] sm:$0xff] %vm3290, %v2614
        %3294 = vst.msk [vmem:[%s232 + $0x18] sm:$0xff] %vm3290, %v2629
        %3295 = vst.msk [vmem:[%s232 + $0x20] sm:$0xff] %vm3290, %v2644
        %3296 = vst.msk [vmem:[%s232 + $0x28] sm:$0xff] %vm3290, %v2659
        %3297 = vst.msk [vmem:[%s232 + $0x30] sm:$0xff] %vm3290, %v2674
        %3298 = vst.msk [vmem:[%s232 + $0x38] sm:$0xff] %vm3290, %v2689
        %3299 = vst.msk [vmem:[%s232 + $0x40] sm:$0xff] %vm3290, %v2704
        %3300 = vst.msk [vmem:[%s232 + $0x48] sm:$0xff] %vm3290, %v2719
        %3301 = vst.msk [vmem:[%s232 + $0x50] sm:$0xff] %vm3290, %v2734
        %3302 = vst.msk [vmem:[%s232 + $0x58] sm:$0xff] %vm3290, %v2749
        %3303 = vst.msk [vmem:[%s232 + $0x60] sm:$0xff] %vm3290, %v2764
        %3304 = vst.msk [vmem:[%s232 + $0x68] sm:$0xff] %vm3290, %v2779
        %3305 = vst.msk [vmem:[%s232 + $0x70] sm:$0xff] %vm3290, %v2794
        %3306 = vst.msk [vmem:[%s232 + $0x78] sm:$0xff] %vm3290, %v2809
        %3307 = vst.msk [vmem:[%s232 + $0x80] sm:$0xff] %vm3290, %v2824
        %3308 = vst.msk [vmem:[%s232 + $0x88] sm:$0xff] %vm3290, %v2839
        %3309 = vst.msk [vmem:[%s232 + $0x90] sm:$0xff] %vm3290, %v2854
        %3310 = vst.msk [vmem:[%s232 + $0x98] sm:$0xff] %vm3290, %v2869
        %3311 = vst.msk [vmem:[%s232 + $0xa0] sm:$0xff] %vm3290, %v2884
        %3312 = vst.msk [vmem:[%s232 + $0xa8] sm:$0xff] %vm3290, %v2899
        %3313 = vst.msk [vmem:[%s232 + $0xb0] sm:$0xff] %vm3290, %v2914
        %3314 = vst.msk [vmem:[%s232 + $0xb8] sm:$0xff] %vm3290, %v2929
        %3315 = vst.msk [vmem:[%s232 + $0xc0] sm:$0xff] %vm3290, %v2944
        %3316 = vst.msk [vmem:[%s232 + $0xc8] sm:$0xff] %vm3290, %v2959
        %3317 = vst.msk [vmem:[%s232 + $0xd0] sm:$0xff] %vm3290, %v2974
        %3318 = vst.msk [vmem:[%s232 + $0xd8] sm:$0xff] %vm3290, %v2989
        %3319 = vst.msk [vmem:[%s232 + $0xe0] sm:$0xff] %vm3290, %v3004
        %3320 = vst.msk [vmem:[%s232 + $0xe8] sm:$0xff] %vm3290, %v3019
        %3321 = vst.msk [vmem:[%s232 + $0xf0] sm:$0xff] %vm3290, %v3034
        %3322 = vst.msk [vmem:[%s232 + $0xf8] sm:$0xff] %vm3290, %v3049
        %3323 = vst.msk [vmem:[%s232 + $0x100] sm:$0xff] %vm3290, %v3064
        %3324 = vst.msk [vmem:[%s232 + $0x108] sm:$0xff] %vm3290, %v3079
        %3325 = vst.msk [vmem:[%s232 + $0x110] sm:$0xff] %vm3290, %v3094
        %3326 = vst.msk [vmem:[%s232 + $0x118] sm:$0xff] %vm3290, %v3109
        %3327 = vst.msk [vmem:[%s232 + $0x120] sm:$0xff] %vm3290, %v3124
        %3328 = vst.msk [vmem:[%s232 + $0x128] sm:$0xff] %vm3290, %v3139
        %3329 = vst.msk [vmem:[%s232 + $0x130] sm:$0xff] %vm3290, %v3154
        %3330 = vst.msk [vmem:[%s232 + $0x138] sm:$0xff] %vm3290, %v3169
        %3331 = vst.msk [vmem:[%s232 + $0x140] sm:$0xff] %vm3290, %v3184
        %3332 = vst.msk [vmem:[%s232 + $0x148] sm:$0xff] %vm3290, %v3199
        %3333 = vst.msk [vmem:[%s232 + $0x150] sm:$0xff] %vm3290, %v3214
        %3334 = vst.msk [vmem:[%s232 + $0x158] sm:$0xff] %vm3290, %v3229
        %3335 = vst.msk [vmem:[%s232 + $0x160] sm:$0xff] %vm3290, %v3244
        %3336 = vst.msk [vmem:[%s232 + $0x168] sm:$0xff] %vm3290, %v3259
        %3337 = vst.msk [vmem:[%s232 + $0x170] sm:$0xff] %vm3290, %v3274
        %3338 = vst.msk [vmem:[%s232 + $0x178] sm:$0xff] %vm3290, %v3289
        %s3339 = sand.u32 %s135, 1
        %s3340 = sand.u32 %s135, 1
        %s3341 = smul.addr %s3340, 384
        %s3342 = scalar_lea.vmem [#allocation3], %s3341
        // Predicated region
        $region41: #{tpu_custom_call.1} parent=39 // pred_check
          %p3343 = pneg %p145
        $region42: #{tpu_custom_call.1} parent=39 // pred_check_branch
          %3345 = sbr.rel (%p3343) target = $region44
        $region43: #{tpu_custom_call.1} parent=39 // pred_region
          %s3346 = smul.u32 48, %s17
          %s3347 = ssub.s32 75, %s3346
          %p3348 = scmp.lt.s32.totalorder %s3347, 48
          %s3349 = scalar_select %p3348, %s3347, 48
          %s3350 = smul.u32 8, %s3349
          %p3351 = scmp.ne.s32.totalorder 0, %s3350
          %s3352 = smul.addr %s3346, 8
          %s3353 = scalar_lea.vmem %s5, %s3352
          // Predicated region
          $region45: #{tpu_custom_call.1} parent=43 // pred_check
            %p3354 = pneg %p3351
          $region46: #{tpu_custom_call.1} parent=43 // pred_check_branch
            %3356 = sbr.rel (%p3354) target = $region48
          $region47: #{tpu_custom_call.1} parent=43 // pred_region
            // Predicated region
            $region49: #{tpu_custom_call.1} parent=47 // pred_check
              _
            $region50: #{tpu_custom_call.1} parent=47 // pred_check_branch
              %3358 = sbr.rel (0) target = $region52
            $region51: #{tpu_custom_call.1} parent=47 // pred_region
              // Predicated region
              $region71: #{tpu_custom_call.1} parent=51 // pred_check
                _
              $region72: #{tpu_custom_call.1} parent=51 // pred_check_branch
                %3470 = sbr.rel (0) target = $region74
              $region73: #{tpu_custom_call.1} parent=51 // pred_region
                %s3471 = sshrl.u32 %s3349, 5
                // While loop
                $region75: #{tpu_custom_call.1} parent=73 // loop_pre_header
                  _
                $region76: #{tpu_custom_call.1} parent=73 // loop_header
                  %s3473 = sphi 0, %s3475
                  %p3474 = scmp.ge.s32.totalorder %s3473, %s3471
                  %s3478 = sphi 0, %s3547
                  %s3479 = sphi %s3342, %s3550
                  %s3480 = sphi %s3353, %s3551
                $region77: #{tpu_custom_call.1} parent=73 // loop_header_branch
                  %3477 = sbr.rel (%p3474) target = $region81
                $region78: #{tpu_custom_call.1} parent=73 // loop_body
                  %v3481 = vld [vmem:[%s3479] sm:$0xff]
                  %3482 = vst [vmem:[%s3480] sm:$0xff] %v3481
                  %v3483 = vld [vmem:[%s3479 + $0x8] sm:$0xff]
                  %3484 = vst [vmem:[%s3480 + $0x8] sm:$0xff] %v3483
                  %v3485 = vld [vmem:[%s3479 + $0x10] sm:$0xff]
                  %3486 = vst [vmem:[%s3480 + $0x10] sm:$0xff] %v3485
                  %v3487 = vld [vmem:[%s3479 + $0x18] sm:$0xff]
                  %3488 = vst [vmem:[%s3480 + $0x18] sm:$0xff] %v3487
                  %v3489 = vld [vmem:[%s3479 + $0x20] sm:$0xff]
                  %3490 = vst [vmem:[%s3480 + $0x20] sm:$0xff] %v3489
                  %v3491 = vld [vmem:[%s3479 + $0x28] sm:$0xff]
                  %3492 = vst [vmem:[%s3480 + $0x28] sm:$0xff] %v3491
                  %v3493 = vld [vmem:[%s3479 + $0x30] sm:$0xff]
                  %3494 = vst [vmem:[%s3480 + $0x30] sm:$0xff] %v3493
                  %v3495 = vld [vmem:[%s3479 + $0x38] sm:$0xff]
                  %3496 = vst [vmem:[%s3480 + $0x38] sm:$0xff] %v3495
                  %v3497 = vld [vmem:[%s3479 + $0x40] sm:$0xff]
                  %3498 = vst [vmem:[%s3480 + $0x40] sm:$0xff] %v3497
                  %v3499 = vld [vmem:[%s3479 + $0x48] sm:$0xff]
                  %3500 = vst [vmem:[%s3480 + $0x48] sm:$0xff] %v3499
                  %v3501 = vld [vmem:[%s3479 + $0x50] sm:$0xff]
                  %3502 = vst [vmem:[%s3480 + $0x50] sm:$0xff] %v3501
                  %v3503 = vld [vmem:[%s3479 + $0x58] sm:$0xff]
                  %3504 = vst [vmem:[%s3480 + $0x58] sm:$0xff] %v3503
                  %v3505 = vld [vmem:[%s3479 + $0x60] sm:$0xff]
                  %3506 = vst [vmem:[%s3480 + $0x60] sm:$0xff] %v3505
                  %v3507 = vld [vmem:[%s3479 + $0x68] sm:$0xff]
                  %3508 = vst [vmem:[%s3480 + $0x68] sm:$0xff] %v3507
                  %v3509 = vld [vmem:[%s3479 + $0x70] sm:$0xff]
                  %3510 = vst [vmem:[%s3480 + $0x70] sm:$0xff] %v3509
                  %v3511 = vld [vmem:[%s3479 + $0x78] sm:$0xff]
                  %3512 = vst [vmem:[%s3480 + $0x78] sm:$0xff] %v3511
                  %v3513 = vld [vmem:[%s3479 + $0x80] sm:$0xff]
                  %3514 = vst [vmem:[%s3480 + $0x80] sm:$0xff] %v3513
                  %v3515 = vld [vmem:[%s3479 + $0x88] sm:$0xff]
                  %3516 = vst [vmem:[%s3480 + $0x88] sm:$0xff] %v3515
                  %v3517 = vld [vmem:[%s3479 + $0x90] sm:$0xff]
                  %3518 = vst [vmem:[%s3480 + $0x90] sm:$0xff] %v3517
                  %v3519 = vld [vmem:[%s3479 + $0x98] sm:$0xff]
                  %3520 = vst [vmem:[%s3480 + $0x98] sm:$0xff] %v3519
                  %v3521 = vld [vmem:[%s3479 + $0xa0] sm:$0xff]
                  %3522 = vst [vmem:[%s3480 + $0xa0] sm:$0xff] %v3521
                  %v3523 = vld [vmem:[%s3479 + $0xa8] sm:$0xff]
                  %3524 = vst [vmem:[%s3480 + $0xa8] sm:$0xff] %v3523
                  %v3525 = vld [vmem:[%s3479 + $0xb0] sm:$0xff]
                  %3526 = vst [vmem:[%s3480 + $0xb0] sm:$0xff] %v3525
                  %v3527 = vld [vmem:[%s3479 + $0xb8] sm:$0xff]
                  %3528 = vst [vmem:[%s3480 + $0xb8] sm:$0xff] %v3527
                  %v3529 = vld [vmem:[%s3479 + $0xc0] sm:$0xff]
                  %3530 = vst [vmem:[%s3480 + $0xc0] sm:$0xff] %v3529
                  %v3531 = vld [vmem:[%s3479 + $0xc8] sm:$0xff]
                  %3532 = vst [vmem:[%s3480 + $0xc8] sm:$0xff] %v3531
                  %v3533 = vld [vmem:[%s3479 + $0xd0] sm:$0xff]
                  %3534 = vst [vmem:[%s3480 + $0xd0] sm:$0xff] %v3533
                  %v3535 = vld [vmem:[%s3479 + $0xd8] sm:$0xff]
                  %3536 = vst [vmem:[%s3480 + $0xd8] sm:$0xff] %v3535
                  %v3537 = vld [vmem:[%s3479 + $0xe0] sm:$0xff]
                  %3538 = vst [vmem:[%s3480 + $0xe0] sm:$0xff] %v3537
                  %v3539 = vld [vmem:[%s3479 + $0xe8] sm:$0xff]
                  %3540 = vst [vmem:[%s3480 + $0xe8] sm:$0xff] %v3539
                  %v3541 = vld [vmem:[%s3479 + $0xf0] sm:$0xff]
                  %3542 = vst [vmem:[%s3480 + $0xf0] sm:$0xff] %v3541
                  %v3543 = vld [vmem:[%s3479 + $0xf8] sm:$0xff]
                  %3544 = vst [vmem:[%s3480 + $0xf8] sm:$0xff] %v3543
                  %s3545 = sadd.s32 1, %s3478
                  %p3546 = scmp.ge.s32.totalorder %s3545, %s3471
                  %s3547 = scalar_select %p3546, 0, %s3545
                  %s3548 = smul.u32 %s3547, 256
                  %s3549 = smul.u32 %s3547, 256
                  %s3550 = scalar_lea.vmem %s3342, %s3548 [#allocation3]
                  %s3551 = scalar_lea.vmem %s3353, %s3549
                $region79: #{tpu_custom_call.1} parent=73 // loop_footer
                  %s3475 = sadd.s32 %s3473, 1
                $region80: #{tpu_custom_call.1} parent=73 // loop_footer_branch
                  %3472 = sbr.rel target = $region76
                $region81: #{tpu_custom_call.1} parent=73 // loop_exit
                  _
                %s3552 = sshrl.u32 %s3349, 5
                %s3553 = sand.u32 %s3349, 31
                %s3554 = smul.u32 %s3552, 32
                %s3555 = smul.u32 8, %s3554
                %s3556 = scalar_lea.vmem %s3342, %s3555 [#allocation3]
                %s3557 = smul.u32 8, %s3554
                %s3558 = scalar_lea.vmem %s3353, %s3557
                // While loop
                $region82: #{tpu_custom_call.1} parent=73 // loop_pre_header
                  _
                $region83: #{tpu_custom_call.1} parent=73 // loop_header
                  %s3560 = sphi 0, %s3562
                  %p3561 = scmp.ge.s32.totalorder %s3560, %s3553
                  %s3565 = sphi 0, %s3572
                  %s3566 = sphi %s3556, %s3575
                  %s3567 = sphi %s3558, %s3576
                $region84: #{tpu_custom_call.1} parent=73 // loop_header_branch
                  %3564 = sbr.rel (%p3561) target = $region88
                $region85: #{tpu_custom_call.1} parent=73 // loop_body
                  %v3568 = vld [vmem:[%s3566] sm:$0xff]
                  %3569 = vst [vmem:[%s3567] sm:$0xff] %v3568
                  %s3570 = sadd.s32 1, %s3565
                  %p3571 = scmp.ge.s32.totalorder %s3570, %s3553
                  %s3572 = scalar_select %p3571, 0, %s3570
                  %s3573 = smul.u32 %s3572, 8
                  %s3574 = smul.u32 %s3572, 8
                  %s3575 = scalar_lea.vmem %s3556, %s3573 [#allocation3]
                  %s3576 = scalar_lea.vmem %s3558, %s3574
                $region86: #{tpu_custom_call.1} parent=73 // loop_footer
                  %s3562 = sadd.s32 %s3560, 1
                $region87: #{tpu_custom_call.1} parent=73 // loop_footer_branch
                  %3559 = sbr.rel target = $region83
                $region88: #{tpu_custom_call.1} parent=73 // loop_exit
                  _
              $region74: #{tpu_custom_call.1} parent=51 // pred_fallthru
                _
              // Predicated region
              $region89: #{tpu_custom_call.1} parent=51 // pred_check
                _
              $region90: #{tpu_custom_call.1} parent=51 // pred_check_branch
                %3578 = sbr.rel target = $region92
              $region91: #{tpu_custom_call.1} parent=51 // pred_region
                _
              $region92: #{tpu_custom_call.1} parent=51 // pred_fallthru
                _
            $region52: #{tpu_custom_call.1} parent=47 // pred_fallthru
              _
            // Predicated region
            $region53: #{tpu_custom_call.1} parent=47 // pred_check
              _
            $region54: #{tpu_custom_call.1} parent=47 // pred_check_branch
              %3360 = sbr.rel target = $region56
            $region55: #{tpu_custom_call.1} parent=47 // pred_region
              %s3362 = ssub.s32 256, 1
              %s3363 = sshrl.u32 %s3349, 5
              // While loop
              $region57: #{tpu_custom_call.1} parent=55 // loop_pre_header
                _
              $region58: #{tpu_custom_call.1} parent=55 // loop_header
                %s3365 = sphi 0, %s3367
                %p3366 = scmp.ge.s32.totalorder %s3365, %s3363
                %s3370 = sphi 0, %s3439
                %s3371 = sphi %s3342, %s3442
                %s3372 = sphi %s3353, %s3443
              $region59: #{tpu_custom_call.1} parent=55 // loop_header_branch
                %3369 = sbr.rel (%p3366) target = $region63
              $region60: #{tpu_custom_call.1} parent=55 // loop_body
                %v3373 = vld [vmem:[%s3371] sm:%s3362]
                %3374 = vst [vmem:[%s3372] sm:%s3362] %v3373
                %v3375 = vld [vmem:[%s3371 + $0x8] sm:%s3362]
                %3376 = vst [vmem:[%s3372 + $0x8] sm:%s3362] %v3375
                %v3377 = vld [vmem:[%s3371 + $0x10] sm:%s3362]
                %3378 = vst [vmem:[%s3372 + $0x10] sm:%s3362] %v3377
                %v3379 = vld [vmem:[%s3371 + $0x18] sm:%s3362]
                %3380 = vst [vmem:[%s3372 + $0x18] sm:%s3362] %v3379
                %v3381 = vld [vmem:[%s3371 + $0x20] sm:%s3362]
                %3382 = vst [vmem:[%s3372 + $0x20] sm:%s3362] %v3381
                %v3383 = vld [vmem:[%s3371 + $0x28] sm:%s3362]
                %3384 = vst [vmem:[%s3372 + $0x28] sm:%s3362] %v3383
                %v3385 = vld [vmem:[%s3371 + $0x30] sm:%s3362]
                %3386 = vst [vmem:[%s3372 + $0x30] sm:%s3362] %v3385
                %v3387 = vld [vmem:[%s3371 + $0x38] sm:%s3362]
                %3388 = vst [vmem:[%s3372 + $0x38] sm:%s3362] %v3387
                %v3389 = vld [vmem:[%s3371 + $0x40] sm:%s3362]
                %3390 = vst [vmem:[%s3372 + $0x40] sm:%s3362] %v3389
                %v3391 = vld [vmem:[%s3371 + $0x48] sm:%s3362]
                %3392 = vst [vmem:[%s3372 + $0x48] sm:%s3362] %v3391
                %v3393 = vld [vmem:[%s3371 + $0x50] sm:%s3362]
                %3394 = vst [vmem:[%s3372 + $0x50] sm:%s3362] %v3393
                %v3395 = vld [vmem:[%s3371 + $0x58] sm:%s3362]
                %3396 = vst [vmem:[%s3372 + $0x58] sm:%s3362] %v3395
                %v3397 = vld [vmem:[%s3371 + $0x60] sm:%s3362]
                %3398 = vst [vmem:[%s3372 + $0x60] sm:%s3362] %v3397
                %v3399 = vld [vmem:[%s3371 + $0x68] sm:%s3362]
                %3400 = vst [vmem:[%s3372 + $0x68] sm:%s3362] %v3399
                %v3401 = vld [vmem:[%s3371 + $0x70] sm:%s3362]
                %3402 = vst [vmem:[%s3372 + $0x70] sm:%s3362] %v3401
                %v3403 = vld [vmem:[%s3371 + $0x78] sm:%s3362]
                %3404 = vst [vmem:[%s3372 + $0x78] sm:%s3362] %v3403
                %v3405 = vld [vmem:[%s3371 + $0x80] sm:%s3362]
                %3406 = vst [vmem:[%s3372 + $0x80] sm:%s3362] %v3405
                %v3407 = vld [vmem:[%s3371 + $0x88] sm:%s3362]
                %3408 = vst [vmem:[%s3372 + $0x88] sm:%s3362] %v3407
                %v3409 = vld [vmem:[%s3371 + $0x90] sm:%s3362]
                %3410 = vst [vmem:[%s3372 + $0x90] sm:%s3362] %v3409
                %v3411 = vld [vmem:[%s3371 + $0x98] sm:%s3362]
                %3412 = vst [vmem:[%s3372 + $0x98] sm:%s3362] %v3411
                %v3413 = vld [vmem:[%s3371 + $0xa0] sm:%s3362]
                %3414 = vst [vmem:[%s3372 + $0xa0] sm:%s3362] %v3413
                %v3415 = vld [vmem:[%s3371 + $0xa8] sm:%s3362]
                %3416 = vst [vmem:[%s3372 + $0xa8] sm:%s3362] %v3415
                %v3417 = vld [vmem:[%s3371 + $0xb0] sm:%s3362]
                %3418 = vst [vmem:[%s3372 + $0xb0] sm:%s3362] %v3417
                %v3419 = vld [vmem:[%s3371 + $0xb8] sm:%s3362]
                %3420 = vst [vmem:[%s3372 + $0xb8] sm:%s3362] %v3419
                %v3421 = vld [vmem:[%s3371 + $0xc0] sm:%s3362]
                %3422 = vst [vmem:[%s3372 + $0xc0] sm:%s3362] %v3421
                %v3423 = vld [vmem:[%s3371 + $0xc8] sm:%s3362]
                %3424 = vst [vmem:[%s3372 + $0xc8] sm:%s3362] %v3423
                %v3425 = vld [vmem:[%s3371 + $0xd0] sm:%s3362]
                %3426 = vst [vmem:[%s3372 + $0xd0] sm:%s3362] %v3425
                %v3427 = vld [vmem:[%s3371 + $0xd8] sm:%s3362]
                %3428 = vst [vmem:[%s3372 + $0xd8] sm:%s3362] %v3427
                %v3429 = vld [vmem:[%s3371 + $0xe0] sm:%s3362]
                %3430 = vst [vmem:[%s3372 + $0xe0] sm:%s3362] %v3429
                %v3431 = vld [vmem:[%s3371 + $0xe8] sm:%s3362]
                %3432 = vst [vmem:[%s3372 + $0xe8] sm:%s3362] %v3431
                %v3433 = vld [vmem:[%s3371 + $0xf0] sm:%s3362]
                %3434 = vst [vmem:[%s3372 + $0xf0] sm:%s3362] %v3433
                %v3435 = vld [vmem:[%s3371 + $0xf8] sm:%s3362]
                %3436 = vst [vmem:[%s3372 + $0xf8] sm:%s3362] %v3435
                %s3437 = sadd.s32 1, %s3370
                %p3438 = scmp.ge.s32.totalorder %s3437, %s3363
                %s3439 = scalar_select %p3438, 0, %s3437
                %s3440 = smul.u32 %s3439, 256
                %s3441 = smul.u32 %s3439, 256
                %s3442 = scalar_lea.vmem %s3342, %s3440 [#allocation3]
                %s3443 = scalar_lea.vmem %s3353, %s3441
              $region61: #{tpu_custom_call.1} parent=55 // loop_footer
                %s3367 = sadd.s32 %s3365, 1
              $region62: #{tpu_custom_call.1} parent=55 // loop_footer_branch
                %3364 = sbr.rel target = $region58
              $region63: #{tpu_custom_call.1} parent=55 // loop_exit
                _
              %s3444 = sshrl.u32 %s3349, 5
              %s3445 = sand.u32 %s3349, 31
              %s3446 = smul.u32 %s3444, 32
              %s3447 = smul.u32 8, %s3446
              %s3448 = scalar_lea.vmem %s3342, %s3447 [#allocation3]
              %s3449 = smul.u32 8, %s3446
              %s3450 = scalar_lea.vmem %s3353, %s3449
              // While loop
              $region64: #{tpu_custom_call.1} parent=55 // loop_pre_header
                _
              $region65: #{tpu_custom_call.1} parent=55 // loop_header
                %s3452 = sphi 0, %s3454
                %p3453 = scmp.ge.s32.totalorder %s3452, %s3445
                %s3457 = sphi 0, %s3464
                %s3458 = sphi %s3448, %s3467
                %s3459 = sphi %s3450, %s3468
              $region66: #{tpu_custom_call.1} parent=55 // loop_header_branch
                %3456 = sbr.rel (%p3453) target = $region70
              $region67: #{tpu_custom_call.1} parent=55 // loop_body
                %v3460 = vld [vmem:[%s3458] sm:%s3362]
                %3461 = vst [vmem:[%s3459] sm:%s3362] %v3460
                %s3462 = sadd.s32 1, %s3457
                %p3463 = scmp.ge.s32.totalorder %s3462, %s3445
                %s3464 = scalar_select %p3463, 0, %s3462
                %s3465 = smul.u32 %s3464, 8
                %s3466 = smul.u32 %s3464, 8
                %s3467 = scalar_lea.vmem %s3448, %s3465 [#allocation3]
                %s3468 = scalar_lea.vmem %s3450, %s3466
              $region68: #{tpu_custom_call.1} parent=55 // loop_footer
                %s3454 = sadd.s32 %s3452, 1
              $region69: #{tpu_custom_call.1} parent=55 // loop_footer_branch
                %3451 = sbr.rel target = $region65
              $region70: #{tpu_custom_call.1} parent=55 // loop_exit
                _
            $region56: #{tpu_custom_call.1} parent=47 // pred_fallthru
              _
          $region48: #{tpu_custom_call.1} parent=43 // pred_fallthru
            _
          %3579 = vnop
        $region44: #{tpu_custom_call.1} parent=39 // pred_fallthru
          _
      $region40: #{tpu_custom_call.1} parent=5 // pred_fallthru
        _
      %p3580 = scmp.le.s32.totalorder 2, %s12
      // Predicated region
      $region93: #{tpu_custom_call.1} parent=5 // pred_check
        %p3581 = pneg %p3580
      $region94: #{tpu_custom_call.1} parent=5 // pred_check_branch
        %3583 = sbr.rel (%p3581) target = $region96
      $region95: #{tpu_custom_call.1} parent=5 // pred_region
        %s3584 = ssub.s32 %s12, 2
        // Predicated region
        $region97: #{tpu_custom_call.1} parent=95 // pred_check
          %p3585 = pneg %p151
        $region98: #{tpu_custom_call.1} parent=95 // pred_check_branch
          %3587 = sbr.rel (%p3585) target = $region100
        $region99: #{tpu_custom_call.1} parent=95 // pred_region
          %s3588 = sand.u32 %s136, 1
          %s3589 = sand.u32 %s136, 1
          %s3590 = smul.addr %s3589, 384
          %s3591 = scalar_lea.vmem [#allocation3], %s3590
        $region100: #{tpu_custom_call.1} parent=95 // pred_fallthru
          _
      $region96: #{tpu_custom_call.1} parent=5 // pred_fallthru
        _
    $region6: #{tpu_custom_call.1} parent=1 // loop_footer
      %s16 = sadd.s32 1, %s12
    $region7: #{tpu_custom_call.1} parent=1 // loop_footer_branch
      %11 = sbr.rel target = $region3
    $region8: #{tpu_custom_call.1} parent=1 // loop_exit
      _

</llo_original>
